<compile_context>
chip_gen: v5e
topology: v5e:2x2
jax: 0.10.0
libtpu: 0.0.40
codegen_flags: <defaults>
</compile_context>

<pallas_src>
import functools
import numpy as np
import jax
import jax.numpy as jnp
from jax import lax
from jax.experimental import pallas as pl
from jax.experimental.pallas import tpu as pltpu


# ----------------------------------------------------------------------------- param preparation
def _gate_perm(H):
    # PyTorch gate order [i, f, g, o] -> [i, f, o, g]: sigmoid over [:3H], tanh over [3H:].
    return np.concatenate([np.arange(0, H), np.arange(H, 2 * H),
                           np.arange(3 * H, 4 * H), np.arange(2 * H, 3 * H)])


def prepare_params(params, cfg, nb_channels):
    """One-time re-layout of PyTorch-style params into kernel-friendly tensors."""
    F, H, fw = cfg['nb_filters'], cfg['nb_units_lstm'], cfg['filter_width']
    C = nb_channels
    eye = jnp.eye(C, dtype=jnp.float32)

    conv_w, conv_b = [], []
    for blk in params['conv_blocks']:
        for w, b in ((blk['w1'], blk['b1']), (blk['w2'], blk['b2'])):
            Cin = w.shape[1]
            wk = jnp.transpose(w[..., 0], (2, 1, 0))                        # (fw, Cin, F)
            # block-diagonal over sensor channel c: rows (k, c, cin) -> cols (c, f)
            wfl = wk[:, None, :, None, :] * eye[None, :, None, :, None]     # (fw, C, Cin, C, F)
            conv_w.append(wfl.reshape(fw * C * Cin, C * F))
            conv_b.append(jnp.tile(b, C).reshape(1, C * F))

    gp = _gate_perm(H)
    # kernel conv output features are ordered c*F+f; PyTorch LSTM layer-0 expects f*C+c
    in_perm = (np.arange(F)[None, :] * C + np.arange(C)[:, None]).reshape(-1)
    lstm = []
    for i, lw in enumerate(params['lstm']):
        wih = lw['wih'][gp]
        if i == 0:
            wih = wih[:, in_perm]
        lstm.append(dict(wih_t=jnp.transpose(wih),                          # (Din, 4H)
                         whh_t=jnp.transpose(lw['whh'][gp]),                # (H, 4H)
                         b=(lw['bih'] + lw['bhh'])[gp].reshape(1, 4 * H)))

    return dict(conv_w=conv_w, conv_b=conv_b, lstm=lstm,
                fc_wt=jnp.transpose(params['fc_w']),                        # (H, nb_classes)
                fc_b=params['fc_b'].reshape(1, -1),
                reg_wt=params['reg']['wt'],                                 # (4, fw)   -> SMEM
                reg_bt=params['reg']['bt'],                                 # (4,)      -> SMEM
                reg_wlin_t=jnp.transpose(params['reg']['wlin']))            # (H, C)


# ----------------------------------------------------------------------------- fused forward kernel
def fused_forward(x, pp, cfg, nb_classes):
    B, T, C = x.shape
    F, H = cfg['nb_filters'], cfg['nb_units_lstm']
    fw, dil = cfg['filter_width'], cfg['dilation']
    nb_blocks, nb_lstm = cfg['nb_conv_blocks'], cfg['nb_layers_lstm']
    n_conv = 2 * nb_blocks
    Tf = T - nb_blocks * 2 * dil * (fw - 1)
    T_reg = Tf + 4 * (fw - 1)

    def kernel(*refs):
        x_ref = refs[0]
        cw = refs[1:1 + n_conv]
        cb = refs[1 + n_conv:1 + 2 * n_conv]
        idx = 1 + 2 * n_conv
        lstm_refs = []
        for _ in range(nb_lstm):
            lstm_refs.append(refs[idx:idx + 3])
            idx += 3
        fc_wt_ref, fc_b_ref, rw_ref, rb_ref, rlin_ref = refs[idx:idx + 5]
        o_class_ref, o_reg_ref, racc_ref = refs[idx + 5:idx + 8]

        # -------- conv blocks: lane-dense (t, c*F+f) layout, per-tap K=C*Cin matmuls --------
        def conv_apply(act, w_ref, b_ref):
            t_in, kdim = act.shape
            t_out = t_in - dil * (fw - 1)
            acc = None
            for k in range(fw):
                part = jnp.dot(act[k * dil:k * dil + t_out, :],
                               w_ref[k * kdim:(k + 1) * kdim, :],
                               preferred_element_type=jnp.float32)
                acc = part if acc is None else acc + part
            return jnp.maximum(acc + b_ref[...], 0.0)

        acts = []
        for b in range(B):
            a = x_ref[b]                                            # (T, C)
            for ci in range(n_conv):
                a = conv_apply(a, cw[ci], cb[ci])
            acts.append(a)                                          # (Tf, C*F) = (Tf, 128)

        # time-major rows (t, b) for the LSTM stack
        x_tm = jnp.concatenate([acts[b][t:t + 1, :] for t in range(Tf) for b in range(B)],
                               axis=0)                              # (Tf*B, C*F)

        # -------- LSTM stack: hoisted input projection + fully unrolled recurrence --------
        outs = None
        for (wih_ref, whh_ref, lb_ref) in lstm_refs:
            gx = jnp.dot(x_tm, wih_ref[...], preferred_element_type=jnp.float32) + lb_ref[...]
            whh_t = whh_ref[...]
            h = jnp.zeros((B, H), jnp.float32)
            c = jnp.zeros((B, H), jnp.float32)
            outs = []
            for t in range(Tf):
                gates = gx[t * B:(t + 1) * B, :] + jnp.dot(h, whh_t,
                                                           preferred_element_type=jnp.float32)
                sig = jax.nn.sigmoid(gates[:, :3 * H])              # [i | f | o]
                g = jnp.tanh(gates[:, 3 * H:])
                c = sig[:, H:2 * H] * c + sig[:, :H] * g
                h = sig[:, 2 * H:] * jnp.tanh(c)
                outs.append(h)
            x_tm = jnp.concatenate(outs, axis=0)                    # (Tf*B, H), rows (t, b)

        # -------- classification head: last timestep of last LSTM layer --------
        o_class_ref[...] = (jnp.dot(outs[-1], fc_wt_ref[...],
                                    preferred_element_type=jnp.float32) + fc_b_ref[...])

        # -------- RegBlock_ncnn: 4 transposed convs (shifted += into scratch) + linear --------
        rlin = rlin_ref[...]                                        # (H, C)
        for b in range(B):
            y = jnp.concatenate([ht[b:b + 1, :] for ht in outs], axis=0)   # (Tf, H)
            t_cur = Tf
            for l in range(4):
                t_next = t_cur + (fw - 1)                            # RegBlock dilation=1
                racc_ref[0:t_next, :] = jnp.zeros((t_next, H), jnp.float32)
                for k in range(fw):
                    racc_ref[k:k + t_cur, :] += rw_ref[l, k] * y
                y = racc_ref[0:t_next, :] + rb_ref[l]
                t_cur = t_next
            o_reg_ref[b] = jnp.dot(y, rlin, preferred_element_type=jnp.float32)

    def vmem(shp):
        return pl.BlockSpec(shp, lambda i, _s=shp: tuple(0 for _ in _s))
    smem = pl.BlockSpec(memory_space=pltpu.MemorySpace.SMEM)

    in_specs = [vmem((B, T, C))]
    in_specs += [vmem(tuple(w.shape)) for w in pp['conv_w']]
    in_specs += [vmem(tuple(b.shape)) for b in pp['conv_b']]
    for lw in pp['lstm']:
        in_specs += [vmem(tuple(lw['wih_t'].shape)), vmem(tuple(lw['whh_t'].shape)),
                     vmem(tuple(lw['b'].shape))]
    in_specs += [vmem(tuple(pp['fc_wt'].shape)), vmem(tuple(pp['fc_b'].shape)),
                 smem, smem, vmem(tuple(pp['reg_wlin_t'].shape))]

    args = [x] + list(pp['conv_w']) + list(pp['conv_b'])
    for lw in pp['lstm']:
        args += [lw['wih_t'], lw['whh_t'], lw['b']]
    args += [pp['fc_wt'], pp['fc_b'], pp['reg_wt'], pp['reg_bt'], pp['reg_wlin_t']]

    return pl.pallas_call(
        kernel,
        grid=(1,),
        out_shape=(jax.ShapeDtypeStruct((B, nb_classes), jnp.float32),
                   jax.ShapeDtypeStruct((B, T_reg, C), jnp.float32)),
        in_specs=in_specs,
        out_specs=(vmem((B, nb_classes)), vmem((B, T_reg, C))),
        scratch_shapes=[pltpu.VMEM((T_reg, H), jnp.float32)],
        compiler_params=pltpu.CompilerParams(dimension_semantics=("arbitrary",)),
    )(*args)


# ----------------------------------------------------------------------------- pure-JAX reference
def _ref_lstm(x, w):
    B, T, Din = x.shape
    H = w['whh'].shape[1]

    def step(carry, xt):
        h, c = carry
        gates = xt @ w['wih'].T + w['bih'] + h @ w['whh'].T + w['bhh']
        i = jax.nn.sigmoid(gates[:, :H])
        f = jax.nn.sigmoid(gates[:, H:2 * H])
        g = jnp.tanh(gates[:, 2 * H:3 * H])
        o = jax.nn.sigmoid(gates[:, 3 * H:])
        c = f * c + i * g
        h = o * jnp.tanh(c)
        return (h, c), h

    init = (jnp.zeros((B, H), jnp.float32), jnp.zeros((B, H), jnp.float32))
    _, ys = lax.scan(step, init, jnp.swapaxes(x, 0, 1))
    return jnp.swapaxes(ys, 0, 1)


def _ref_reg(x, rp, fw):
    y = x
    for l in range(4):
        B, T, H = y.shape
        Tn = T + fw - 1
        out = jnp.zeros((B, Tn, H), jnp.float32)
        for k in range(fw):
            out = out.at[:, k:k + T, :].add(rp['wt'][l, k] * y)
        y = out + rp['bt'][l]
    return y @ rp['wlin'].T


def ref_forward(x, params, cfg):
    fw, d = cfg['filter_width'], cfg['dilation']
    B = x.shape[0]
    h = x[:, None, :, :]                                            # NCHW
    for blk in params['conv_blocks']:
        h = lax.conv_general_dilated(h, blk['w1'], (1, 1), 'VALID', rhs_dilation=(d, 1),
                                     dimension_numbers=('NCHW', 'OIHW', 'NCHW'))
        h = jnp.maximum(h + blk['b1'][None, :, None, None], 0.0)
        h = lax.conv_general_dilated(h, blk['w2'], (1, 1), 'VALID', rhs_dilation=(d, 1),
                                     dimension_numbers=('NCHW', 'OIHW', 'NCHW'))
        h = jnp.maximum(h + blk['b2'][None, :, None, None], 0.0)
    Tf = h.shape[2]
    h = jnp.transpose(h, (0, 2, 1, 3)).reshape(B, Tf, -1)
    for lw in params['lstm']:
        h = _ref_lstm(h, lw)
    out_reg = _ref_reg(h, params['reg'], fw)
    out_class = h[:, -1, :] @ params['fc_w'].T + params['fc_b']
    return out_class, out_reg


# ----------------------------------------------------------------------------- torch-style params
def init_params(key, cfg, nb_classes, nb_channels):
    F, H, fw = cfg['nb_filters'], cfg['nb_units_lstm'], cfg['filter_width']
    keys = iter(jax.random.split(key, 64))

    def u(shape, fan_in):
        s = 1.0 / np.sqrt(fan_in)
        return jax.random.uniform(next(keys), shape, jnp.float32, -s, s)

    conv_blocks = []
    for i in range(cfg['nb_conv_blocks']):
        cin = 1 if i == 0 else F
        conv_blocks.append(dict(
            w1=u((F, cin, fw, 1), cin * fw), b1=u((F,), cin * fw),
            w2=u((F, F, fw, 1), F * fw), b2=u((F,), F * fw)))

    lstm = []
    for i in range(cfg['nb_layers_lstm']):
        din = nb_channels * F if i == 0 else H
        lstm.append(dict(wih=u((4 * H, din), H), whh=u((4 * H, H), H),
                         bih=u((4 * H,), H), bhh=u((4 * H,), H)))

    reg = dict(wt=jnp.stack([u((fw,), fw) for _ in range(4)]),
               bt=jnp.concatenate([u((1,), fw) for _ in range(4)]),
               wlin=u((nb_channels, H), H))

    return dict(conv_blocks=conv_blocks, lstm=lstm,
                fc_w=u((nb_classes, H), H), fc_b=u((nb_classes,), H), reg=reg)


if __name__ == "__main__":
    cfg = dict(nb_conv_blocks=2, nb_filters=32, dilation=1, batch_norm=0,
               filter_width=3, nb_layers_lstm=2, drop_prob=0.5, nb_units_lstm=32)
    B, T, C = 2, 16, 4
    nb_classes = 5

    key = jax.random.PRNGKey(0)
    kx, kp = jax.random.split(key)
    x = jax.random.normal(kx, (B, T, C), jnp.float32)
    params = init_params(kp, cfg, nb_classes, C)
    pp = prepare_params(params, cfg, C)          # one-time weight re-layout (not per forward)

    fwd = jax.jit(functools.partial(fused_forward, cfg=cfg, nb_classes=nb_classes))
    out_class, out_reg = fwd(x, pp)
    jax.block_until_ready((out_class, out_reg))

    ref_class, ref_reg = ref_forward(x, params, cfg)
    np.testing.assert_allclose(np.asarray(out_class), np.asarray(ref_class), rtol=1e-3, atol=1e-3)
    np.testing.assert_allclose(np.asarray(out_reg), np.asarray(ref_reg), rtol=1e-3, atol=1e-3)

    Tf = T - 2 * cfg['nb_conv_blocks'] * cfg['dilation'] * (cfg['filter_width'] - 1)
    assert out_class.shape == (B, nb_classes)
    assert out_reg.shape == (B, Tf + 4 * (cfg['filter_width'] - 1), C)
    print("KERNEL_OK")
</pallas_src>

<mosaic_0001>
module attributes {stable_mosaic.version = 11 : i64} {
  func.func @kernel(%arg0: i32, %arg1: memref<2x16x4xf32, #tpu.memory_space<vmem>>, %arg2: memref<12x128xf32, #tpu.memory_space<vmem>>, %arg3: memref<384x128xf32, #tpu.memory_space<vmem>>, %arg4: memref<384x128xf32, #tpu.memory_space<vmem>>, %arg5: memref<384x128xf32, #tpu.memory_space<vmem>>, %arg6: memref<1x128xf32, #tpu.memory_space<vmem>>, %arg7: memref<1x128xf32, #tpu.memory_space<vmem>>, %arg8: memref<1x128xf32, #tpu.memory_space<vmem>>, %arg9: memref<1x128xf32, #tpu.memory_space<vmem>>, %arg10: memref<128x128xf32, #tpu.memory_space<vmem>>, %arg11: memref<32x128xf32, #tpu.memory_space<vmem>>, %arg12: memref<1x128xf32, #tpu.memory_space<vmem>>, %arg13: memref<32x128xf32, #tpu.memory_space<vmem>>, %arg14: memref<32x128xf32, #tpu.memory_space<vmem>>, %arg15: memref<1x128xf32, #tpu.memory_space<vmem>>, %arg16: memref<32x5xf32, #tpu.memory_space<vmem>>, %arg17: memref<1x5xf32, #tpu.memory_space<vmem>>, %arg18: memref<4x3xf32, #tpu.memory_space<smem>>, %arg19: memref<4xf32, #tpu.memory_space<smem>>, %arg20: memref<32x4xf32, #tpu.memory_space<vmem>>, %arg21: memref<2x5xf32, #tpu.memory_space<vmem>>, %arg22: memref<2x16x4xf32, #tpu.memory_space<vmem>>, %arg23: memref<16x32xf32, #tpu.memory_space<vmem>>) attributes {dimension_semantics = [#tpu.dimension_semantics<arbitrary>], iteration_bounds = array<i64: 1>, scalar_prefetch = 0 : i64, scratch_operands = 1 : i64, tpu.core_type = #tpu.core_type<tc>, window_params = [{pipeline_mode = #tpu.pipeline_mode<synchronous>, transform_indices = @transform_0, window_bounds = array<i64: 2, 16, 4>}, {pipeline_mode = #tpu.pipeline_mode<synchronous>, transform_indices = @transform_1, window_bounds = array<i64: 12, 128>}, {pipeline_mode = #tpu.pipeline_mode<synchronous>, transform_indices = @transform_2, window_bounds = array<i64: 384, 128>}, {pipeline_mode = #tpu.pipeline_mode<synchronous>, transform_indices = @transform_3, window_bounds = array<i64: 384, 128>}, {pipeline_mode = #tpu.pipeline_mode<synchronous>, transform_indices = @transform_4, window_bounds = array<i64: 384, 128>}, {pipeline_mode = #tpu.pipeline_mode<synchronous>, transform_indices = @transform_5, window_bounds = array<i64: 1, 128>}, {pipeline_mode = #tpu.pipeline_mode<synchronous>, transform_indices = @transform_6, window_bounds = array<i64: 1, 128>}, {pipeline_mode = #tpu.pipeline_mode<synchronous>, transform_indices = @transform_7, window_bounds = array<i64: 1, 128>}, {pipeline_mode = #tpu.pipeline_mode<synchronous>, transform_indices = @transform_8, window_bounds = array<i64: 1, 128>}, {pipeline_mode = #tpu.pipeline_mode<synchronous>, transform_indices = @transform_9, window_bounds = array<i64: 128, 128>}, {pipeline_mode = #tpu.pipeline_mode<synchronous>, transform_indices = @transform_10, window_bounds = array<i64: 32, 128>}, {pipeline_mode = #tpu.pipeline_mode<synchronous>, transform_indices = @transform_11, window_bounds = array<i64: 1, 128>}, {pipeline_mode = #tpu.pipeline_mode<synchronous>, transform_indices = @transform_12, window_bounds = array<i64: 32, 128>}, {pipeline_mode = #tpu.pipeline_mode<synchronous>, transform_indices = @transform_13, window_bounds = array<i64: 32, 128>}, {pipeline_mode = #tpu.pipeline_mode<synchronous>, transform_indices = @transform_14, window_bounds = array<i64: 1, 128>}, {pipeline_mode = #tpu.pipeline_mode<synchronous>, transform_indices = @transform_15, window_bounds = array<i64: 32, 5>}, {pipeline_mode = #tpu.pipeline_mode<synchronous>, transform_indices = @transform_16, window_bounds = array<i64: 1, 5>}, {transform_indices = @transform_17, window_bounds = array<i64: 4, 3>}, {transform_indices = @transform_18, window_bounds = array<i64: 4>}, {pipeline_mode = #tpu.pipeline_mode<synchronous>, transform_indices = @transform_19, window_bounds = array<i64: 32, 4>}, {pipeline_mode = #tpu.pipeline_mode<synchronous>, transform_indices = @transform_20, window_bounds = array<i64: 2, 5>}, {pipeline_mode = #tpu.pipeline_mode<synchronous>, transform_indices = @transform_21, window_bounds = array<i64: 2, 16, 4>}]} {
    %c0 = arith.constant 0 : index
    %c0_0 = arith.constant 0 : index
    %c0_1 = arith.constant 0 : index
    %0 = vector.load %arg1[%c0, %c0_0, %c0_1] : memref<2x16x4xf32, #tpu.memory_space<vmem>>, vector<1x16x4xf32>
    %1 = vector.shape_cast %0 : vector<1x16x4xf32> to vector<16x4xf32>
    %2 = vector.extract_strided_slice %1 {offsets = [0, 0], sizes = [14, 4], strides = [1, 1]} : vector<16x4xf32> to vector<14x4xf32>
    %c0_2 = arith.constant 0 : index
    %c0_3 = arith.constant 0 : index
    %3 = vector.load %arg2[%c0_2, %c0_3] : memref<12x128xf32, #tpu.memory_space<vmem>>, vector<4x128xf32>
    %cst = arith.constant dense<0.000000e+00> : vector<14x128xf32>
    %4 = tpu.matmul %2, %3, %cst {dimension_numbers = #tpu.dot_dimension_numbers<[1], [0], [0], [1], [0, 0, 1, 1], [], []>} : vector<14x4xf32>, vector<4x128xf32>, vector<14x128xf32> -> vector<14x128xf32>
    %5 = vector.extract_strided_slice %1 {offsets = [1, 0], sizes = [14, 4], strides = [1, 1]} : vector<16x4xf32> to vector<14x4xf32>
    %c4 = arith.constant 4 : index
    %c0_4 = arith.constant 0 : index
    %6 = vector.load %arg2[%c4, %c0_4] : memref<12x128xf32, #tpu.memory_space<vmem>>, vector<4x128xf32>
    %cst_5 = arith.constant dense<0.000000e+00> : vector<14x128xf32>
    %7 = tpu.matmul %5, %6, %cst_5 {dimension_numbers = #tpu.dot_dimension_numbers<[1], [0], [0], [1], [0, 0, 1, 1], [], []>} : vector<14x4xf32>, vector<4x128xf32>, vector<14x128xf32> -> vector<14x128xf32>
    %8 = arith.addf %4, %7 : vector<14x128xf32>
    %9 = vector.extract_strided_slice %1 {offsets = [2, 0], sizes = [14, 4], strides = [1, 1]} : vector<16x4xf32> to vector<14x4xf32>
    %c8 = arith.constant 8 : index
    %c0_6 = arith.constant 0 : index
    %10 = vector.load %arg2[%c8, %c0_6] : memref<12x128xf32, #tpu.memory_space<vmem>>, vector<4x128xf32>
    %cst_7 = arith.constant dense<0.000000e+00> : vector<14x128xf32>
    %11 = tpu.matmul %9, %10, %cst_7 {dimension_numbers = #tpu.dot_dimension_numbers<[1], [0], [0], [1], [0, 0, 1, 1], [], []>} : vector<14x4xf32>, vector<4x128xf32>, vector<14x128xf32> -> vector<14x128xf32>
    %12 = arith.addf %8, %11 : vector<14x128xf32>
    %c0_8 = arith.constant 0 : index
    %c0_9 = arith.constant 0 : index
    %13 = vector.load %arg6[%c0_8, %c0_9] : memref<1x128xf32, #tpu.memory_space<vmem>>, vector<1x128xf32>
    %14 = vector.broadcast %13 : vector<1x128xf32> to vector<14x128xf32>
    %15 = arith.addf %12, %14 : vector<14x128xf32>
    %cst_10 = arith.constant 0.000000e+00 : f32
    %16 = vector.broadcast %cst_10 : f32 to vector<14x128xf32>
    %17 = arith.maximumf %15, %16 : vector<14x128xf32>
    %18 = vector.extract_strided_slice %17 {offsets = [0, 0], sizes = [12, 128], strides = [1, 1]} : vector<14x128xf32> to vector<12x128xf32>
    %c0_11 = arith.constant 0 : index
    %c0_12 = arith.constant 0 : index
    %19 = vector.load %arg3[%c0_11, %c0_12] : memref<384x128xf32, #tpu.memory_space<vmem>>, vector<128x128xf32>
    %cst_13 = arith.constant dense<0.000000e+00> : vector<12x128xf32>
    %20 = tpu.matmul %18, %19, %cst_13 {dimension_numbers = #tpu.dot_dimension_numbers<[1], [0], [0], [1], [0, 0, 1, 1], [], []>} : vector<12x128xf32>, vector<128x128xf32>, vector<12x128xf32> -> vector<12x128xf32>
    %21 = vector.extract_strided_slice %17 {offsets = [1, 0], sizes = [12, 128], strides = [1, 1]} : vector<14x128xf32> to vector<12x128xf32>
    %c128 = arith.constant 128 : index
    %c0_14 = arith.constant 0 : index
    %22 = vector.load %arg3[%c128, %c0_14] : memref<384x128xf32, #tpu.memory_space<vmem>>, vector<128x128xf32>
    %cst_15 = arith.constant dense<0.000000e+00> : vector<12x128xf32>
    %23 = tpu.matmul %21, %22, %cst_15 {dimension_numbers = #tpu.dot_dimension_numbers<[1], [0], [0], [1], [0, 0, 1, 1], [], []>} : vector<12x128xf32>, vector<128x128xf32>, vector<12x128xf32> -> vector<12x128xf32>
    %24 = arith.addf %20, %23 : vector<12x128xf32>
    %25 = vector.extract_strided_slice %17 {offsets = [2, 0], sizes = [12, 128], strides = [1, 1]} : vector<14x128xf32> to vector<12x128xf32>
    %c256 = arith.constant 256 : index
    %c0_16 = arith.constant 0 : index
    %26 = vector.load %arg3[%c256, %c0_16] : memref<384x128xf32, #tpu.memory_space<vmem>>, vector<128x128xf32>
    %cst_17 = arith.constant dense<0.000000e+00> : vector<12x128xf32>
    %27 = tpu.matmul %25, %26, %cst_17 {dimension_numbers = #tpu.dot_dimension_numbers<[1], [0], [0], [1], [0, 0, 1, 1], [], []>} : vector<12x128xf32>, vector<128x128xf32>, vector<12x128xf32> -> vector<12x128xf32>
    %28 = arith.addf %24, %27 : vector<12x128xf32>
    %c0_18 = arith.constant 0 : index
    %c0_19 = arith.constant 0 : index
    %29 = vector.load %arg7[%c0_18, %c0_19] : memref<1x128xf32, #tpu.memory_space<vmem>>, vector<1x128xf32>
    %30 = vector.broadcast %29 : vector<1x128xf32> to vector<12x128xf32>
    %31 = arith.addf %28, %30 : vector<12x128xf32>
    %cst_20 = arith.constant 0.000000e+00 : f32
    %32 = vector.broadcast %cst_20 : f32 to vector<12x128xf32>
    %33 = arith.maximumf %31, %32 : vector<12x128xf32>
    %34 = vector.extract_strided_slice %33 {offsets = [0, 0], sizes = [10, 128], strides = [1, 1]} : vector<12x128xf32> to vector<10x128xf32>
    %c0_21 = arith.constant 0 : index
    %c0_22 = arith.constant 0 : index
    %35 = vector.load %arg4[%c0_21, %c0_22] : memref<384x128xf32, #tpu.memory_space<vmem>>, vector<128x128xf32>
    %cst_23 = arith.constant dense<0.000000e+00> : vector<10x128xf32>
    %36 = tpu.matmul %34, %35, %cst_23 {dimension_numbers = #tpu.dot_dimension_numbers<[1], [0], [0], [1], [0, 0, 1, 1], [], []>} : vector<10x128xf32>, vector<128x128xf32>, vector<10x128xf32> -> vector<10x128xf32>
    %37 = vector.extract_strided_slice %33 {offsets = [1, 0], sizes = [10, 128], strides = [1, 1]} : vector<12x128xf32> to vector<10x128xf32>
    %c128_24 = arith.constant 128 : index
    %c0_25 = arith.constant 0 : index
    %38 = vector.load %arg4[%c128_24, %c0_25] : memref<384x128xf32, #tpu.memory_space<vmem>>, vector<128x128xf32>
    %cst_26 = arith.constant dense<0.000000e+00> : vector<10x128xf32>
    %39 = tpu.matmul %37, %38, %cst_26 {dimension_numbers = #tpu.dot_dimension_numbers<[1], [0], [0], [1], [0, 0, 1, 1], [], []>} : vector<10x128xf32>, vector<128x128xf32>, vector<10x128xf32> -> vector<10x128xf32>
    %40 = arith.addf %36, %39 : vector<10x128xf32>
    %41 = vector.extract_strided_slice %33 {offsets = [2, 0], sizes = [10, 128], strides = [1, 1]} : vector<12x128xf32> to vector<10x128xf32>
    %c256_27 = arith.constant 256 : index
    %c0_28 = arith.constant 0 : index
    %42 = vector.load %arg4[%c256_27, %c0_28] : memref<384x128xf32, #tpu.memory_space<vmem>>, vector<128x128xf32>
    %cst_29 = arith.constant dense<0.000000e+00> : vector<10x128xf32>
    %43 = tpu.matmul %41, %42, %cst_29 {dimension_numbers = #tpu.dot_dimension_numbers<[1], [0], [0], [1], [0, 0, 1, 1], [], []>} : vector<10x128xf32>, vector<128x128xf32>, vector<10x128xf32> -> vector<10x128xf32>
    %44 = arith.addf %40, %43 : vector<10x128xf32>
    %c0_30 = arith.constant 0 : index
    %c0_31 = arith.constant 0 : index
    %45 = vector.load %arg8[%c0_30, %c0_31] : memref<1x128xf32, #tpu.memory_space<vmem>>, vector<1x128xf32>
    %46 = vector.broadcast %45 : vector<1x128xf32> to vector<10x128xf32>
    %47 = arith.addf %44, %46 : vector<10x128xf32>
    %cst_32 = arith.constant 0.000000e+00 : f32
    %48 = vector.broadcast %cst_32 : f32 to vector<10x128xf32>
    %49 = arith.maximumf %47, %48 : vector<10x128xf32>
    %50 = vector.extract_strided_slice %49 {offsets = [0, 0], sizes = [8, 128], strides = [1, 1]} : vector<10x128xf32> to vector<8x128xf32>
    %c0_33 = arith.constant 0 : index
    %c0_34 = arith.constant 0 : index
    %51 = vector.load %arg5[%c0_33, %c0_34] : memref<384x128xf32, #tpu.memory_space<vmem>>, vector<128x128xf32>
    %cst_35 = arith.constant dense<0.000000e+00> : vector<8x128xf32>
    %52 = tpu.matmul %50, %51, %cst_35 {dimension_numbers = #tpu.dot_dimension_numbers<[1], [0], [0], [1], [0, 0, 1, 1], [], []>} : vector<8x128xf32>, vector<128x128xf32>, vector<8x128xf32> -> vector<8x128xf32>
    %53 = vector.extract_strided_slice %49 {offsets = [1, 0], sizes = [8, 128], strides = [1, 1]} : vector<10x128xf32> to vector<8x128xf32>
    %c128_36 = arith.constant 128 : index
    %c0_37 = arith.constant 0 : index
    %54 = vector.load %arg5[%c128_36, %c0_37] : memref<384x128xf32, #tpu.memory_space<vmem>>, vector<128x128xf32>
    %cst_38 = arith.constant dense<0.000000e+00> : vector<8x128xf32>
    %55 = tpu.matmul %53, %54, %cst_38 {dimension_numbers = #tpu.dot_dimension_numbers<[1], [0], [0], [1], [0, 0, 1, 1], [], []>} : vector<8x128xf32>, vector<128x128xf32>, vector<8x128xf32> -> vector<8x128xf32>
    %56 = arith.addf %52, %55 : vector<8x128xf32>
    %57 = vector.extract_strided_slice %49 {offsets = [2, 0], sizes = [8, 128], strides = [1, 1]} : vector<10x128xf32> to vector<8x128xf32>
    %c256_39 = arith.constant 256 : index
    %c0_40 = arith.constant 0 : index
    %58 = vector.load %arg5[%c256_39, %c0_40] : memref<384x128xf32, #tpu.memory_space<vmem>>, vector<128x128xf32>
    %cst_41 = arith.constant dense<0.000000e+00> : vector<8x128xf32>
    %59 = tpu.matmul %57, %58, %cst_41 {dimension_numbers = #tpu.dot_dimension_numbers<[1], [0], [0], [1], [0, 0, 1, 1], [], []>} : vector<8x128xf32>, vector<128x128xf32>, vector<8x128xf32> -> vector<8x128xf32>
    %60 = arith.addf %56, %59 : vector<8x128xf32>
    %c0_42 = arith.constant 0 : index
    %c0_43 = arith.constant 0 : index
    %61 = vector.load %arg9[%c0_42, %c0_43] : memref<1x128xf32, #tpu.memory_space<vmem>>, vector<1x128xf32>
    %62 = vector.broadcast %61 : vector<1x128xf32> to vector<8x128xf32>
    %63 = arith.addf %60, %62 : vector<8x128xf32>
    %cst_44 = arith.constant 0.000000e+00 : f32
    %64 = vector.broadcast %cst_44 : f32 to vector<8x128xf32>
    %65 = arith.maximumf %63, %64 : vector<8x128xf32>
    %c1 = arith.constant 1 : index
    %c0_45 = arith.constant 0 : index
    %c0_46 = arith.constant 0 : index
    %66 = vector.load %arg1[%c1, %c0_45, %c0_46] : memref<2x16x4xf32, #tpu.memory_space<vmem>>, vector<1x16x4xf32>
    %67 = vector.shape_cast %66 : vector<1x16x4xf32> to vector<16x4xf32>
    %68 = vector.extract_strided_slice %67 {offsets = [0, 0], sizes = [14, 4], strides = [1, 1]} : vector<16x4xf32> to vector<14x4xf32>
    %c0_47 = arith.constant 0 : index
    %c0_48 = arith.constant 0 : index
    %69 = vector.load %arg2[%c0_47, %c0_48] : memref<12x128xf32, #tpu.memory_space<vmem>>, vector<4x128xf32>
    %cst_49 = arith.constant dense<0.000000e+00> : vector<14x128xf32>
    %70 = tpu.matmul %68, %69, %cst_49 {dimension_numbers = #tpu.dot_dimension_numbers<[1], [0], [0], [1], [0, 0, 1, 1], [], []>} : vector<14x4xf32>, vector<4x128xf32>, vector<14x128xf32> -> vector<14x128xf32>
    %71 = vector.extract_strided_slice %67 {offsets = [1, 0], sizes = [14, 4], strides = [1, 1]} : vector<16x4xf32> to vector<14x4xf32>
    %c4_50 = arith.constant 4 : index
    %c0_51 = arith.constant 0 : index
    %72 = vector.load %arg2[%c4_50, %c0_51] : memref<12x128xf32, #tpu.memory_space<vmem>>, vector<4x128xf32>
    %cst_52 = arith.constant dense<0.000000e+00> : vector<14x128xf32>
    %73 = tpu.matmul %71, %72, %cst_52 {dimension_numbers = #tpu.dot_dimension_numbers<[1], [0], [0], [1], [0, 0, 1, 1], [], []>} : vector<14x4xf32>, vector<4x128xf32>, vector<14x128xf32> -> vector<14x128xf32>
    %74 = arith.addf %70, %73 : vector<14x128xf32>
    %75 = vector.extract_strided_slice %67 {offsets = [2, 0], sizes = [14, 4], strides = [1, 1]} : vector<16x4xf32> to vector<14x4xf32>
    %c8_53 = arith.constant 8 : index
    %c0_54 = arith.constant 0 : index
    %76 = vector.load %arg2[%c8_53, %c0_54] : memref<12x128xf32, #tpu.memory_space<vmem>>, vector<4x128xf32>
    %cst_55 = arith.constant dense<0.000000e+00> : vector<14x128xf32>
    %77 = tpu.matmul %75, %76, %cst_55 {dimension_numbers = #tpu.dot_dimension_numbers<[1], [0], [0], [1], [0, 0, 1, 1], [], []>} : vector<14x4xf32>, vector<4x128xf32>, vector<14x128xf32> -> vector<14x128xf32>
    %78 = arith.addf %74, %77 : vector<14x128xf32>
    %c0_56 = arith.constant 0 : index
    %c0_57 = arith.constant 0 : index
    %79 = vector.load %arg6[%c0_56, %c0_57] : memref<1x128xf32, #tpu.memory_space<vmem>>, vector<1x128xf32>
    %80 = vector.broadcast %79 : vector<1x128xf32> to vector<14x128xf32>
    %81 = arith.addf %78, %80 : vector<14x128xf32>
    %cst_58 = arith.constant 0.000000e+00 : f32
    %82 = vector.broadcast %cst_58 : f32 to vector<14x128xf32>
    %83 = arith.maximumf %81, %82 : vector<14x128xf32>
    %84 = vector.extract_strided_slice %83 {offsets = [0, 0], sizes = [12, 128], strides = [1, 1]} : vector<14x128xf32> to vector<12x128xf32>
    %c0_59 = arith.constant 0 : index
    %c0_60 = arith.constant 0 : index
    %85 = vector.load %arg3[%c0_59, %c0_60] : memref<384x128xf32, #tpu.memory_space<vmem>>, vector<128x128xf32>
    %cst_61 = arith.constant dense<0.000000e+00> : vector<12x128xf32>
    %86 = tpu.matmul %84, %85, %cst_61 {dimension_numbers = #tpu.dot_dimension_numbers<[1], [0], [0], [1], [0, 0, 1, 1], [], []>} : vector<12x128xf32>, vector<128x128xf32>, vector<12x128xf32> -> vector<12x128xf32>
    %87 = vector.extract_strided_slice %83 {offsets = [1, 0], sizes = [12, 128], strides = [1, 1]} : vector<14x128xf32> to vector<12x128xf32>
    %c128_62 = arith.constant 128 : index
    %c0_63 = arith.constant 0 : index
    %88 = vector.load %arg3[%c128_62, %c0_63] : memref<384x128xf32, #tpu.memory_space<vmem>>, vector<128x128xf32>
    %cst_64 = arith.constant dense<0.000000e+00> : vector<12x128xf32>
    %89 = tpu.matmul %87, %88, %cst_64 {dimension_numbers = #tpu.dot_dimension_numbers<[1], [0], [0], [1], [0, 0, 1, 1], [], []>} : vector<12x128xf32>, vector<128x128xf32>, vector<12x128xf32> -> vector<12x128xf32>
    %90 = arith.addf %86, %89 : vector<12x128xf32>
    %91 = vector.extract_strided_slice %83 {offsets = [2, 0], sizes = [12, 128], strides = [1, 1]} : vector<14x128xf32> to vector<12x128xf32>
    %c256_65 = arith.constant 256 : index
    %c0_66 = arith.constant 0 : index
    %92 = vector.load %arg3[%c256_65, %c0_66] : memref<384x128xf32, #tpu.memory_space<vmem>>, vector<128x128xf32>
    %cst_67 = arith.constant dense<0.000000e+00> : vector<12x128xf32>
    %93 = tpu.matmul %91, %92, %cst_67 {dimension_numbers = #tpu.dot_dimension_numbers<[1], [0], [0], [1], [0, 0, 1, 1], [], []>} : vector<12x128xf32>, vector<128x128xf32>, vector<12x128xf32> -> vector<12x128xf32>
    %94 = arith.addf %90, %93 : vector<12x128xf32>
    %c0_68 = arith.constant 0 : index
    %c0_69 = arith.constant 0 : index
    %95 = vector.load %arg7[%c0_68, %c0_69] : memref<1x128xf32, #tpu.memory_space<vmem>>, vector<1x128xf32>
    %96 = vector.broadcast %95 : vector<1x128xf32> to vector<12x128xf32>
    %97 = arith.addf %94, %96 : vector<12x128xf32>
    %cst_70 = arith.constant 0.000000e+00 : f32
    %98 = vector.broadcast %cst_70 : f32 to vector<12x128xf32>
    %99 = arith.maximumf %97, %98 : vector<12x128xf32>
    %100 = vector.extract_strided_slice %99 {offsets = [0, 0], sizes = [10, 128], strides = [1, 1]} : vector<12x128xf32> to vector<10x128xf32>
    %c0_71 = arith.constant 0 : index
    %c0_72 = arith.constant 0 : index
    %101 = vector.load %arg4[%c0_71, %c0_72] : memref<384x128xf32, #tpu.memory_space<vmem>>, vector<128x128xf32>
    %cst_73 = arith.constant dense<0.000000e+00> : vector<10x128xf32>
    %102 = tpu.matmul %100, %101, %cst_73 {dimension_numbers = #tpu.dot_dimension_numbers<[1], [0], [0], [1], [0, 0, 1, 1], [], []>} : vector<10x128xf32>, vector<128x128xf32>, vector<10x128xf32> -> vector<10x128xf32>
    %103 = vector.extract_strided_slice %99 {offsets = [1, 0], sizes = [10, 128], strides = [1, 1]} : vector<12x128xf32> to vector<10x128xf32>
    %c128_74 = arith.constant 128 : index
    %c0_75 = arith.constant 0 : index
    %104 = vector.load %arg4[%c128_74, %c0_75] : memref<384x128xf32, #tpu.memory_space<vmem>>, vector<128x128xf32>
    %cst_76 = arith.constant dense<0.000000e+00> : vector<10x128xf32>
    %105 = tpu.matmul %103, %104, %cst_76 {dimension_numbers = #tpu.dot_dimension_numbers<[1], [0], [0], [1], [0, 0, 1, 1], [], []>} : vector<10x128xf32>, vector<128x128xf32>, vector<10x128xf32> -> vector<10x128xf32>
    %106 = arith.addf %102, %105 : vector<10x128xf32>
    %107 = vector.extract_strided_slice %99 {offsets = [2, 0], sizes = [10, 128], strides = [1, 1]} : vector<12x128xf32> to vector<10x128xf32>
    %c256_77 = arith.constant 256 : index
    %c0_78 = arith.constant 0 : index
    %108 = vector.load %arg4[%c256_77, %c0_78] : memref<384x128xf32, #tpu.memory_space<vmem>>, vector<128x128xf32>
    %cst_79 = arith.constant dense<0.000000e+00> : vector<10x128xf32>
    %109 = tpu.matmul %107, %108, %cst_79 {dimension_numbers = #tpu.dot_dimension_numbers<[1], [0], [0], [1], [0, 0, 1, 1], [], []>} : vector<10x128xf32>, vector<128x128xf32>, vector<10x128xf32> -> vector<10x128xf32>
    %110 = arith.addf %106, %109 : vector<10x128xf32>
    %c0_80 = arith.constant 0 : index
    %c0_81 = arith.constant 0 : index
    %111 = vector.load %arg8[%c0_80, %c0_81] : memref<1x128xf32, #tpu.memory_space<vmem>>, vector<1x128xf32>
    %112 = vector.broadcast %111 : vector<1x128xf32> to vector<10x128xf32>
    %113 = arith.addf %110, %112 : vector<10x128xf32>
    %cst_82 = arith.constant 0.000000e+00 : f32
    %114 = vector.broadcast %cst_82 : f32 to vector<10x128xf32>
    %115 = arith.maximumf %113, %114 : vector<10x128xf32>
    %116 = vector.extract_strided_slice %115 {offsets = [0, 0], sizes = [8, 128], strides = [1, 1]} : vector<10x128xf32> to vector<8x128xf32>
    %c0_83 = arith.constant 0 : index
    %c0_84 = arith.constant 0 : index
    %117 = vector.load %arg5[%c0_83, %c0_84] : memref<384x128xf32, #tpu.memory_space<vmem>>, vector<128x128xf32>
    %cst_85 = arith.constant dense<0.000000e+00> : vector<8x128xf32>
    %118 = tpu.matmul %116, %117, %cst_85 {dimension_numbers = #tpu.dot_dimension_numbers<[1], [0], [0], [1], [0, 0, 1, 1], [], []>} : vector<8x128xf32>, vector<128x128xf32>, vector<8x128xf32> -> vector<8x128xf32>
    %119 = vector.extract_strided_slice %115 {offsets = [1, 0], sizes = [8, 128], strides = [1, 1]} : vector<10x128xf32> to vector<8x128xf32>
    %c128_86 = arith.constant 128 : index
    %c0_87 = arith.constant 0 : index
    %120 = vector.load %arg5[%c128_86, %c0_87] : memref<384x128xf32, #tpu.memory_space<vmem>>, vector<128x128xf32>
    %cst_88 = arith.constant dense<0.000000e+00> : vector<8x128xf32>
    %121 = tpu.matmul %119, %120, %cst_88 {dimension_numbers = #tpu.dot_dimension_numbers<[1], [0], [0], [1], [0, 0, 1, 1], [], []>} : vector<8x128xf32>, vector<128x128xf32>, vector<8x128xf32> -> vector<8x128xf32>
    %122 = arith.addf %118, %121 : vector<8x128xf32>
    %123 = vector.extract_strided_slice %115 {offsets = [2, 0], sizes = [8, 128], strides = [1, 1]} : vector<10x128xf32> to vector<8x128xf32>
    %c256_89 = arith.constant 256 : index
    %c0_90 = arith.constant 0 : index
    %124 = vector.load %arg5[%c256_89, %c0_90] : memref<384x128xf32, #tpu.memory_space<vmem>>, vector<128x128xf32>
    %cst_91 = arith.constant dense<0.000000e+00> : vector<8x128xf32>
    %125 = tpu.matmul %123, %124, %cst_91 {dimension_numbers = #tpu.dot_dimension_numbers<[1], [0], [0], [1], [0, 0, 1, 1], [], []>} : vector<8x128xf32>, vector<128x128xf32>, vector<8x128xf32> -> vector<8x128xf32>
    %126 = arith.addf %122, %125 : vector<8x128xf32>
    %c0_92 = arith.constant 0 : index
    %c0_93 = arith.constant 0 : index
    %127 = vector.load %arg9[%c0_92, %c0_93] : memref<1x128xf32, #tpu.memory_space<vmem>>, vector<1x128xf32>
    %128 = vector.broadcast %127 : vector<1x128xf32> to vector<8x128xf32>
    %129 = arith.addf %126, %128 : vector<8x128xf32>
    %cst_94 = arith.constant 0.000000e+00 : f32
    %130 = vector.broadcast %cst_94 : f32 to vector<8x128xf32>
    %131 = arith.maximumf %129, %130 : vector<8x128xf32>
    %132 = vector.extract_strided_slice %65 {offsets = [0, 0], sizes = [1, 128], strides = [1, 1]} : vector<8x128xf32> to vector<1x128xf32>
    %133 = vector.extract_strided_slice %131 {offsets = [0, 0], sizes = [1, 128], strides = [1, 1]} : vector<8x128xf32> to vector<1x128xf32>
    %134 = vector.extract_strided_slice %65 {offsets = [1, 0], sizes = [1, 128], strides = [1, 1]} : vector<8x128xf32> to vector<1x128xf32>
    %135 = vector.extract_strided_slice %131 {offsets = [1, 0], sizes = [1, 128], strides = [1, 1]} : vector<8x128xf32> to vector<1x128xf32>
    %136 = vector.extract_strided_slice %65 {offsets = [2, 0], sizes = [1, 128], strides = [1, 1]} : vector<8x128xf32> to vector<1x128xf32>
    %137 = vector.extract_strided_slice %131 {offsets = [2, 0], sizes = [1, 128], strides = [1, 1]} : vector<8x128xf32> to vector<1x128xf32>
    %138 = vector.extract_strided_slice %65 {offsets = [3, 0], sizes = [1, 128], strides = [1, 1]} : vector<8x128xf32> to vector<1x128xf32>
    %139 = vector.extract_strided_slice %131 {offsets = [3, 0], sizes = [1, 128], strides = [1, 1]} : vector<8x128xf32> to vector<1x128xf32>
    %140 = vector.extract_strided_slice %65 {offsets = [4, 0], sizes = [1, 128], strides = [1, 1]} : vector<8x128xf32> to vector<1x128xf32>
    %141 = vector.extract_strided_slice %131 {offsets = [4, 0], sizes = [1, 128], strides = [1, 1]} : vector<8x128xf32> to vector<1x128xf32>
    %142 = vector.extract_strided_slice %65 {offsets = [5, 0], sizes = [1, 128], strides = [1, 1]} : vector<8x128xf32> to vector<1x128xf32>
    %143 = vector.extract_strided_slice %131 {offsets = [5, 0], sizes = [1, 128], strides = [1, 1]} : vector<8x128xf32> to vector<1x128xf32>
    %144 = vector.extract_strided_slice %65 {offsets = [6, 0], sizes = [1, 128], strides = [1, 1]} : vector<8x128xf32> to vector<1x128xf32>
    %145 = vector.extract_strided_slice %131 {offsets = [6, 0], sizes = [1, 128], strides = [1, 1]} : vector<8x128xf32> to vector<1x128xf32>
    %146 = vector.extract_strided_slice %65 {offsets = [7, 0], sizes = [1, 128], strides = [1, 1]} : vector<8x128xf32> to vector<1x128xf32>
    %147 = vector.extract_strided_slice %131 {offsets = [7, 0], sizes = [1, 128], strides = [1, 1]} : vector<8x128xf32> to vector<1x128xf32>
    %148 = tpu.concatenate %132, %133, %134, %135, %136, %137, %138, %139, %140, %141, %142, %143, %144, %145, %146, %147 in 0 : vector<1x128xf32>, vector<1x128xf32>, vector<1x128xf32>, vector<1x128xf32>, vector<1x128xf32>, vector<1x128xf32>, vector<1x128xf32>, vector<1x128xf32>, vector<1x128xf32>, vector<1x128xf32>, vector<1x128xf32>, vector<1x128xf32>, vector<1x128xf32>, vector<1x128xf32>, vector<1x128xf32>, vector<1x128xf32> -> vector<16x128xf32>
    %c0_95 = arith.constant 0 : index
    %c0_96 = arith.constant 0 : index
    %149 = vector.load %arg10[%c0_95, %c0_96] : memref<128x128xf32, #tpu.memory_space<vmem>>, vector<128x128xf32>
    %cst_97 = arith.constant dense<0.000000e+00> : vector<16x128xf32>
    %150 = tpu.matmul %148, %149, %cst_97 {dimension_numbers = #tpu.dot_dimension_numbers<[1], [0], [0], [1], [0, 0, 1, 1], [], []>} : vector<16x128xf32>, vector<128x128xf32>, vector<16x128xf32> -> vector<16x128xf32>
    %c0_98 = arith.constant 0 : index
    %c0_99 = arith.constant 0 : index
    %151 = vector.load %arg12[%c0_98, %c0_99] : memref<1x128xf32, #tpu.memory_space<vmem>>, vector<1x128xf32>
    %152 = vector.broadcast %151 : vector<1x128xf32> to vector<16x128xf32>
    %153 = arith.addf %150, %152 : vector<16x128xf32>
    %c0_100 = arith.constant 0 : index
    %c0_101 = arith.constant 0 : index
    %154 = vector.load %arg11[%c0_100, %c0_101] : memref<32x128xf32, #tpu.memory_space<vmem>>, vector<32x128xf32>
    %cst_102 = arith.constant 0.000000e+00 : f32
    %155 = vector.broadcast %cst_102 : f32 to vector<2x32xf32>
    %cst_103 = arith.constant 0.000000e+00 : f32
    %156 = vector.broadcast %cst_103 : f32 to vector<2x32xf32>
    %157 = vector.extract_strided_slice %153 {offsets = [0, 0], sizes = [2, 128], strides = [1, 1]} : vector<16x128xf32> to vector<2x128xf32>
    %cst_104 = arith.constant dense<0.000000e+00> : vector<2x128xf32>
    %158 = tpu.matmul %155, %154, %cst_104 {dimension_numbers = #tpu.dot_dimension_numbers<[1], [0], [0], [1], [0, 0, 1, 1], [], []>} : vector<2x32xf32>, vector<32x128xf32>, vector<2x128xf32> -> vector<2x128xf32>
    %159 = arith.addf %157, %158 : vector<2x128xf32>
    %160 = vector.extract_strided_slice %159 {offsets = [0, 0], sizes = [2, 96], strides = [1, 1]} : vector<2x128xf32> to vector<2x96xf32>
    %161 = arith.negf %160 : vector<2x96xf32>
    %162 = math.exp %161 : vector<2x96xf32>
    %cst_105 = arith.constant 1.000000e+00 : f32
    %163 = vector.broadcast %cst_105 : f32 to vector<2x96xf32>
    %164 = arith.addf %163, %162 : vector<2x96xf32>
    %165 = arith.divf %163, %164 : vector<2x96xf32>
    %166 = vector.extract_strided_slice %159 {offsets = [0, 96], sizes = [2, 32], strides = [1, 1]} : vector<2x128xf32> to vector<2x32xf32>
    %167 = math.tanh %166 : vector<2x32xf32>
    %168 = vector.extract_strided_slice %165 {offsets = [0, 32], sizes = [2, 32], strides = [1, 1]} : vector<2x96xf32> to vector<2x32xf32>
    %169 = arith.mulf %168, %156 : vector<2x32xf32>
    %170 = vector.extract_strided_slice %165 {offsets = [0, 0], sizes = [2, 32], strides = [1, 1]} : vector<2x96xf32> to vector<2x32xf32>
    %171 = arith.mulf %170, %167 : vector<2x32xf32>
    %172 = arith.addf %169, %171 : vector<2x32xf32>
    %173 = vector.extract_strided_slice %165 {offsets = [0, 64], sizes = [2, 32], strides = [1, 1]} : vector<2x96xf32> to vector<2x32xf32>
    %174 = math.tanh %172 : vector<2x32xf32>
    %175 = arith.mulf %173, %174 : vector<2x32xf32>
    %176 = vector.extract_strided_slice %153 {offsets = [2, 0], sizes = [2, 128], strides = [1, 1]} : vector<16x128xf32> to vector<2x128xf32>
    %cst_106 = arith.constant dense<0.000000e+00> : vector<2x128xf32>
    %177 = tpu.matmul %175, %154, %cst_106 {dimension_numbers = #tpu.dot_dimension_numbers<[1], [0], [0], [1], [0, 0, 1, 1], [], []>} : vector<2x32xf32>, vector<32x128xf32>, vector<2x128xf32> -> vector<2x128xf32>
    %178 = arith.addf %176, %177 : vector<2x128xf32>
    %179 = vector.extract_strided_slice %178 {offsets = [0, 0], sizes = [2, 96], strides = [1, 1]} : vector<2x128xf32> to vector<2x96xf32>
    %180 = arith.negf %179 : vector<2x96xf32>
    %181 = math.exp %180 : vector<2x96xf32>
    %cst_107 = arith.constant 1.000000e+00 : f32
    %182 = vector.broadcast %cst_107 : f32 to vector<2x96xf32>
    %183 = arith.addf %182, %181 : vector<2x96xf32>
    %184 = arith.divf %182, %183 : vector<2x96xf32>
    %185 = vector.extract_strided_slice %178 {offsets = [0, 96], sizes = [2, 32], strides = [1, 1]} : vector<2x128xf32> to vector<2x32xf32>
    %186 = math.tanh %185 : vector<2x32xf32>
    %187 = vector.extract_strided_slice %184 {offsets = [0, 32], sizes = [2, 32], strides = [1, 1]} : vector<2x96xf32> to vector<2x32xf32>
    %188 = arith.mulf %187, %172 : vector<2x32xf32>
    %189 = vector.extract_strided_slice %184 {offsets = [0, 0], sizes = [2, 32], strides = [1, 1]} : vector<2x96xf32> to vector<2x32xf32>
    %190 = arith.mulf %189, %186 : vector<2x32xf32>
    %191 = arith.addf %188, %190 : vector<2x32xf32>
    %192 = vector.extract_strided_slice %184 {offsets = [0, 64], sizes = [2, 32], strides = [1, 1]} : vector<2x96xf32> to vector<2x32xf32>
    %193 = math.tanh %191 : vector<2x32xf32>
    %194 = arith.mulf %192, %193 : vector<2x32xf32>
    %195 = vector.extract_strided_slice %153 {offsets = [4, 0], sizes = [2, 128], strides = [1, 1]} : vector<16x128xf32> to vector<2x128xf32>
    %cst_108 = arith.constant dense<0.000000e+00> : vector<2x128xf32>
    %196 = tpu.matmul %194, %154, %cst_108 {dimension_numbers = #tpu.dot_dimension_numbers<[1], [0], [0], [1], [0, 0, 1, 1], [], []>} : vector<2x32xf32>, vector<32x128xf32>, vector<2x128xf32> -> vector<2x128xf32>
    %197 = arith.addf %195, %196 : vector<2x128xf32>
    %198 = vector.extract_strided_slice %197 {offsets = [0, 0], sizes = [2, 96], strides = [1, 1]} : vector<2x128xf32> to vector<2x96xf32>
    %199 = arith.negf %198 : vector<2x96xf32>
    %200 = math.exp %199 : vector<2x96xf32>
    %cst_109 = arith.constant 1.000000e+00 : f32
    %201 = vector.broadcast %cst_109 : f32 to vector<2x96xf32>
    %202 = arith.addf %201, %200 : vector<2x96xf32>
    %203 = arith.divf %201, %202 : vector<2x96xf32>
    %204 = vector.extract_strided_slice %197 {offsets = [0, 96], sizes = [2, 32], strides = [1, 1]} : vector<2x128xf32> to vector<2x32xf32>
    %205 = math.tanh %204 : vector<2x32xf32>
    %206 = vector.extract_strided_slice %203 {offsets = [0, 32], sizes = [2, 32], strides = [1, 1]} : vector<2x96xf32> to vector<2x32xf32>
    %207 = arith.mulf %206, %191 : vector<2x32xf32>
    %208 = vector.extract_strided_slice %203 {offsets = [0, 0], sizes = [2, 32], strides = [1, 1]} : vector<2x96xf32> to vector<2x32xf32>
    %209 = arith.mulf %208, %205 : vector<2x32xf32>
    %210 = arith.addf %207, %209 : vector<2x32xf32>
    %211 = vector.extract_strided_slice %203 {offsets = [0, 64], sizes = [2, 32], strides = [1, 1]} : vector<2x96xf32> to vector<2x32xf32>
    %212 = math.tanh %210 : vector<2x32xf32>
    %213 = arith.mulf %211, %212 : vector<2x32xf32>
    %214 = vector.extract_strided_slice %153 {offsets = [6, 0], sizes = [2, 128], strides = [1, 1]} : vector<16x128xf32> to vector<2x128xf32>
    %cst_110 = arith.constant dense<0.000000e+00> : vector<2x128xf32>
    %215 = tpu.matmul %213, %154, %cst_110 {dimension_numbers = #tpu.dot_dimension_numbers<[1], [0], [0], [1], [0, 0, 1, 1], [], []>} : vector<2x32xf32>, vector<32x128xf32>, vector<2x128xf32> -> vector<2x128xf32>
    %216 = arith.addf %214, %215 : vector<2x128xf32>
    %217 = vector.extract_strided_slice %216 {offsets = [0, 0], sizes = [2, 96], strides = [1, 1]} : vector<2x128xf32> to vector<2x96xf32>
    %218 = arith.negf %217 : vector<2x96xf32>
    %219 = math.exp %218 : vector<2x96xf32>
    %cst_111 = arith.constant 1.000000e+00 : f32
    %220 = vector.broadcast %cst_111 : f32 to vector<2x96xf32>
    %221 = arith.addf %220, %219 : vector<2x96xf32>
    %222 = arith.divf %220, %221 : vector<2x96xf32>
    %223 = vector.extract_strided_slice %216 {offsets = [0, 96], sizes = [2, 32], strides = [1, 1]} : vector<2x128xf32> to vector<2x32xf32>
    %224 = math.tanh %223 : vector<2x32xf32>
    %225 = vector.extract_strided_slice %222 {offsets = [0, 32], sizes = [2, 32], strides = [1, 1]} : vector<2x96xf32> to vector<2x32xf32>
    %226 = arith.mulf %225, %210 : vector<2x32xf32>
    %227 = vector.extract_strided_slice %222 {offsets = [0, 0], sizes = [2, 32], strides = [1, 1]} : vector<2x96xf32> to vector<2x32xf32>
    %228 = arith.mulf %227, %224 : vector<2x32xf32>
    %229 = arith.addf %226, %228 : vector<2x32xf32>
    %230 = vector.extract_strided_slice %222 {offsets = [0, 64], sizes = [2, 32], strides = [1, 1]} : vector<2x96xf32> to vector<2x32xf32>
    %231 = math.tanh %229 : vector<2x32xf32>
    %232 = arith.mulf %230, %231 : vector<2x32xf32>
    %233 = vector.extract_strided_slice %153 {offsets = [8, 0], sizes = [2, 128], strides = [1, 1]} : vector<16x128xf32> to vector<2x128xf32>
    %cst_112 = arith.constant dense<0.000000e+00> : vector<2x128xf32>
    %234 = tpu.matmul %232, %154, %cst_112 {dimension_numbers = #tpu.dot_dimension_numbers<[1], [0], [0], [1], [0, 0, 1, 1], [], []>} : vector<2x32xf32>, vector<32x128xf32>, vector<2x128xf32> -> vector<2x128xf32>
    %235 = arith.addf %233, %234 : vector<2x128xf32>
    %236 = vector.extract_strided_slice %235 {offsets = [0, 0], sizes = [2, 96], strides = [1, 1]} : vector<2x128xf32> to vector<2x96xf32>
    %237 = arith.negf %236 : vector<2x96xf32>
    %238 = math.exp %237 : vector<2x96xf32>
    %cst_113 = arith.constant 1.000000e+00 : f32
    %239 = vector.broadcast %cst_113 : f32 to vector<2x96xf32>
    %240 = arith.addf %239, %238 : vector<2x96xf32>
    %241 = arith.divf %239, %240 : vector<2x96xf32>
    %242 = vector.extract_strided_slice %235 {offsets = [0, 96], sizes = [2, 32], strides = [1, 1]} : vector<2x128xf32> to vector<2x32xf32>
    %243 = math.tanh %242 : vector<2x32xf32>
    %244 = vector.extract_strided_slice %241 {offsets = [0, 32], sizes = [2, 32], strides = [1, 1]} : vector<2x96xf32> to vector<2x32xf32>
    %245 = arith.mulf %244, %229 : vector<2x32xf32>
    %246 = vector.extract_strided_slice %241 {offsets = [0, 0], sizes = [2, 32], strides = [1, 1]} : vector<2x96xf32> to vector<2x32xf32>
    %247 = arith.mulf %246, %243 : vector<2x32xf32>
    %248 = arith.addf %245, %247 : vector<2x32xf32>
    %249 = vector.extract_strided_slice %241 {offsets = [0, 64], sizes = [2, 32], strides = [1, 1]} : vector<2x96xf32> to vector<2x32xf32>
    %250 = math.tanh %248 : vector<2x32xf32>
    %251 = arith.mulf %249, %250 : vector<2x32xf32>
    %252 = vector.extract_strided_slice %153 {offsets = [10, 0], sizes = [2, 128], strides = [1, 1]} : vector<16x128xf32> to vector<2x128xf32>
    %cst_114 = arith.constant dense<0.000000e+00> : vector<2x128xf32>
    %253 = tpu.matmul %251, %154, %cst_114 {dimension_numbers = #tpu.dot_dimension_numbers<[1], [0], [0], [1], [0, 0, 1, 1], [], []>} : vector<2x32xf32>, vector<32x128xf32>, vector<2x128xf32> -> vector<2x128xf32>
    %254 = arith.addf %252, %253 : vector<2x128xf32>
    %255 = vector.extract_strided_slice %254 {offsets = [0, 0], sizes = [2, 96], strides = [1, 1]} : vector<2x128xf32> to vector<2x96xf32>
    %256 = arith.negf %255 : vector<2x96xf32>
    %257 = math.exp %256 : vector<2x96xf32>
    %cst_115 = arith.constant 1.000000e+00 : f32
    %258 = vector.broadcast %cst_115 : f32 to vector<2x96xf32>
    %259 = arith.addf %258, %257 : vector<2x96xf32>
    %260 = arith.divf %258, %259 : vector<2x96xf32>
    %261 = vector.extract_strided_slice %254 {offsets = [0, 96], sizes = [2, 32], strides = [1, 1]} : vector<2x128xf32> to vector<2x32xf32>
    %262 = math.tanh %261 : vector<2x32xf32>
    %263 = vector.extract_strided_slice %260 {offsets = [0, 32], sizes = [2, 32], strides = [1, 1]} : vector<2x96xf32> to vector<2x32xf32>
    %264 = arith.mulf %263, %248 : vector<2x32xf32>
    %265 = vector.extract_strided_slice %260 {offsets = [0, 0], sizes = [2, 32], strides = [1, 1]} : vector<2x96xf32> to vector<2x32xf32>
    %266 = arith.mulf %265, %262 : vector<2x32xf32>
    %267 = arith.addf %264, %266 : vector<2x32xf32>
    %268 = vector.extract_strided_slice %260 {offsets = [0, 64], sizes = [2, 32], strides = [1, 1]} : vector<2x96xf32> to vector<2x32xf32>
    %269 = math.tanh %267 : vector<2x32xf32>
    %270 = arith.mulf %268, %269 : vector<2x32xf32>
    %271 = vector.extract_strided_slice %153 {offsets = [12, 0], sizes = [2, 128], strides = [1, 1]} : vector<16x128xf32> to vector<2x128xf32>
    %cst_116 = arith.constant dense<0.000000e+00> : vector<2x128xf32>
    %272 = tpu.matmul %270, %154, %cst_116 {dimension_numbers = #tpu.dot_dimension_numbers<[1], [0], [0], [1], [0, 0, 1, 1], [], []>} : vector<2x32xf32>, vector<32x128xf32>, vector<2x128xf32> -> vector<2x128xf32>
    %273 = arith.addf %271, %272 : vector<2x128xf32>
    %274 = vector.extract_strided_slice %273 {offsets = [0, 0], sizes = [2, 96], strides = [1, 1]} : vector<2x128xf32> to vector<2x96xf32>
    %275 = arith.negf %274 : vector<2x96xf32>
    %276 = math.exp %275 : vector<2x96xf32>
    %cst_117 = arith.constant 1.000000e+00 : f32
    %277 = vector.broadcast %cst_117 : f32 to vector<2x96xf32>
    %278 = arith.addf %277, %276 : vector<2x96xf32>
    %279 = arith.divf %277, %278 : vector<2x96xf32>
    %280 = vector.extract_strided_slice %273 {offsets = [0, 96], sizes = [2, 32], strides = [1, 1]} : vector<2x128xf32> to vector<2x32xf32>
    %281 = math.tanh %280 : vector<2x32xf32>
    %282 = vector.extract_strided_slice %279 {offsets = [0, 32], sizes = [2, 32], strides = [1, 1]} : vector<2x96xf32> to vector<2x32xf32>
    %283 = arith.mulf %282, %267 : vector<2x32xf32>
    %284 = vector.extract_strided_slice %279 {offsets = [0, 0], sizes = [2, 32], strides = [1, 1]} : vector<2x96xf32> to vector<2x32xf32>
    %285 = arith.mulf %284, %281 : vector<2x32xf32>
    %286 = arith.addf %283, %285 : vector<2x32xf32>
    %287 = vector.extract_strided_slice %279 {offsets = [0, 64], sizes = [2, 32], strides = [1, 1]} : vector<2x96xf32> to vector<2x32xf32>
    %288 = math.tanh %286 : vector<2x32xf32>
    %289 = arith.mulf %287, %288 : vector<2x32xf32>
    %290 = vector.extract_strided_slice %153 {offsets = [14, 0], sizes = [2, 128], strides = [1, 1]} : vector<16x128xf32> to vector<2x128xf32>
    %cst_118 = arith.constant dense<0.000000e+00> : vector<2x128xf32>
    %291 = tpu.matmul %289, %154, %cst_118 {dimension_numbers = #tpu.dot_dimension_numbers<[1], [0], [0], [1], [0, 0, 1, 1], [], []>} : vector<2x32xf32>, vector<32x128xf32>, vector<2x128xf32> -> vector<2x128xf32>
    %292 = arith.addf %290, %291 : vector<2x128xf32>
    %293 = vector.extract_strided_slice %292 {offsets = [0, 0], sizes = [2, 96], strides = [1, 1]} : vector<2x128xf32> to vector<2x96xf32>
    %294 = arith.negf %293 : vector<2x96xf32>
    %295 = math.exp %294 : vector<2x96xf32>
    %cst_119 = arith.constant 1.000000e+00 : f32
    %296 = vector.broadcast %cst_119 : f32 to vector<2x96xf32>
    %297 = arith.addf %296, %295 : vector<2x96xf32>
    %298 = arith.divf %296, %297 : vector<2x96xf32>
    %299 = vector.extract_strided_slice %292 {offsets = [0, 96], sizes = [2, 32], strides = [1, 1]} : vector<2x128xf32> to vector<2x32xf32>
    %300 = math.tanh %299 : vector<2x32xf32>
    %301 = vector.extract_strided_slice %298 {offsets = [0, 32], sizes = [2, 32], strides = [1, 1]} : vector<2x96xf32> to vector<2x32xf32>
    %302 = arith.mulf %301, %286 : vector<2x32xf32>
    %303 = vector.extract_strided_slice %298 {offsets = [0, 0], sizes = [2, 32], strides = [1, 1]} : vector<2x96xf32> to vector<2x32xf32>
    %304 = arith.mulf %303, %300 : vector<2x32xf32>
    %305 = arith.addf %302, %304 : vector<2x32xf32>
    %306 = vector.extract_strided_slice %298 {offsets = [0, 64], sizes = [2, 32], strides = [1, 1]} : vector<2x96xf32> to vector<2x32xf32>
    %307 = math.tanh %305 : vector<2x32xf32>
    %308 = arith.mulf %306, %307 : vector<2x32xf32>
    %309 = tpu.concatenate %175, %194, %213, %232, %251, %270, %289, %308 in 0 : vector<2x32xf32>, vector<2x32xf32>, vector<2x32xf32>, vector<2x32xf32>, vector<2x32xf32>, vector<2x32xf32>, vector<2x32xf32>, vector<2x32xf32> -> vector<16x32xf32>
    %c0_120 = arith.constant 0 : index
    %c0_121 = arith.constant 0 : index
    %310 = vector.load %arg13[%c0_120, %c0_121] : memref<32x128xf32, #tpu.memory_space<vmem>>, vector<32x128xf32>
    %cst_122 = arith.constant dense<0.000000e+00> : vector<16x128xf32>
    %311 = tpu.matmul %309, %310, %cst_122 {dimension_numbers = #tpu.dot_dimension_numbers<[1], [0], [0], [1], [0, 0, 1, 1], [], []>} : vector<16x32xf32>, vector<32x128xf32>, vector<16x128xf32> -> vector<16x128xf32>
    %c0_123 = arith.constant 0 : index
    %c0_124 = arith.constant 0 : index
    %312 = vector.load %arg15[%c0_123, %c0_124] : memref<1x128xf32, #tpu.memory_space<vmem>>, vector<1x128xf32>
    %313 = vector.broadcast %312 : vector<1x128xf32> to vector<16x128xf32>
    %314 = arith.addf %311, %313 : vector<16x128xf32>
    %c0_125 = arith.constant 0 : index
    %c0_126 = arith.constant 0 : index
    %315 = vector.load %arg14[%c0_125, %c0_126] : memref<32x128xf32, #tpu.memory_space<vmem>>, vector<32x128xf32>
    %cst_127 = arith.constant 0.000000e+00 : f32
    %316 = vector.broadcast %cst_127 : f32 to vector<2x32xf32>
    %cst_128 = arith.constant 0.000000e+00 : f32
    %317 = vector.broadcast %cst_128 : f32 to vector<2x32xf32>
    %318 = vector.extract_strided_slice %314 {offsets = [0, 0], sizes = [2, 128], strides = [1, 1]} : vector<16x128xf32> to vector<2x128xf32>
    %cst_129 = arith.constant dense<0.000000e+00> : vector<2x128xf32>
    %319 = tpu.matmul %316, %315, %cst_129 {dimension_numbers = #tpu.dot_dimension_numbers<[1], [0], [0], [1], [0, 0, 1, 1], [], []>} : vector<2x32xf32>, vector<32x128xf32>, vector<2x128xf32> -> vector<2x128xf32>
    %320 = arith.addf %318, %319 : vector<2x128xf32>
    %321 = vector.extract_strided_slice %320 {offsets = [0, 0], sizes = [2, 96], strides = [1, 1]} : vector<2x128xf32> to vector<2x96xf32>
    %322 = arith.negf %321 : vector<2x96xf32>
    %323 = math.exp %322 : vector<2x96xf32>
    %cst_130 = arith.constant 1.000000e+00 : f32
    %324 = vector.broadcast %cst_130 : f32 to vector<2x96xf32>
    %325 = arith.addf %324, %323 : vector<2x96xf32>
    %326 = arith.divf %324, %325 : vector<2x96xf32>
    %327 = vector.extract_strided_slice %320 {offsets = [0, 96], sizes = [2, 32], strides = [1, 1]} : vector<2x128xf32> to vector<2x32xf32>
    %328 = math.tanh %327 : vector<2x32xf32>
    %329 = vector.extract_strided_slice %326 {offsets = [0, 32], sizes = [2, 32], strides = [1, 1]} : vector<2x96xf32> to vector<2x32xf32>
    %330 = arith.mulf %329, %317 : vector<2x32xf32>
    %331 = vector.extract_strided_slice %326 {offsets = [0, 0], sizes = [2, 32], strides = [1, 1]} : vector<2x96xf32> to vector<2x32xf32>
    %332 = arith.mulf %331, %328 : vector<2x32xf32>
    %333 = arith.addf %330, %332 : vector<2x32xf32>
    %334 = vector.extract_strided_slice %326 {offsets = [0, 64], sizes = [2, 32], strides = [1, 1]} : vector<2x96xf32> to vector<2x32xf32>
    %335 = math.tanh %333 : vector<2x32xf32>
    %336 = arith.mulf %334, %335 : vector<2x32xf32>
    %337 = vector.extract_strided_slice %314 {offsets = [2, 0], sizes = [2, 128], strides = [1, 1]} : vector<16x128xf32> to vector<2x128xf32>
    %cst_131 = arith.constant dense<0.000000e+00> : vector<2x128xf32>
    %338 = tpu.matmul %336, %315, %cst_131 {dimension_numbers = #tpu.dot_dimension_numbers<[1], [0], [0], [1], [0, 0, 1, 1], [], []>} : vector<2x32xf32>, vector<32x128xf32>, vector<2x128xf32> -> vector<2x128xf32>
    %339 = arith.addf %337, %338 : vector<2x128xf32>
    %340 = vector.extract_strided_slice %339 {offsets = [0, 0], sizes = [2, 96], strides = [1, 1]} : vector<2x128xf32> to vector<2x96xf32>
    %341 = arith.negf %340 : vector<2x96xf32>
    %342 = math.exp %341 : vector<2x96xf32>
    %cst_132 = arith.constant 1.000000e+00 : f32
    %343 = vector.broadcast %cst_132 : f32 to vector<2x96xf32>
    %344 = arith.addf %343, %342 : vector<2x96xf32>
    %345 = arith.divf %343, %344 : vector<2x96xf32>
    %346 = vector.extract_strided_slice %339 {offsets = [0, 96], sizes = [2, 32], strides = [1, 1]} : vector<2x128xf32> to vector<2x32xf32>
    %347 = math.tanh %346 : vector<2x32xf32>
    %348 = vector.extract_strided_slice %345 {offsets = [0, 32], sizes = [2, 32], strides = [1, 1]} : vector<2x96xf32> to vector<2x32xf32>
    %349 = arith.mulf %348, %333 : vector<2x32xf32>
    %350 = vector.extract_strided_slice %345 {offsets = [0, 0], sizes = [2, 32], strides = [1, 1]} : vector<2x96xf32> to vector<2x32xf32>
    %351 = arith.mulf %350, %347 : vector<2x32xf32>
    %352 = arith.addf %349, %351 : vector<2x32xf32>
    %353 = vector.extract_strided_slice %345 {offsets = [0, 64], sizes = [2, 32], strides = [1, 1]} : vector<2x96xf32> to vector<2x32xf32>
    %354 = math.tanh %352 : vector<2x32xf32>
    %355 = arith.mulf %353, %354 : vector<2x32xf32>
    %356 = vector.extract_strided_slice %314 {offsets = [4, 0], sizes = [2, 128], strides = [1, 1]} : vector<16x128xf32> to vector<2x128xf32>
    %cst_133 = arith.constant dense<0.000000e+00> : vector<2x128xf32>
    %357 = tpu.matmul %355, %315, %cst_133 {dimension_numbers = #tpu.dot_dimension_numbers<[1], [0], [0], [1], [0, 0, 1, 1], [], []>} : vector<2x32xf32>, vector<32x128xf32>, vector<2x128xf32> -> vector<2x128xf32>
    %358 = arith.addf %356, %357 : vector<2x128xf32>
    %359 = vector.extract_strided_slice %358 {offsets = [0, 0], sizes = [2, 96], strides = [1, 1]} : vector<2x128xf32> to vector<2x96xf32>
    %360 = arith.negf %359 : vector<2x96xf32>
    %361 = math.exp %360 : vector<2x96xf32>
    %cst_134 = arith.constant 1.000000e+00 : f32
    %362 = vector.broadcast %cst_134 : f32 to vector<2x96xf32>
    %363 = arith.addf %362, %361 : vector<2x96xf32>
    %364 = arith.divf %362, %363 : vector<2x96xf32>
    %365 = vector.extract_strided_slice %358 {offsets = [0, 96], sizes = [2, 32], strides = [1, 1]} : vector<2x128xf32> to vector<2x32xf32>
    %366 = math.tanh %365 : vector<2x32xf32>
    %367 = vector.extract_strided_slice %364 {offsets = [0, 32], sizes = [2, 32], strides = [1, 1]} : vector<2x96xf32> to vector<2x32xf32>
    %368 = arith.mulf %367, %352 : vector<2x32xf32>
    %369 = vector.extract_strided_slice %364 {offsets = [0, 0], sizes = [2, 32], strides = [1, 1]} : vector<2x96xf32> to vector<2x32xf32>
    %370 = arith.mulf %369, %366 : vector<2x32xf32>
    %371 = arith.addf %368, %370 : vector<2x32xf32>
    %372 = vector.extract_strided_slice %364 {offsets = [0, 64], sizes = [2, 32], strides = [1, 1]} : vector<2x96xf32> to vector<2x32xf32>
    %373 = math.tanh %371 : vector<2x32xf32>
    %374 = arith.mulf %372, %373 : vector<2x32xf32>
    %375 = vector.extract_strided_slice %314 {offsets = [6, 0], sizes = [2, 128], strides = [1, 1]} : vector<16x128xf32> to vector<2x128xf32>
    %cst_135 = arith.constant dense<0.000000e+00> : vector<2x128xf32>
    %376 = tpu.matmul %374, %315, %cst_135 {dimension_numbers = #tpu.dot_dimension_numbers<[1], [0], [0], [1], [0, 0, 1, 1], [], []>} : vector<2x32xf32>, vector<32x128xf32>, vector<2x128xf32> -> vector<2x128xf32>
    %377 = arith.addf %375, %376 : vector<2x128xf32>
    %378 = vector.extract_strided_slice %377 {offsets = [0, 0], sizes = [2, 96], strides = [1, 1]} : vector<2x128xf32> to vector<2x96xf32>
    %379 = arith.negf %378 : vector<2x96xf32>
    %380 = math.exp %379 : vector<2x96xf32>
    %cst_136 = arith.constant 1.000000e+00 : f32
    %381 = vector.broadcast %cst_136 : f32 to vector<2x96xf32>
    %382 = arith.addf %381, %380 : vector<2x96xf32>
    %383 = arith.divf %381, %382 : vector<2x96xf32>
    %384 = vector.extract_strided_slice %377 {offsets = [0, 96], sizes = [2, 32], strides = [1, 1]} : vector<2x128xf32> to vector<2x32xf32>
    %385 = math.tanh %384 : vector<2x32xf32>
    %386 = vector.extract_strided_slice %383 {offsets = [0, 32], sizes = [2, 32], strides = [1, 1]} : vector<2x96xf32> to vector<2x32xf32>
    %387 = arith.mulf %386, %371 : vector<2x32xf32>
    %388 = vector.extract_strided_slice %383 {offsets = [0, 0], sizes = [2, 32], strides = [1, 1]} : vector<2x96xf32> to vector<2x32xf32>
    %389 = arith.mulf %388, %385 : vector<2x32xf32>
    %390 = arith.addf %387, %389 : vector<2x32xf32>
    %391 = vector.extract_strided_slice %383 {offsets = [0, 64], sizes = [2, 32], strides = [1, 1]} : vector<2x96xf32> to vector<2x32xf32>
    %392 = math.tanh %390 : vector<2x32xf32>
    %393 = arith.mulf %391, %392 : vector<2x32xf32>
    %394 = vector.extract_strided_slice %314 {offsets = [8, 0], sizes = [2, 128], strides = [1, 1]} : vector<16x128xf32> to vector<2x128xf32>
    %cst_137 = arith.constant dense<0.000000e+00> : vector<2x128xf32>
    %395 = tpu.matmul %393, %315, %cst_137 {dimension_numbers = #tpu.dot_dimension_numbers<[1], [0], [0], [1], [0, 0, 1, 1], [], []>} : vector<2x32xf32>, vector<32x128xf32>, vector<2x128xf32> -> vector<2x128xf32>
    %396 = arith.addf %394, %395 : vector<2x128xf32>
    %397 = vector.extract_strided_slice %396 {offsets = [0, 0], sizes = [2, 96], strides = [1, 1]} : vector<2x128xf32> to vector<2x96xf32>
    %398 = arith.negf %397 : vector<2x96xf32>
    %399 = math.exp %398 : vector<2x96xf32>
    %cst_138 = arith.constant 1.000000e+00 : f32
    %400 = vector.broadcast %cst_138 : f32 to vector<2x96xf32>
    %401 = arith.addf %400, %399 : vector<2x96xf32>
    %402 = arith.divf %400, %401 : vector<2x96xf32>
    %403 = vector.extract_strided_slice %396 {offsets = [0, 96], sizes = [2, 32], strides = [1, 1]} : vector<2x128xf32> to vector<2x32xf32>
    %404 = math.tanh %403 : vector<2x32xf32>
    %405 = vector.extract_strided_slice %402 {offsets = [0, 32], sizes = [2, 32], strides = [1, 1]} : vector<2x96xf32> to vector<2x32xf32>
    %406 = arith.mulf %405, %390 : vector<2x32xf32>
    %407 = vector.extract_strided_slice %402 {offsets = [0, 0], sizes = [2, 32], strides = [1, 1]} : vector<2x96xf32> to vector<2x32xf32>
    %408 = arith.mulf %407, %404 : vector<2x32xf32>
    %409 = arith.addf %406, %408 : vector<2x32xf32>
    %410 = vector.extract_strided_slice %402 {offsets = [0, 64], sizes = [2, 32], strides = [1, 1]} : vector<2x96xf32> to vector<2x32xf32>
    %411 = math.tanh %409 : vector<2x32xf32>
    %412 = arith.mulf %410, %411 : vector<2x32xf32>
    %413 = vector.extract_strided_slice %314 {offsets = [10, 0], sizes = [2, 128], strides = [1, 1]} : vector<16x128xf32> to vector<2x128xf32>
    %cst_139 = arith.constant dense<0.000000e+00> : vector<2x128xf32>
    %414 = tpu.matmul %412, %315, %cst_139 {dimension_numbers = #tpu.dot_dimension_numbers<[1], [0], [0], [1], [0, 0, 1, 1], [], []>} : vector<2x32xf32>, vector<32x128xf32>, vector<2x128xf32> -> vector<2x128xf32>
    %415 = arith.addf %413, %414 : vector<2x128xf32>
    %416 = vector.extract_strided_slice %415 {offsets = [0, 0], sizes = [2, 96], strides = [1, 1]} : vector<2x128xf32> to vector<2x96xf32>
    %417 = arith.negf %416 : vector<2x96xf32>
    %418 = math.exp %417 : vector<2x96xf32>
    %cst_140 = arith.constant 1.000000e+00 : f32
    %419 = vector.broadcast %cst_140 : f32 to vector<2x96xf32>
    %420 = arith.addf %419, %418 : vector<2x96xf32>
    %421 = arith.divf %419, %420 : vector<2x96xf32>
    %422 = vector.extract_strided_slice %415 {offsets = [0, 96], sizes = [2, 32], strides = [1, 1]} : vector<2x128xf32> to vector<2x32xf32>
    %423 = math.tanh %422 : vector<2x32xf32>
    %424 = vector.extract_strided_slice %421 {offsets = [0, 32], sizes = [2, 32], strides = [1, 1]} : vector<2x96xf32> to vector<2x32xf32>
    %425 = arith.mulf %424, %409 : vector<2x32xf32>
    %426 = vector.extract_strided_slice %421 {offsets = [0, 0], sizes = [2, 32], strides = [1, 1]} : vector<2x96xf32> to vector<2x32xf32>
    %427 = arith.mulf %426, %423 : vector<2x32xf32>
    %428 = arith.addf %425, %427 : vector<2x32xf32>
    %429 = vector.extract_strided_slice %421 {offsets = [0, 64], sizes = [2, 32], strides = [1, 1]} : vector<2x96xf32> to vector<2x32xf32>
    %430 = math.tanh %428 : vector<2x32xf32>
    %431 = arith.mulf %429, %430 : vector<2x32xf32>
    %432 = vector.extract_strided_slice %314 {offsets = [12, 0], sizes = [2, 128], strides = [1, 1]} : vector<16x128xf32> to vector<2x128xf32>
    %cst_141 = arith.constant dense<0.000000e+00> : vector<2x128xf32>
    %433 = tpu.matmul %431, %315, %cst_141 {dimension_numbers = #tpu.dot_dimension_numbers<[1], [0], [0], [1], [0, 0, 1, 1], [], []>} : vector<2x32xf32>, vector<32x128xf32>, vector<2x128xf32> -> vector<2x128xf32>
    %434 = arith.addf %432, %433 : vector<2x128xf32>
    %435 = vector.extract_strided_slice %434 {offsets = [0, 0], sizes = [2, 96], strides = [1, 1]} : vector<2x128xf32> to vector<2x96xf32>
    %436 = arith.negf %435 : vector<2x96xf32>
    %437 = math.exp %436 : vector<2x96xf32>
    %cst_142 = arith.constant 1.000000e+00 : f32
    %438 = vector.broadcast %cst_142 : f32 to vector<2x96xf32>
    %439 = arith.addf %438, %437 : vector<2x96xf32>
    %440 = arith.divf %438, %439 : vector<2x96xf32>
    %441 = vector.extract_strided_slice %434 {offsets = [0, 96], sizes = [2, 32], strides = [1, 1]} : vector<2x128xf32> to vector<2x32xf32>
    %442 = math.tanh %441 : vector<2x32xf32>
    %443 = vector.extract_strided_slice %440 {offsets = [0, 32], sizes = [2, 32], strides = [1, 1]} : vector<2x96xf32> to vector<2x32xf32>
    %444 = arith.mulf %443, %428 : vector<2x32xf32>
    %445 = vector.extract_strided_slice %440 {offsets = [0, 0], sizes = [2, 32], strides = [1, 1]} : vector<2x96xf32> to vector<2x32xf32>
    %446 = arith.mulf %445, %442 : vector<2x32xf32>
    %447 = arith.addf %444, %446 : vector<2x32xf32>
    %448 = vector.extract_strided_slice %440 {offsets = [0, 64], sizes = [2, 32], strides = [1, 1]} : vector<2x96xf32> to vector<2x32xf32>
    %449 = math.tanh %447 : vector<2x32xf32>
    %450 = arith.mulf %448, %449 : vector<2x32xf32>
    %451 = vector.extract_strided_slice %314 {offsets = [14, 0], sizes = [2, 128], strides = [1, 1]} : vector<16x128xf32> to vector<2x128xf32>
    %cst_143 = arith.constant dense<0.000000e+00> : vector<2x128xf32>
    %452 = tpu.matmul %450, %315, %cst_143 {dimension_numbers = #tpu.dot_dimension_numbers<[1], [0], [0], [1], [0, 0, 1, 1], [], []>} : vector<2x32xf32>, vector<32x128xf32>, vector<2x128xf32> -> vector<2x128xf32>
    %453 = arith.addf %451, %452 : vector<2x128xf32>
    %454 = vector.extract_strided_slice %453 {offsets = [0, 0], sizes = [2, 96], strides = [1, 1]} : vector<2x128xf32> to vector<2x96xf32>
    %455 = arith.negf %454 : vector<2x96xf32>
    %456 = math.exp %455 : vector<2x96xf32>
    %cst_144 = arith.constant 1.000000e+00 : f32
    %457 = vector.broadcast %cst_144 : f32 to vector<2x96xf32>
    %458 = arith.addf %457, %456 : vector<2x96xf32>
    %459 = arith.divf %457, %458 : vector<2x96xf32>
    %460 = vector.extract_strided_slice %453 {offsets = [0, 96], sizes = [2, 32], strides = [1, 1]} : vector<2x128xf32> to vector<2x32xf32>
    %461 = math.tanh %460 : vector<2x32xf32>
    %462 = vector.extract_strided_slice %459 {offsets = [0, 32], sizes = [2, 32], strides = [1, 1]} : vector<2x96xf32> to vector<2x32xf32>
    %463 = arith.mulf %462, %447 : vector<2x32xf32>
    %464 = vector.extract_strided_slice %459 {offsets = [0, 0], sizes = [2, 32], strides = [1, 1]} : vector<2x96xf32> to vector<2x32xf32>
    %465 = arith.mulf %464, %461 : vector<2x32xf32>
    %466 = arith.addf %463, %465 : vector<2x32xf32>
    %467 = vector.extract_strided_slice %459 {offsets = [0, 64], sizes = [2, 32], strides = [1, 1]} : vector<2x96xf32> to vector<2x32xf32>
    %468 = math.tanh %466 : vector<2x32xf32>
    %469 = arith.mulf %467, %468 : vector<2x32xf32>
    %c0_145 = arith.constant 0 : index
    %c0_146 = arith.constant 0 : index
    %470 = vector.load %arg16[%c0_145, %c0_146] : memref<32x5xf32, #tpu.memory_space<vmem>>, vector<32x5xf32>
    %cst_147 = arith.constant dense<0.000000e+00> : vector<2x5xf32>
    %471 = tpu.matmul %469, %470, %cst_147 {dimension_numbers = #tpu.dot_dimension_numbers<[1], [0], [0], [1], [0, 0, 1, 1], [], []>} : vector<2x32xf32>, vector<32x5xf32>, vector<2x5xf32> -> vector<2x5xf32>
    %c0_148 = arith.constant 0 : index
    %c0_149 = arith.constant 0 : index
    %472 = vector.load %arg17[%c0_148, %c0_149] : memref<1x5xf32, #tpu.memory_space<vmem>>, vector<1x5xf32>
    %473 = vector.broadcast %472 : vector<1x5xf32> to vector<2x5xf32>
    %474 = arith.addf %471, %473 : vector<2x5xf32>
    %c0_150 = arith.constant 0 : index
    %c0_151 = arith.constant 0 : index
    %475 = vector.load %arg21[%c0_150, %c0_151] : memref<2x5xf32, #tpu.memory_space<vmem>>, vector<2x5xf32>
    tpu.vector_store %arg21[%c0_150, %c0_151], %474 {strides = array<i32>} : memref<2x5xf32, #tpu.memory_space<vmem>>, vector<2x5xf32>,
    %c0_152 = arith.constant 0 : index
    %c0_153 = arith.constant 0 : index
    %476 = vector.load %arg20[%c0_152, %c0_153] : memref<32x4xf32, #tpu.memory_space<vmem>>, vector<32x4xf32>
    %477 = vector.extract_strided_slice %336 {offsets = [0, 0], sizes = [1, 32], strides = [1, 1]} : vector<2x32xf32> to vector<1x32xf32>
    %478 = vector.extract_strided_slice %355 {offsets = [0, 0], sizes = [1, 32], strides = [1, 1]} : vector<2x32xf32> to vector<1x32xf32>
    %479 = vector.extract_strided_slice %374 {offsets = [0, 0], sizes = [1, 32], strides = [1, 1]} : vector<2x32xf32> to vector<1x32xf32>
    %480 = vector.extract_strided_slice %393 {offsets = [0, 0], sizes = [1, 32], strides = [1, 1]} : vector<2x32xf32> to vector<1x32xf32>
    %481 = vector.extract_strided_slice %412 {offsets = [0, 0], sizes = [1, 32], strides = [1, 1]} : vector<2x32xf32> to vector<1x32xf32>
    %482 = vector.extract_strided_slice %431 {offsets = [0, 0], sizes = [1, 32], strides = [1, 1]} : vector<2x32xf32> to vector<1x32xf32>
    %483 = vector.extract_strided_slice %450 {offsets = [0, 0], sizes = [1, 32], strides = [1, 1]} : vector<2x32xf32> to vector<1x32xf32>
    %484 = vector.extract_strided_slice %469 {offsets = [0, 0], sizes = [1, 32], strides = [1, 1]} : vector<2x32xf32> to vector<1x32xf32>
    %485 = tpu.concatenate %477, %478, %479, %480, %481, %482, %483, %484 in 0 : vector<1x32xf32>, vector<1x32xf32>, vector<1x32xf32>, vector<1x32xf32>, vector<1x32xf32>, vector<1x32xf32>, vector<1x32xf32>, vector<1x32xf32> -> vector<8x32xf32>
    %cst_154 = arith.constant 0.000000e+00 : f32
    %486 = vector.broadcast %cst_154 : f32 to vector<10x32xf32>
    %c0_155 = arith.constant 0 : index
    %c0_156 = arith.constant 0 : index
    %487 = vector.load %arg23[%c0_155, %c0_156] : memref<16x32xf32, #tpu.memory_space<vmem>>, vector<10x32xf32>
    tpu.vector_store %arg23[%c0_155, %c0_156], %486 {strides = array<i32>} : memref<16x32xf32, #tpu.memory_space<vmem>>, vector<10x32xf32>,
    %c0_157 = arith.constant 0 : index
    %c0_158 = arith.constant 0 : index
    %488 = vector.load %arg23[%c0_157, %c0_158] : memref<16x32xf32, #tpu.memory_space<vmem>>, vector<8x32xf32>
    %c0_159 = arith.constant 0 : index
    %c0_160 = arith.constant 0 : index
    %489 = memref.load %arg18[%c0_159, %c0_160] : memref<4x3xf32, #tpu.memory_space<smem>>
    %490 = vector.broadcast %489 : f32 to vector<8x32xf32>
    %491 = arith.mulf %490, %485 : vector<8x32xf32>
    %492 = arith.addf %488, %491 : vector<8x32xf32>
    %c0_161 = arith.constant 0 : index
    %c0_162 = arith.constant 0 : index
    %493 = vector.load %arg23[%c0_161, %c0_162] : memref<16x32xf32, #tpu.memory_space<vmem>>, vector<8x32xf32>
    tpu.vector_store %arg23[%c0_161, %c0_162], %492 {strides = array<i32>} : memref<16x32xf32, #tpu.memory_space<vmem>>, vector<8x32xf32>,
    %c1_163 = arith.constant 1 : index
    %c0_164 = arith.constant 0 : index
    %494 = vector.load %arg23[%c1_163, %c0_164] : memref<16x32xf32, #tpu.memory_space<vmem>>, vector<8x32xf32>
    %c0_165 = arith.constant 0 : index
    %c1_166 = arith.constant 1 : index
    %495 = memref.load %arg18[%c0_165, %c1_166] : memref<4x3xf32, #tpu.memory_space<smem>>
    %496 = vector.broadcast %495 : f32 to vector<8x32xf32>
    %497 = arith.mulf %496, %485 : vector<8x32xf32>
    %498 = arith.addf %494, %497 : vector<8x32xf32>
    %c1_167 = arith.constant 1 : index
    %c0_168 = arith.constant 0 : index
    %499 = vector.load %arg23[%c1_167, %c0_168] : memref<16x32xf32, #tpu.memory_space<vmem>>, vector<8x32xf32>
    tpu.vector_store %arg23[%c1_167, %c0_168], %498 {strides = array<i32>} : memref<16x32xf32, #tpu.memory_space<vmem>>, vector<8x32xf32>,
    %c2 = arith.constant 2 : index
    %c0_169 = arith.constant 0 : index
    %500 = vector.load %arg23[%c2, %c0_169] : memref<16x32xf32, #tpu.memory_space<vmem>>, vector<8x32xf32>
    %c0_170 = arith.constant 0 : index
    %c2_171 = arith.constant 2 : index
    %501 = memref.load %arg18[%c0_170, %c2_171] : memref<4x3xf32, #tpu.memory_space<smem>>
    %502 = vector.broadcast %501 : f32 to vector<8x32xf32>
    %503 = arith.mulf %502, %485 : vector<8x32xf32>
    %504 = arith.addf %500, %503 : vector<8x32xf32>
    %c2_172 = arith.constant 2 : index
    %c0_173 = arith.constant 0 : index
    %505 = vector.load %arg23[%c2_172, %c0_173] : memref<16x32xf32, #tpu.memory_space<vmem>>, vector<8x32xf32>
    tpu.vector_store %arg23[%c2_172, %c0_173], %504 {strides = array<i32>} : memref<16x32xf32, #tpu.memory_space<vmem>>, vector<8x32xf32>,
    %c0_174 = arith.constant 0 : index
    %c0_175 = arith.constant 0 : index
    %506 = vector.load %arg23[%c0_174, %c0_175] : memref<16x32xf32, #tpu.memory_space<vmem>>, vector<10x32xf32>
    %c0_176 = arith.constant 0 : index
    %507 = memref.load %arg19[%c0_176] : memref<4xf32, #tpu.memory_space<smem>>
    %508 = vector.broadcast %507 : f32 to vector<10x32xf32>
    %509 = arith.addf %506, %508 : vector<10x32xf32>
    %cst_177 = arith.constant 0.000000e+00 : f32
    %510 = vector.broadcast %cst_177 : f32 to vector<12x32xf32>
    %c0_178 = arith.constant 0 : index
    %c0_179 = arith.constant 0 : index
    %511 = vector.load %arg23[%c0_178, %c0_179] : memref<16x32xf32, #tpu.memory_space<vmem>>, vector<12x32xf32>
    tpu.vector_store %arg23[%c0_178, %c0_179], %510 {strides = array<i32>} : memref<16x32xf32, #tpu.memory_space<vmem>>, vector<12x32xf32>,
    %c0_180 = arith.constant 0 : index
    %c0_181 = arith.constant 0 : index
    %512 = vector.load %arg23[%c0_180, %c0_181] : memref<16x32xf32, #tpu.memory_space<vmem>>, vector<10x32xf32>
    %c1_182 = arith.constant 1 : index
    %c0_183 = arith.constant 0 : index
    %513 = memref.load %arg18[%c1_182, %c0_183] : memref<4x3xf32, #tpu.memory_space<smem>>
    %514 = vector.broadcast %513 : f32 to vector<10x32xf32>
    %515 = arith.mulf %514, %509 : vector<10x32xf32>
    %516 = arith.addf %512, %515 : vector<10x32xf32>
    %c0_184 = arith.constant 0 : index
    %c0_185 = arith.constant 0 : index
    %517 = vector.load %arg23[%c0_184, %c0_185] : memref<16x32xf32, #tpu.memory_space<vmem>>, vector<10x32xf32>
    tpu.vector_store %arg23[%c0_184, %c0_185], %516 {strides = array<i32>} : memref<16x32xf32, #tpu.memory_space<vmem>>, vector<10x32xf32>,
    %c1_186 = arith.constant 1 : index
    %c0_187 = arith.constant 0 : index
    %518 = vector.load %arg23[%c1_186, %c0_187] : memref<16x32xf32, #tpu.memory_space<vmem>>, vector<10x32xf32>
    %c1_188 = arith.constant 1 : index
    %c1_189 = arith.constant 1 : index
    %519 = memref.load %arg18[%c1_188, %c1_189] : memref<4x3xf32, #tpu.memory_space<smem>>
    %520 = vector.broadcast %519 : f32 to vector<10x32xf32>
    %521 = arith.mulf %520, %509 : vector<10x32xf32>
    %522 = arith.addf %518, %521 : vector<10x32xf32>
    %c1_190 = arith.constant 1 : index
    %c0_191 = arith.constant 0 : index
    %523 = vector.load %arg23[%c1_190, %c0_191] : memref<16x32xf32, #tpu.memory_space<vmem>>, vector<10x32xf32>
    tpu.vector_store %arg23[%c1_190, %c0_191], %522 {strides = array<i32>} : memref<16x32xf32, #tpu.memory_space<vmem>>, vector<10x32xf32>,
    %c2_192 = arith.constant 2 : index
    %c0_193 = arith.constant 0 : index
    %524 = vector.load %arg23[%c2_192, %c0_193] : memref<16x32xf32, #tpu.memory_space<vmem>>, vector<10x32xf32>
    %c1_194 = arith.constant 1 : index
    %c2_195 = arith.constant 2 : index
    %525 = memref.load %arg18[%c1_194, %c2_195] : memref<4x3xf32, #tpu.memory_space<smem>>
    %526 = vector.broadcast %525 : f32 to vector<10x32xf32>
    %527 = arith.mulf %526, %509 : vector<10x32xf32>
    %528 = arith.addf %524, %527 : vector<10x32xf32>
    %c2_196 = arith.constant 2 : index
    %c0_197 = arith.constant 0 : index
    %529 = vector.load %arg23[%c2_196, %c0_197] : memref<16x32xf32, #tpu.memory_space<vmem>>, vector<10x32xf32>
    tpu.vector_store %arg23[%c2_196, %c0_197], %528 {strides = array<i32>} : memref<16x32xf32, #tpu.memory_space<vmem>>, vector<10x32xf32>,
    %c0_198 = arith.constant 0 : index
    %c0_199 = arith.constant 0 : index
    %530 = vector.load %arg23[%c0_198, %c0_199] : memref<16x32xf32, #tpu.memory_space<vmem>>, vector<12x32xf32>
    %c1_200 = arith.constant 1 : index
    %531 = memref.load %arg19[%c1_200] : memref<4xf32, #tpu.memory_space<smem>>
    %532 = vector.broadcast %531 : f32 to vector<12x32xf32>
    %533 = arith.addf %530, %532 : vector<12x32xf32>
    %cst_201 = arith.constant 0.000000e+00 : f32
    %534 = vector.broadcast %cst_201 : f32 to vector<14x32xf32>
    %c0_202 = arith.constant 0 : index
    %c0_203 = arith.constant 0 : index
    %535 = vector.load %arg23[%c0_202, %c0_203] : memref<16x32xf32, #tpu.memory_space<vmem>>, vector<14x32xf32>
    tpu.vector_store %arg23[%c0_202, %c0_203], %534 {strides = array<i32>} : memref<16x32xf32, #tpu.memory_space<vmem>>, vector<14x32xf32>,
    %c0_204 = arith.constant 0 : index
    %c0_205 = arith.constant 0 : index
    %536 = vector.load %arg23[%c0_204, %c0_205] : memref<16x32xf32, #tpu.memory_space<vmem>>, vector<12x32xf32>
    %c2_206 = arith.constant 2 : index
    %c0_207 = arith.constant 0 : index
    %537 = memref.load %arg18[%c2_206, %c0_207] : memref<4x3xf32, #tpu.memory_space<smem>>
    %538 = vector.broadcast %537 : f32 to vector<12x32xf32>
    %539 = arith.mulf %538, %533 : vector<12x32xf32>
    %540 = arith.addf %536, %539 : vector<12x32xf32>
    %c0_208 = arith.constant 0 : index
    %c0_209 = arith.constant 0 : index
    %541 = vector.load %arg23[%c0_208, %c0_209] : memref<16x32xf32, #tpu.memory_space<vmem>>, vector<12x32xf32>
    tpu.vector_store %arg23[%c0_208, %c0_209], %540 {strides = array<i32>} : memref<16x32xf32, #tpu.memory_space<vmem>>, vector<12x32xf32>,
    %c1_210 = arith.constant 1 : index
    %c0_211 = arith.constant 0 : index
    %542 = vector.load %arg23[%c1_210, %c0_211] : memref<16x32xf32, #tpu.memory_space<vmem>>, vector<12x32xf32>
    %c2_212 = arith.constant 2 : index
    %c1_213 = arith.constant 1 : index
    %543 = memref.load %arg18[%c2_212, %c1_213] : memref<4x3xf32, #tpu.memory_space<smem>>
    %544 = vector.broadcast %543 : f32 to vector<12x32xf32>
    %545 = arith.mulf %544, %533 : vector<12x32xf32>
    %546 = arith.addf %542, %545 : vector<12x32xf32>
    %c1_214 = arith.constant 1 : index
    %c0_215 = arith.constant 0 : index
    %547 = vector.load %arg23[%c1_214, %c0_215] : memref<16x32xf32, #tpu.memory_space<vmem>>, vector<12x32xf32>
    tpu.vector_store %arg23[%c1_214, %c0_215], %546 {strides = array<i32>} : memref<16x32xf32, #tpu.memory_space<vmem>>, vector<12x32xf32>,
    %c2_216 = arith.constant 2 : index
    %c0_217 = arith.constant 0 : index
    %548 = vector.load %arg23[%c2_216, %c0_217] : memref<16x32xf32, #tpu.memory_space<vmem>>, vector<12x32xf32>
    %c2_218 = arith.constant 2 : index
    %c2_219 = arith.constant 2 : index
    %549 = memref.load %arg18[%c2_218, %c2_219] : memref<4x3xf32, #tpu.memory_space<smem>>
    %550 = vector.broadcast %549 : f32 to vector<12x32xf32>
    %551 = arith.mulf %550, %533 : vector<12x32xf32>
    %552 = arith.addf %548, %551 : vector<12x32xf32>
    %c2_220 = arith.constant 2 : index
    %c0_221 = arith.constant 0 : index
    %553 = vector.load %arg23[%c2_220, %c0_221] : memref<16x32xf32, #tpu.memory_space<vmem>>, vector<12x32xf32>
    tpu.vector_store %arg23[%c2_220, %c0_221], %552 {strides = array<i32>} : memref<16x32xf32, #tpu.memory_space<vmem>>, vector<12x32xf32>,
    %c0_222 = arith.constant 0 : index
    %c0_223 = arith.constant 0 : index
    %554 = vector.load %arg23[%c0_222, %c0_223] : memref<16x32xf32, #tpu.memory_space<vmem>>, vector<14x32xf32>
    %c2_224 = arith.constant 2 : index
    %555 = memref.load %arg19[%c2_224] : memref<4xf32, #tpu.memory_space<smem>>
    %556 = vector.broadcast %555 : f32 to vector<14x32xf32>
    %557 = arith.addf %554, %556 : vector<14x32xf32>
    %cst_225 = arith.constant 0.000000e+00 : f32
    %558 = vector.broadcast %cst_225 : f32 to vector<16x32xf32>
    %c0_226 = arith.constant 0 : index
    %c0_227 = arith.constant 0 : index
    %559 = vector.load %arg23[%c0_226, %c0_227] : memref<16x32xf32, #tpu.memory_space<vmem>>, vector<16x32xf32>
    tpu.vector_store %arg23[%c0_226, %c0_227], %558 {strides = array<i32>} : memref<16x32xf32, #tpu.memory_space<vmem>>, vector<16x32xf32>,
    %c0_228 = arith.constant 0 : index
    %c0_229 = arith.constant 0 : index
    %560 = vector.load %arg23[%c0_228, %c0_229] : memref<16x32xf32, #tpu.memory_space<vmem>>, vector<14x32xf32>
    %c3 = arith.constant 3 : index
    %c0_230 = arith.constant 0 : index
    %561 = memref.load %arg18[%c3, %c0_230] : memref<4x3xf32, #tpu.memory_space<smem>>
    %562 = vector.broadcast %561 : f32 to vector<14x32xf32>
    %563 = arith.mulf %562, %557 : vector<14x32xf32>
    %564 = arith.addf %560, %563 : vector<14x32xf32>
    %c0_231 = arith.constant 0 : index
    %c0_232 = arith.constant 0 : index
    %565 = vector.load %arg23[%c0_231, %c0_232] : memref<16x32xf32, #tpu.memory_space<vmem>>, vector<14x32xf32>
    tpu.vector_store %arg23[%c0_231, %c0_232], %564 {strides = array<i32>} : memref<16x32xf32, #tpu.memory_space<vmem>>, vector<14x32xf32>,
    %c1_233 = arith.constant 1 : index
    %c0_234 = arith.constant 0 : index
    %566 = vector.load %arg23[%c1_233, %c0_234] : memref<16x32xf32, #tpu.memory_space<vmem>>, vector<14x32xf32>
    %c3_235 = arith.constant 3 : index
    %c1_236 = arith.constant 1 : index
    %567 = memref.load %arg18[%c3_235, %c1_236] : memref<4x3xf32, #tpu.memory_space<smem>>
    %568 = vector.broadcast %567 : f32 to vector<14x32xf32>
    %569 = arith.mulf %568, %557 : vector<14x32xf32>
    %570 = arith.addf %566, %569 : vector<14x32xf32>
    %c1_237 = arith.constant 1 : index
    %c0_238 = arith.constant 0 : index
    %571 = vector.load %arg23[%c1_237, %c0_238] : memref<16x32xf32, #tpu.memory_space<vmem>>, vector<14x32xf32>
    tpu.vector_store %arg23[%c1_237, %c0_238], %570 {strides = array<i32>} : memref<16x32xf32, #tpu.memory_space<vmem>>, vector<14x32xf32>,
    %c2_239 = arith.constant 2 : index
    %c0_240 = arith.constant 0 : index
    %572 = vector.load %arg23[%c2_239, %c0_240] : memref<16x32xf32, #tpu.memory_space<vmem>>, vector<14x32xf32>
    %c3_241 = arith.constant 3 : index
    %c2_242 = arith.constant 2 : index
    %573 = memref.load %arg18[%c3_241, %c2_242] : memref<4x3xf32, #tpu.memory_space<smem>>
    %574 = vector.broadcast %573 : f32 to vector<14x32xf32>
    %575 = arith.mulf %574, %557 : vector<14x32xf32>
    %576 = arith.addf %572, %575 : vector<14x32xf32>
    %c2_243 = arith.constant 2 : index
    %c0_244 = arith.constant 0 : index
    %577 = vector.load %arg23[%c2_243, %c0_244] : memref<16x32xf32, #tpu.memory_space<vmem>>, vector<14x32xf32>
    tpu.vector_store %arg23[%c2_243, %c0_244], %576 {strides = array<i32>} : memref<16x32xf32, #tpu.memory_space<vmem>>, vector<14x32xf32>,
    %c0_245 = arith.constant 0 : index
    %c0_246 = arith.constant 0 : index
    %578 = vector.load %arg23[%c0_245, %c0_246] : memref<16x32xf32, #tpu.memory_space<vmem>>, vector<16x32xf32>
    %c3_247 = arith.constant 3 : index
    %579 = memref.load %arg19[%c3_247] : memref<4xf32, #tpu.memory_space<smem>>
    %580 = vector.broadcast %579 : f32 to vector<16x32xf32>
    %581 = arith.addf %578, %580 : vector<16x32xf32>
    %cst_248 = arith.constant dense<0.000000e+00> : vector<16x4xf32>
    %582 = tpu.matmul %581, %476, %cst_248 {dimension_numbers = #tpu.dot_dimension_numbers<[1], [0], [0], [1], [0, 0, 1, 1], [], []>} : vector<16x32xf32>, vector<32x4xf32>, vector<16x4xf32> -> vector<16x4xf32>
    %c0_249 = arith.constant 0 : index
    %c0_250 = arith.constant 0 : index
    %c0_251 = arith.constant 0 : index
    %583 = vector.load %arg22[%c0_249, %c0_250, %c0_251] : memref<2x16x4xf32, #tpu.memory_space<vmem>>, vector<1x16x4xf32>
    %584 = vector.shape_cast %583 : vector<1x16x4xf32> to vector<16x4xf32>
    %585 = vector.shape_cast %582 : vector<16x4xf32> to vector<1x16x4xf32>
    tpu.vector_store %arg22[%c0_249, %c0_250, %c0_251], %585 {strides = array<i32>} : memref<2x16x4xf32, #tpu.memory_space<vmem>>, vector<1x16x4xf32>,
    %586 = vector.extract_strided_slice %336 {offsets = [1, 0], sizes = [1, 32], strides = [1, 1]} : vector<2x32xf32> to vector<1x32xf32>
    %587 = vector.extract_strided_slice %355 {offsets = [1, 0], sizes = [1, 32], strides = [1, 1]} : vector<2x32xf32> to vector<1x32xf32>
    %588 = vector.extract_strided_slice %374 {offsets = [1, 0], sizes = [1, 32], strides = [1, 1]} : vector<2x32xf32> to vector<1x32xf32>
    %589 = vector.extract_strided_slice %393 {offsets = [1, 0], sizes = [1, 32], strides = [1, 1]} : vector<2x32xf32> to vector<1x32xf32>
    %590 = vector.extract_strided_slice %412 {offsets = [1, 0], sizes = [1, 32], strides = [1, 1]} : vector<2x32xf32> to vector<1x32xf32>
    %591 = vector.extract_strided_slice %431 {offsets = [1, 0], sizes = [1, 32], strides = [1, 1]} : vector<2x32xf32> to vector<1x32xf32>
    %592 = vector.extract_strided_slice %450 {offsets = [1, 0], sizes = [1, 32], strides = [1, 1]} : vector<2x32xf32> to vector<1x32xf32>
    %593 = vector.extract_strided_slice %469 {offsets = [1, 0], sizes = [1, 32], strides = [1, 1]} : vector<2x32xf32> to vector<1x32xf32>
    %594 = tpu.concatenate %586, %587, %588, %589, %590, %591, %592, %593 in 0 : vector<1x32xf32>, vector<1x32xf32>, vector<1x32xf32>, vector<1x32xf32>, vector<1x32xf32>, vector<1x32xf32>, vector<1x32xf32>, vector<1x32xf32> -> vector<8x32xf32>
    %cst_252 = arith.constant 0.000000e+00 : f32
    %595 = vector.broadcast %cst_252 : f32 to vector<10x32xf32>
    %c0_253 = arith.constant 0 : index
    %c0_254 = arith.constant 0 : index
    %596 = vector.load %arg23[%c0_253, %c0_254] : memref<16x32xf32, #tpu.memory_space<vmem>>, vector<10x32xf32>
    tpu.vector_store %arg23[%c0_253, %c0_254], %595 {strides = array<i32>} : memref<16x32xf32, #tpu.memory_space<vmem>>, vector<10x32xf32>,
    %c0_255 = arith.constant 0 : index
    %c0_256 = arith.constant 0 : index
    %597 = vector.load %arg23[%c0_255, %c0_256] : memref<16x32xf32, #tpu.memory_space<vmem>>, vector<8x32xf32>
    %c0_257 = arith.constant 0 : index
    %c0_258 = arith.constant 0 : index
    %598 = memref.load %arg18[%c0_257, %c0_258] : memref<4x3xf32, #tpu.memory_space<smem>>
    %599 = vector.broadcast %598 : f32 to vector<8x32xf32>
    %600 = arith.mulf %599, %594 : vector<8x32xf32>
    %601 = arith.addf %597, %600 : vector<8x32xf32>
    %c0_259 = arith.constant 0 : index
    %c0_260 = arith.constant 0 : index
    %602 = vector.load %arg23[%c0_259, %c0_260] : memref<16x32xf32, #tpu.memory_space<vmem>>, vector<8x32xf32>
    tpu.vector_store %arg23[%c0_259, %c0_260], %601 {strides = array<i32>} : memref<16x32xf32, #tpu.memory_space<vmem>>, vector<8x32xf32>,
    %c1_261 = arith.constant 1 : index
    %c0_262 = arith.constant 0 : index
    %603 = vector.load %arg23[%c1_261, %c0_262] : memref<16x32xf32, #tpu.memory_space<vmem>>, vector<8x32xf32>
    %c0_263 = arith.constant 0 : index
    %c1_264 = arith.constant 1 : index
    %604 = memref.load %arg18[%c0_263, %c1_264] : memref<4x3xf32, #tpu.memory_space<smem>>
    %605 = vector.broadcast %604 : f32 to vector<8x32xf32>
    %606 = arith.mulf %605, %594 : vector<8x32xf32>
    %607 = arith.addf %603, %606 : vector<8x32xf32>
    %c1_265 = arith.constant 1 : index
    %c0_266 = arith.constant 0 : index
    %608 = vector.load %arg23[%c1_265, %c0_266] : memref<16x32xf32, #tpu.memory_space<vmem>>, vector<8x32xf32>
    tpu.vector_store %arg23[%c1_265, %c0_266], %607 {strides = array<i32>} : memref<16x32xf32, #tpu.memory_space<vmem>>, vector<8x32xf32>,
    %c2_267 = arith.constant 2 : index
    %c0_268 = arith.constant 0 : index
    %609 = vector.load %arg23[%c2_267, %c0_268] : memref<16x32xf32, #tpu.memory_space<vmem>>, vector<8x32xf32>
    %c0_269 = arith.constant 0 : index
    %c2_270 = arith.constant 2 : index
    %610 = memref.load %arg18[%c0_269, %c2_270] : memref<4x3xf32, #tpu.memory_space<smem>>
    %611 = vector.broadcast %610 : f32 to vector<8x32xf32>
    %612 = arith.mulf %611, %594 : vector<8x32xf32>
    %613 = arith.addf %609, %612 : vector<8x32xf32>
    %c2_271 = arith.constant 2 : index
    %c0_272 = arith.constant 0 : index
    %614 = vector.load %arg23[%c2_271, %c0_272] : memref<16x32xf32, #tpu.memory_space<vmem>>, vector<8x32xf32>
    tpu.vector_store %arg23[%c2_271, %c0_272], %613 {strides = array<i32>} : memref<16x32xf32, #tpu.memory_space<vmem>>, vector<8x32xf32>,
    %c0_273 = arith.constant 0 : index
    %c0_274 = arith.constant 0 : index
    %615 = vector.load %arg23[%c0_273, %c0_274] : memref<16x32xf32, #tpu.memory_space<vmem>>, vector<10x32xf32>
    %c0_275 = arith.constant 0 : index
    %616 = memref.load %arg19[%c0_275] : memref<4xf32, #tpu.memory_space<smem>>
    %617 = vector.broadcast %616 : f32 to vector<10x32xf32>
    %618 = arith.addf %615, %617 : vector<10x32xf32>
    %cst_276 = arith.constant 0.000000e+00 : f32
    %619 = vector.broadcast %cst_276 : f32 to vector<12x32xf32>
    %c0_277 = arith.constant 0 : index
    %c0_278 = arith.constant 0 : index
    %620 = vector.load %arg23[%c0_277, %c0_278] : memref<16x32xf32, #tpu.memory_space<vmem>>, vector<12x32xf32>
    tpu.vector_store %arg23[%c0_277, %c0_278], %619 {strides = array<i32>} : memref<16x32xf32, #tpu.memory_space<vmem>>, vector<12x32xf32>,
    %c0_279 = arith.constant 0 : index
    %c0_280 = arith.constant 0 : index
    %621 = vector.load %arg23[%c0_279, %c0_280] : memref<16x32xf32, #tpu.memory_space<vmem>>, vector<10x32xf32>
    %c1_281 = arith.constant 1 : index
    %c0_282 = arith.constant 0 : index
    %622 = memref.load %arg18[%c1_281, %c0_282] : memref<4x3xf32, #tpu.memory_space<smem>>
    %623 = vector.broadcast %622 : f32 to vector<10x32xf32>
    %624 = arith.mulf %623, %618 : vector<10x32xf32>
    %625 = arith.addf %621, %624 : vector<10x32xf32>
    %c0_283 = arith.constant 0 : index
    %c0_284 = arith.constant 0 : index
    %626 = vector.load %arg23[%c0_283, %c0_284] : memref<16x32xf32, #tpu.memory_space<vmem>>, vector<10x32xf32>
    tpu.vector_store %arg23[%c0_283, %c0_284], %625 {strides = array<i32>} : memref<16x32xf32, #tpu.memory_space<vmem>>, vector<10x32xf32>,
    %c1_285 = arith.constant 1 : index
    %c0_286 = arith.constant 0 : index
    %627 = vector.load %arg23[%c1_285, %c0_286] : memref<16x32xf32, #tpu.memory_space<vmem>>, vector<10x32xf32>
    %c1_287 = arith.constant 1 : index
    %c1_288 = arith.constant 1 : index
    %628 = memref.load %arg18[%c1_287, %c1_288] : memref<4x3xf32, #tpu.memory_space<smem>>
    %629 = vector.broadcast %628 : f32 to vector<10x32xf32>
    %630 = arith.mulf %629, %618 : vector<10x32xf32>
    %631 = arith.addf %627, %630 : vector<10x32xf32>
    %c1_289 = arith.constant 1 : index
    %c0_290 = arith.constant 0 : index
    %632 = vector.load %arg23[%c1_289, %c0_290] : memref<16x32xf32, #tpu.memory_space<vmem>>, vector<10x32xf32>
    tpu.vector_store %arg23[%c1_289, %c0_290], %631 {strides = array<i32>} : memref<16x32xf32, #tpu.memory_space<vmem>>, vector<10x32xf32>,
    %c2_291 = arith.constant 2 : index
    %c0_292 = arith.constant 0 : index
    %633 = vector.load %arg23[%c2_291, %c0_292] : memref<16x32xf32, #tpu.memory_space<vmem>>, vector<10x32xf32>
    %c1_293 = arith.constant 1 : index
    %c2_294 = arith.constant 2 : index
    %634 = memref.load %arg18[%c1_293, %c2_294] : memref<4x3xf32, #tpu.memory_space<smem>>
    %635 = vector.broadcast %634 : f32 to vector<10x32xf32>
    %636 = arith.mulf %635, %618 : vector<10x32xf32>
    %637 = arith.addf %633, %636 : vector<10x32xf32>
    %c2_295 = arith.constant 2 : index
    %c0_296 = arith.constant 0 : index
    %638 = vector.load %arg23[%c2_295, %c0_296] : memref<16x32xf32, #tpu.memory_space<vmem>>, vector<10x32xf32>
    tpu.vector_store %arg23[%c2_295, %c0_296], %637 {strides = array<i32>} : memref<16x32xf32, #tpu.memory_space<vmem>>, vector<10x32xf32>,
    %c0_297 = arith.constant 0 : index
    %c0_298 = arith.constant 0 : index
    %639 = vector.load %arg23[%c0_297, %c0_298] : memref<16x32xf32, #tpu.memory_space<vmem>>, vector<12x32xf32>
    %c1_299 = arith.constant 1 : index
    %640 = memref.load %arg19[%c1_299] : memref<4xf32, #tpu.memory_space<smem>>
    %641 = vector.broadcast %640 : f32 to vector<12x32xf32>
    %642 = arith.addf %639, %641 : vector<12x32xf32>
    %cst_300 = arith.constant 0.000000e+00 : f32
    %643 = vector.broadcast %cst_300 : f32 to vector<14x32xf32>
    %c0_301 = arith.constant 0 : index
    %c0_302 = arith.constant 0 : index
    %644 = vector.load %arg23[%c0_301, %c0_302] : memref<16x32xf32, #tpu.memory_space<vmem>>, vector<14x32xf32>
    tpu.vector_store %arg23[%c0_301, %c0_302], %643 {strides = array<i32>} : memref<16x32xf32, #tpu.memory_space<vmem>>, vector<14x32xf32>,
    %c0_303 = arith.constant 0 : index
    %c0_304 = arith.constant 0 : index
    %645 = vector.load %arg23[%c0_303, %c0_304] : memref<16x32xf32, #tpu.memory_space<vmem>>, vector<12x32xf32>
    %c2_305 = arith.constant 2 : index
    %c0_306 = arith.constant 0 : index
    %646 = memref.load %arg18[%c2_305, %c0_306] : memref<4x3xf32, #tpu.memory_space<smem>>
    %647 = vector.broadcast %646 : f32 to vector<12x32xf32>
    %648 = arith.mulf %647, %642 : vector<12x32xf32>
    %649 = arith.addf %645, %648 : vector<12x32xf32>
    %c0_307 = arith.constant 0 : index
    %c0_308 = arith.constant 0 : index
    %650 = vector.load %arg23[%c0_307, %c0_308] : memref<16x32xf32, #tpu.memory_space<vmem>>, vector<12x32xf32>
    tpu.vector_store %arg23[%c0_307, %c0_308], %649 {strides = array<i32>} : memref<16x32xf32, #tpu.memory_space<vmem>>, vector<12x32xf32>,
    %c1_309 = arith.constant 1 : index
    %c0_310 = arith.constant 0 : index
    %651 = vector.load %arg23[%c1_309, %c0_310] : memref<16x32xf32, #tpu.memory_space<vmem>>, vector<12x32xf32>
    %c2_311 = arith.constant 2 : index
    %c1_312 = arith.constant 1 : index
    %652 = memref.load %arg18[%c2_311, %c1_312] : memref<4x3xf32, #tpu.memory_space<smem>>
    %653 = vector.broadcast %652 : f32 to vector<12x32xf32>
    %654 = arith.mulf %653, %642 : vector<12x32xf32>
    %655 = arith.addf %651, %654 : vector<12x32xf32>
    %c1_313 = arith.constant 1 : index
    %c0_314 = arith.constant 0 : index
    %656 = vector.load %arg23[%c1_313, %c0_314] : memref<16x32xf32, #tpu.memory_space<vmem>>, vector<12x32xf32>
    tpu.vector_store %arg23[%c1_313, %c0_314], %655 {strides = array<i32>} : memref<16x32xf32, #tpu.memory_space<vmem>>, vector<12x32xf32>,
    %c2_315 = arith.constant 2 : index
    %c0_316 = arith.constant 0 : index
    %657 = vector.load %arg23[%c2_315, %c0_316] : memref<16x32xf32, #tpu.memory_space<vmem>>, vector<12x32xf32>
    %c2_317 = arith.constant 2 : index
    %c2_318 = arith.constant 2 : index
    %658 = memref.load %arg18[%c2_317, %c2_318] : memref<4x3xf32, #tpu.memory_space<smem>>
    %659 = vector.broadcast %658 : f32 to vector<12x32xf32>
    %660 = arith.mulf %659, %642 : vector<12x32xf32>
    %661 = arith.addf %657, %660 : vector<12x32xf32>
    %c2_319 = arith.constant 2 : index
    %c0_320 = arith.constant 0 : index
    %662 = vector.load %arg23[%c2_319, %c0_320] : memref<16x32xf32, #tpu.memory_space<vmem>>, vector<12x32xf32>
    tpu.vector_store %arg23[%c2_319, %c0_320], %661 {strides = array<i32>} : memref<16x32xf32, #tpu.memory_space<vmem>>, vector<12x32xf32>,
    %c0_321 = arith.constant 0 : index
    %c0_322 = arith.constant 0 : index
    %663 = vector.load %arg23[%c0_321, %c0_322] : memref<16x32xf32, #tpu.memory_space<vmem>>, vector<14x32xf32>
    %c2_323 = arith.constant 2 : index
    %664 = memref.load %arg19[%c2_323] : memref<4xf32, #tpu.memory_space<smem>>
    %665 = vector.broadcast %664 : f32 to vector<14x32xf32>
    %666 = arith.addf %663, %665 : vector<14x32xf32>
    %cst_324 = arith.constant 0.000000e+00 : f32
    %667 = vector.broadcast %cst_324 : f32 to vector<16x32xf32>
    %c0_325 = arith.constant 0 : index
    %c0_326 = arith.constant 0 : index
    %668 = vector.load %arg23[%c0_325, %c0_326] : memref<16x32xf32, #tpu.memory_space<vmem>>, vector<16x32xf32>
    tpu.vector_store %arg23[%c0_325, %c0_326], %667 {strides = array<i32>} : memref<16x32xf32, #tpu.memory_space<vmem>>, vector<16x32xf32>,
    %c0_327 = arith.constant 0 : index
    %c0_328 = arith.constant 0 : index
    %669 = vector.load %arg23[%c0_327, %c0_328] : memref<16x32xf32, #tpu.memory_space<vmem>>, vector<14x32xf32>
    %c3_329 = arith.constant 3 : index
    %c0_330 = arith.constant 0 : index
    %670 = memref.load %arg18[%c3_329, %c0_330] : memref<4x3xf32, #tpu.memory_space<smem>>
    %671 = vector.broadcast %670 : f32 to vector<14x32xf32>
    %672 = arith.mulf %671, %666 : vector<14x32xf32>
    %673 = arith.addf %669, %672 : vector<14x32xf32>
    %c0_331 = arith.constant 0 : index
    %c0_332 = arith.constant 0 : index
    %674 = vector.load %arg23[%c0_331, %c0_332] : memref<16x32xf32, #tpu.memory_space<vmem>>, vector<14x32xf32>
    tpu.vector_store %arg23[%c0_331, %c0_332], %673 {strides = array<i32>} : memref<16x32xf32, #tpu.memory_space<vmem>>, vector<14x32xf32>,
    %c1_333 = arith.constant 1 : index
    %c0_334 = arith.constant 0 : index
    %675 = vector.load %arg23[%c1_333, %c0_334] : memref<16x32xf32, #tpu.memory_space<vmem>>, vector<14x32xf32>
    %c3_335 = arith.constant 3 : index
    %c1_336 = arith.constant 1 : index
    %676 = memref.load %arg18[%c3_335, %c1_336] : memref<4x3xf32, #tpu.memory_space<smem>>
    %677 = vector.broadcast %676 : f32 to vector<14x32xf32>
    %678 = arith.mulf %677, %666 : vector<14x32xf32>
    %679 = arith.addf %675, %678 : vector<14x32xf32>
    %c1_337 = arith.constant 1 : index
    %c0_338 = arith.constant 0 : index
    %680 = vector.load %arg23[%c1_337, %c0_338] : memref<16x32xf32, #tpu.memory_space<vmem>>, vector<14x32xf32>
    tpu.vector_store %arg23[%c1_337, %c0_338], %679 {strides = array<i32>} : memref<16x32xf32, #tpu.memory_space<vmem>>, vector<14x32xf32>,
    %c2_339 = arith.constant 2 : index
    %c0_340 = arith.constant 0 : index
    %681 = vector.load %arg23[%c2_339, %c0_340] : memref<16x32xf32, #tpu.memory_space<vmem>>, vector<14x32xf32>
    %c3_341 = arith.constant 3 : index
    %c2_342 = arith.constant 2 : index
    %682 = memref.load %arg18[%c3_341, %c2_342] : memref<4x3xf32, #tpu.memory_space<smem>>
    %683 = vector.broadcast %682 : f32 to vector<14x32xf32>
    %684 = arith.mulf %683, %666 : vector<14x32xf32>
    %685 = arith.addf %681, %684 : vector<14x32xf32>
    %c2_343 = arith.constant 2 : index
    %c0_344 = arith.constant 0 : index
    %686 = vector.load %arg23[%c2_343, %c0_344] : memref<16x32xf32, #tpu.memory_space<vmem>>, vector<14x32xf32>
    tpu.vector_store %arg23[%c2_343, %c0_344], %685 {strides = array<i32>} : memref<16x32xf32, #tpu.memory_space<vmem>>, vector<14x32xf32>,
    %c0_345 = arith.constant 0 : index
    %c0_346 = arith.constant 0 : index
    %687 = vector.load %arg23[%c0_345, %c0_346] : memref<16x32xf32, #tpu.memory_space<vmem>>, vector<16x32xf32>
    %c3_347 = arith.constant 3 : index
    %688 = memref.load %arg19[%c3_347] : memref<4xf32, #tpu.memory_space<smem>>
    %689 = vector.broadcast %688 : f32 to vector<16x32xf32>
    %690 = arith.addf %687, %689 : vector<16x32xf32>
    %cst_348 = arith.constant dense<0.000000e+00> : vector<16x4xf32>
    %691 = tpu.matmul %690, %476, %cst_348 {dimension_numbers = #tpu.dot_dimension_numbers<[1], [0], [0], [1], [0, 0, 1, 1], [], []>} : vector<16x32xf32>, vector<32x4xf32>, vector<16x4xf32> -> vector<16x4xf32>
    %c1_349 = arith.constant 1 : index
    %c0_350 = arith.constant 0 : index
    %c0_351 = arith.constant 0 : index
    %692 = vector.load %arg22[%c1_349, %c0_350, %c0_351] : memref<2x16x4xf32, #tpu.memory_space<vmem>>, vector<1x16x4xf32>
    %693 = vector.shape_cast %692 : vector<1x16x4xf32> to vector<16x4xf32>
    %694 = vector.shape_cast %691 : vector<16x4xf32> to vector<1x16x4xf32>
    tpu.vector_store %arg22[%c1_349, %c0_350, %c0_351], %694 {strides = array<i32>} : memref<2x16x4xf32, #tpu.memory_space<vmem>>, vector<1x16x4xf32>,
    return
  }
  func.func @transform_0(%arg0: i32) -> (i32, i32, i32) {
    %c0_i32 = arith.constant 0 : i32
    %c0_i32_0 = arith.constant 0 : i32
    %c0_i32_1 = arith.constant 0 : i32
    %c0_i32_2 = arith.constant 0 : i32
    return %c0_i32, %c0_i32_0, %c0_i32_1 : i32, i32, i32
  }
  func.func @transform_1(%arg0: i32) -> (i32, i32) {
    %c0_i32 = arith.constant 0 : i32
    %c0_i32_0 = arith.constant 0 : i32
    %c0_i32_1 = arith.constant 0 : i32
    return %c0_i32, %c0_i32_0 : i32, i32
  }
  func.func @transform_2(%arg0: i32) -> (i32, i32) {
    %c0_i32 = arith.constant 0 : i32
    %c0_i32_0 = arith.constant 0 : i32
    %c0_i32_1 = arith.constant 0 : i32
    return %c0_i32, %c0_i32_0 : i32, i32
  }
  func.func @transform_3(%arg0: i32) -> (i32, i32) {
    %c0_i32 = arith.constant 0 : i32
    %c0_i32_0 = arith.constant 0 : i32
    %c0_i32_1 = arith.constant 0 : i32
    return %c0_i32, %c0_i32_0 : i32, i32
  }
  func.func @transform_4(%arg0: i32) -> (i32, i32) {
    %c0_i32 = arith.constant 0 : i32
    %c0_i32_0 = arith.constant 0 : i32
    %c0_i32_1 = arith.constant 0 : i32
    return %c0_i32, %c0_i32_0 : i32, i32
  }
  func.func @transform_5(%arg0: i32) -> (i32, i32) {
    %c0_i32 = arith.constant 0 : i32
    %c0_i32_0 = arith.constant 0 : i32
    %c0_i32_1 = arith.constant 0 : i32
    return %c0_i32, %c0_i32_0 : i32, i32
  }
  func.func @transform_6(%arg0: i32) -> (i32, i32) {
    %c0_i32 = arith.constant 0 : i32
    %c0_i32_0 = arith.constant 0 : i32
    %c0_i32_1 = arith.constant 0 : i32
    return %c0_i32, %c0_i32_0 : i32, i32
  }
  func.func @transform_7(%arg0: i32) -> (i32, i32) {
    %c0_i32 = arith.constant 0 : i32
    %c0_i32_0 = arith.constant 0 : i32
    %c0_i32_1 = arith.constant 0 : i32
    return %c0_i32, %c0_i32_0 : i32, i32
  }
  func.func @transform_8(%arg0: i32) -> (i32, i32) {
    %c0_i32 = arith.constant 0 : i32
    %c0_i32_0 = arith.constant 0 : i32
    %c0_i32_1 = arith.constant 0 : i32
    return %c0_i32, %c0_i32_0 : i32, i32
  }
  func.func @transform_9(%arg0: i32) -> (i32, i32) {
    %c0_i32 = arith.constant 0 : i32
    %c0_i32_0 = arith.constant 0 : i32
    %c0_i32_1 = arith.constant 0 : i32
    return %c0_i32, %c0_i32_0 : i32, i32
  }
  func.func @transform_10(%arg0: i32) -> (i32, i32) {
    %c0_i32 = arith.constant 0 : i32
    %c0_i32_0 = arith.constant 0 : i32
    %c0_i32_1 = arith.constant 0 : i32
    return %c0_i32, %c0_i32_0 : i32, i32
  }
  func.func @transform_11(%arg0: i32) -> (i32, i32) {
    %c0_i32 = arith.constant 0 : i32
    %c0_i32_0 = arith.constant 0 : i32
    %c0_i32_1 = arith.constant 0 : i32
    return %c0_i32, %c0_i32_0 : i32, i32
  }
  func.func @transform_12(%arg0: i32) -> (i32, i32) {
    %c0_i32 = arith.constant 0 : i32
    %c0_i32_0 = arith.constant 0 : i32
    %c0_i32_1 = arith.constant 0 : i32
    return %c0_i32, %c0_i32_0 : i32, i32
  }
  func.func @transform_13(%arg0: i32) -> (i32, i32) {
    %c0_i32 = arith.constant 0 : i32
    %c0_i32_0 = arith.constant 0 : i32
    %c0_i32_1 = arith.constant 0 : i32
    return %c0_i32, %c0_i32_0 : i32, i32
  }
  func.func @transform_14(%arg0: i32) -> (i32, i32) {
    %c0_i32 = arith.constant 0 : i32
    %c0_i32_0 = arith.constant 0 : i32
    %c0_i32_1 = arith.constant 0 : i32
    return %c0_i32, %c0_i32_0 : i32, i32
  }
  func.func @transform_15(%arg0: i32) -> (i32, i32) {
    %c0_i32 = arith.constant 0 : i32
    %c0_i32_0 = arith.constant 0 : i32
    %c0_i32_1 = arith.constant 0 : i32
    return %c0_i32, %c0_i32_0 : i32, i32
  }
  func.func @transform_16(%arg0: i32) -> (i32, i32) {
    %c0_i32 = arith.constant 0 : i32
    %c0_i32_0 = arith.constant 0 : i32
    %c0_i32_1 = arith.constant 0 : i32
    return %c0_i32, %c0_i32_0 : i32, i32
  }
  func.func @transform_17(%arg0: i32) -> (i32, i32) {
    %c0_i32 = arith.constant 0 : i32
    %c0_i32_0 = arith.constant 0 : i32
    %c0_i32_1 = arith.constant 0 : i32
    return %c0_i32, %c0_i32_0 : i32, i32
  }
  func.func @transform_18(%arg0: i32) -> i32 {
    %c0_i32 = arith.constant 0 : i32
    %c0_i32_0 = arith.constant 0 : i32
    return %c0_i32 : i32
  }
  func.func @transform_19(%arg0: i32) -> (i32, i32) {
    %c0_i32 = arith.constant 0 : i32
    %c0_i32_0 = arith.constant 0 : i32
    %c0_i32_1 = arith.constant 0 : i32
    return %c0_i32, %c0_i32_0 : i32, i32
  }
  func.func @transform_20(%arg0: i32) -> (i32, i32) {
    %c0_i32 = arith.constant 0 : i32
    %c0_i32_0 = arith.constant 0 : i32
    %c0_i32_1 = arith.constant 0 : i32
    return %c0_i32, %c0_i32_0 : i32, i32
  }
  func.func @transform_21(%arg0: i32) -> (i32, i32, i32) {
    %c0_i32 = arith.constant 0 : i32
    %c0_i32_0 = arith.constant 0 : i32
    %c0_i32_1 = arith.constant 0 : i32
    %c0_i32_2 = arith.constant 0 : i32
    return %c0_i32, %c0_i32_0, %c0_i32_1 : i32, i32, i32
  }
}

</mosaic_0001>

<llo_original>
// kernel: fused_forward.1
$region0: #{fused_forward.1}
  #allocation0 [shape = 'u32[]', space=smem, size = 0x4, offset = 0x4, fixed_abs, tag = 'smem constant byte address 0x4 - core index']
  #allocation1 [shape = 'u32[72,128]{1,0:T(1,128)}', space=vmem, size = 0x9000, scoped, tag = 'internal scratch']
  #allocation2 [shape = 'f32[16,32]{1,0:T(8,128)}', space=vmem, size = 0x2000, scoped, tag = 'scratch operand']
  %s0 = inlined_call_operand.vmem [shape: f32[2,16,4], index: 0, kind: input, shape index: {}]
  %s1 = inlined_call_operand.hbm [shape: f32[12,128], index: 1, kind: input, shape index: {}]
  %s2 = inlined_call_operand.hbm [shape: f32[384,128], index: 2, kind: input, shape index: {}]
  %s3 = inlined_call_operand.hbm [shape: f32[384,128], index: 3, kind: input, shape index: {}]
  %s4 = inlined_call_operand.hbm [shape: f32[384,128], index: 4, kind: input, shape index: {}]
  %s5 = inlined_call_operand.vmem [shape: f32[1,128], index: 5, kind: input, shape index: {}]
  %s6 = inlined_call_operand.vmem [shape: f32[1,128], index: 6, kind: input, shape index: {}]
  %s7 = inlined_call_operand.vmem [shape: f32[1,128], index: 7, kind: input, shape index: {}]
  %s8 = inlined_call_operand.vmem [shape: f32[1,128], index: 8, kind: input, shape index: {}]
  %s9 = inlined_call_operand.hbm [shape: f32[128,128], index: 9, kind: input, shape index: {}]
  %s10 = inlined_call_operand.vmem [shape: f32[32,128], index: 10, kind: input, shape index: {}]
  %s11 = inlined_call_operand.vmem [shape: f32[1,128], index: 11, kind: input, shape index: {}]
  %s12 = inlined_call_operand.vmem [shape: f32[32,128], index: 12, kind: input, shape index: {}]
  %s13 = inlined_call_operand.vmem [shape: f32[32,128], index: 13, kind: input, shape index: {}]
  %s14 = inlined_call_operand.vmem [shape: f32[1,128], index: 14, kind: input, shape index: {}]
  %s15 = inlined_call_operand.vmem [shape: f32[32,5], index: 15, kind: input, shape index: {}]
  %s16 = inlined_call_operand.vmem [shape: f32[1,5], index: 16, kind: input, shape index: {}]
  %s17 = inlined_call_operand.vmem [shape: f32[4,3], index: 17, kind: input, shape index: {}]
  %s18 = inlined_call_operand.vmem [shape: f32[4], index: 18, kind: input, shape index: {}]
  %s19 = inlined_call_operand.vmem [shape: f32[32,4], index: 19, kind: input, shape index: {}]
  %s20 = inlined_call_operand.hbm [shape: f32[2,5], index: 20, kind: output, shape index: {0}]
  %s21 = inlined_call_operand.vmem [shape: f32[2,16,4], index: 21, kind: output, shape index: {1}]
  %22 = xla_tuple %s20, %s21
  %s23 = sld [smem:[#allocation0]]
  $region126: #{fused_forward.1} parent=0
    _
  %s25 = ssub.s32 1, %s23
  %s26 = scalar_select 0, %s25, %s23
  $region1: #{fused_forward.1} parent=0
    #allocation3 [shape = 'u8[8192]{0}', space=vmem, size = 0x2000, scoped, tag = 'input window, operand 1, single buffered']
    #allocation4 [shape = 's32[1]{0}', space=sflag, size = 0x4, scoped, tag = 'scoped memory for fused_forward.1']
    #allocation5 [shape = 's32[1]{0}', space=sflag, size = 0x4, scoped, tag = 'scoped memory for fused_forward.1']
    #allocation6 [shape = 's32[1]{0}', space=sflag, size = 0x4, scoped, tag = 'scoped memory for fused_forward.1']
    #allocation7 [shape = 'u8[196608]{0}', space=vmem, size = 0x30000, scoped, tag = 'input window, operand 2, single buffered']
    #allocation8 [shape = 's32[1]{0}', space=sflag, size = 0x4, scoped, tag = 'scoped memory for fused_forward.1']
    #allocation9 [shape = 'u8[196608]{0}', space=vmem, size = 0x30000, scoped, tag = 'input window, operand 3, single buffered']
    #allocation10 [shape = 'u8[196608]{0}', space=vmem, size = 0x30000, scoped, tag = 'input window, operand 4, single buffered']
    #allocation11 [shape = 's32[1]{0}', space=sflag, size = 0x4, scoped, tag = 'scoped memory for fused_forward.1']
    #allocation12 [shape = 'u8[65536]{0}', space=vmem, size = 0x10000, scoped, tag = 'input window, operand 9, single buffered']
    #allocation13 [shape = 'u8[2048]{0}', space=smem, size = 0x800, scoped, tag = 'input window, operand 17, single buffered']
    #allocation14 [shape = 'u8[512]{0}', space=smem, size = 0x200, scoped, tag = 'input window, operand 18, single buffered']
    #allocation15 [shape = 's32[1]{0}', space=sflag, size = 0x4, scoped, tag = 'scoped memory for fused_forward.1']
    #allocation16 [shape = 'u8[1024]{0}', space=vmem, size = 0x400, scoped, tag = 'output window, operand 0, single buffered']
    %27 = vsyncpa [#allocation4], 0
    %28 = vsyncpa [#allocation8], 0
    %29 = vsyncpa [#allocation11], 0
    %30 = vsyncpa [#allocation6], 0
    %31 = vsyncpa [#allocation15], 0
    %32 = vsyncpa [#allocation5], 0
    // Predicated region
    $region2: #{fused_forward.1} parent=1 // pred_check
      _
    $region3: #{fused_forward.1} parent=1 // pred_check_branch
      %34 = sbr.rel (0) target = $region5
    $region4: #{fused_forward.1} parent=1 // pred_region
      _
    $region5: #{fused_forward.1} parent=1 // pred_fallthru
      _
    // Predicated region
    $region6: #{fused_forward.1} parent=1 // pred_check
      _
    $region7: #{fused_forward.1} parent=1 // pred_check_branch
      %36 = sbr.rel (0) target = $region9
    $region8: #{fused_forward.1} parent=1 // pred_region
      %38 = vsyncadd [#allocation4], 0
      %s39 = sshll.u32 %s1, 4
      %s40 = int_to_ptr.hbm [resolvable:$true] %s39
      %s41 = sshll.u32 [#allocation3], 4
      %s42 = int_to_ptr.vmem [resolvable:$true] %s41
      %47 = dma.hbm_to_vmem [thread:$0]  %s40, 256, %s42, [#allocation4], 128, 128, 8
    $region9: #{fused_forward.1} parent=1 // pred_fallthru
      _
    // Predicated region
    $region10: #{fused_forward.1} parent=1 // pred_check
      _
    $region11: #{fused_forward.1} parent=1 // pred_check_branch
      %49 = sbr.rel (0) target = $region13
    $region12: #{fused_forward.1} parent=1 // pred_region
      %51 = vsyncadd [#allocation8], 0
      %s52 = sshll.u32 %s2, 4
      %s53 = int_to_ptr.hbm [resolvable:$true] %s52
      %s54 = sshll.u32 [#allocation7], 4
      %s55 = int_to_ptr.vmem [resolvable:$true] %s54
      %60 = dma.hbm_to_vmem [thread:$0]  %s53, 6144, %s55, [#allocation8], 128, 128, 8
    $region13: #{fused_forward.1} parent=1 // pred_fallthru
      _
    // Predicated region
    $region14: #{fused_forward.1} parent=1 // pred_check
      _
    $region15: #{fused_forward.1} parent=1 // pred_check_branch
      %62 = sbr.rel (0) target = $region17
    $region16: #{fused_forward.1} parent=1 // pred_region
      %64 = vsyncadd [#allocation8], 0
      %s65 = sshll.u32 %s3, 4
      %s66 = int_to_ptr.hbm [resolvable:$true] %s65
      %s67 = sshll.u32 [#allocation9], 4
      %s68 = int_to_ptr.vmem [resolvable:$true] %s67
      %73 = dma.hbm_to_vmem [thread:$0]  %s66, 6144, %s68, [#allocation8], 128, 128, 8
    $region17: #{fused_forward.1} parent=1 // pred_fallthru
      _
    // Predicated region
    $region18: #{fused_forward.1} parent=1 // pred_check
      _
    $region19: #{fused_forward.1} parent=1 // pred_check_branch
      %75 = sbr.rel (0) target = $region21
    $region20: #{fused_forward.1} parent=1 // pred_region
      %77 = vsyncadd [#allocation11], 0
      %s78 = sshll.u32 %s4, 4
      %s79 = int_to_ptr.hbm [resolvable:$true] %s78
      %s80 = sshll.u32 [#allocation10], 4
      %s81 = int_to_ptr.vmem [resolvable:$true] %s80
      %86 = dma.hbm_to_vmem [thread:$0]  %s79, 6144, %s81, [#allocation11], 128, 128, 8
    $region21: #{fused_forward.1} parent=1 // pred_fallthru
      _
    // Predicated region
    $region22: #{fused_forward.1} parent=1 // pred_check
      _
    $region23: #{fused_forward.1} parent=1 // pred_check_branch
      %88 = sbr.rel (0) target = $region25
    $region24: #{fused_forward.1} parent=1 // pred_region
      _
    $region25: #{fused_forward.1} parent=1 // pred_fallthru
      _
    // Predicated region
    $region26: #{fused_forward.1} parent=1 // pred_check
      _
    $region27: #{fused_forward.1} parent=1 // pred_check_branch
      %90 = sbr.rel (0) target = $region29
    $region28: #{fused_forward.1} parent=1 // pred_region
      _
    $region29: #{fused_forward.1} parent=1 // pred_fallthru
      _
    // Predicated region
    $region30: #{fused_forward.1} parent=1 // pred_check
      _
    $region31: #{fused_forward.1} parent=1 // pred_check_branch
      %92 = sbr.rel (0) target = $region33
    $region32: #{fused_forward.1} parent=1 // pred_region
      _
    $region33: #{fused_forward.1} parent=1 // pred_fallthru
      _
    // Predicated region
    $region34: #{fused_forward.1} parent=1 // pred_check
      _
    $region35: #{fused_forward.1} parent=1 // pred_check_branch
      %94 = sbr.rel (0) target = $region37
    $region36: #{fused_forward.1} parent=1 // pred_region
      _
    $region37: #{fused_forward.1} parent=1 // pred_fallthru
      _
    // Predicated region
    $region38: #{fused_forward.1} parent=1 // pred_check
      _
    $region39: #{fused_forward.1} parent=1 // pred_check_branch
      %96 = sbr.rel (0) target = $region41
    $region40: #{fused_forward.1} parent=1 // pred_region
      %98 = vsyncadd [#allocation11], 0
      %s99 = sshll.u32 %s9, 4
      %s100 = int_to_ptr.hbm [resolvable:$true] %s99
      %s101 = sshll.u32 [#allocation12], 4
      %s102 = int_to_ptr.vmem [resolvable:$true] %s101
      %107 = dma.hbm_to_vmem [thread:$0]  %s100, 2048, %s102, [#allocation11], 128, 128, 8
    $region41: #{fused_forward.1} parent=1 // pred_fallthru
      _
    // Predicated region
    $region42: #{fused_forward.1} parent=1 // pred_check
      _
    $region43: #{fused_forward.1} parent=1 // pred_check_branch
      %109 = sbr.rel (0) target = $region45
    $region44: #{fused_forward.1} parent=1 // pred_region
      _
    $region45: #{fused_forward.1} parent=1 // pred_fallthru
      _
    // Predicated region
    $region46: #{fused_forward.1} parent=1 // pred_check
      _
    $region47: #{fused_forward.1} parent=1 // pred_check_branch
      %111 = sbr.rel (0) target = $region49
    $region48: #{fused_forward.1} parent=1 // pred_region
      _
    $region49: #{fused_forward.1} parent=1 // pred_fallthru
      _
    // Predicated region
    $region50: #{fused_forward.1} parent=1 // pred_check
      _
    $region51: #{fused_forward.1} parent=1 // pred_check_branch
      %113 = sbr.rel (0) target = $region53
    $region52: #{fused_forward.1} parent=1 // pred_region
      _
    $region53: #{fused_forward.1} parent=1 // pred_fallthru
      _
    // Predicated region
    $region54: #{fused_forward.1} parent=1 // pred_check
      _
    $region55: #{fused_forward.1} parent=1 // pred_check_branch
      %115 = sbr.rel (0) target = $region57
    $region56: #{fused_forward.1} parent=1 // pred_region
      _
    $region57: #{fused_forward.1} parent=1 // pred_fallthru
      _
    // Predicated region
    $region58: #{fused_forward.1} parent=1 // pred_check
      _
    $region59: #{fused_forward.1} parent=1 // pred_check_branch
      %117 = sbr.rel (0) target = $region61
    $region60: #{fused_forward.1} parent=1 // pred_region
      _
    $region61: #{fused_forward.1} parent=1 // pred_fallthru
      _
    // Predicated region
    $region62: #{fused_forward.1} parent=1 // pred_check
      _
    $region63: #{fused_forward.1} parent=1 // pred_check_branch
      %119 = sbr.rel (0) target = $region65
    $region64: #{fused_forward.1} parent=1 // pred_region
      _
    $region65: #{fused_forward.1} parent=1 // pred_fallthru
      _
    // Predicated region
    $region66: #{fused_forward.1} parent=1 // pred_check
      _
    $region67: #{fused_forward.1} parent=1 // pred_check_branch
      %121 = sbr.rel (0) target = $region69
    $region68: #{fused_forward.1} parent=1 // pred_region
      _
    $region69: #{fused_forward.1} parent=1 // pred_fallthru
      _
    // Predicated region
    $region70: #{fused_forward.1} parent=1 // pred_check
      _
    $region71: #{fused_forward.1} parent=1 // pred_check_branch
      %123 = sbr.rel (0) target = $region73
    $region72: #{fused_forward.1} parent=1 // pred_region
      %125 = vsyncadd [#allocation6], 0
      %s127 = sshll.u32 %s17, 4
      %s128 = int_to_ptr.vmem [resolvable:$true] %s127
      %130 = dma.vmem_to_smem %s128, 64, [#allocation13], [#allocation6]
    $region73: #{fused_forward.1} parent=1 // pred_fallthru
      _
    // Predicated region
    $region74: #{fused_forward.1} parent=1 // pred_check
      _
    $region75: #{fused_forward.1} parent=1 // pred_check_branch
      %132 = sbr.rel (0) target = $region77
    $region76: #{fused_forward.1} parent=1 // pred_region
      %134 = vsyncadd [#allocation15], 0
      %s136 = sshll.u32 %s18, 4
      %s137 = int_to_ptr.vmem [resolvable:$true] %s136
      %139 = dma.vmem_to_smem %s137, 16, [#allocation14], [#allocation15]
    $region77: #{fused_forward.1} parent=1 // pred_fallthru
      _
    // Predicated region
    $region78: #{fused_forward.1} parent=1 // pred_check
      _
    $region79: #{fused_forward.1} parent=1 // pred_check_branch
      %141 = sbr.rel (0) target = $region81
    $region80: #{fused_forward.1} parent=1 // pred_region
      _
    $region81: #{fused_forward.1} parent=1 // pred_fallthru
      _
    // Predicated region
    $region82: #{fused_forward.1} parent=1 // pred_check
      _
    $region83: #{fused_forward.1} parent=1 // pred_check_branch
      %143 = sbr.rel (0) target = $region85
    $region84: #{fused_forward.1} parent=1 // pred_region
      %145 = dma.done [#allocation4], 256
    $region85: #{fused_forward.1} parent=1 // pred_fallthru
      _
    // Predicated region
    $region86: #{fused_forward.1} parent=1 // pred_check
      _
    $region87: #{fused_forward.1} parent=1 // pred_check_branch
      %147 = sbr.rel (0) target = $region89
    $region88: #{fused_forward.1} parent=1 // pred_region
      %149 = dma.done [#allocation8], 6144
    $region89: #{fused_forward.1} parent=1 // pred_fallthru
      _
    // Predicated region
    $region90: #{fused_forward.1} parent=1 // pred_check
      _
    $region91: #{fused_forward.1} parent=1 // pred_check_branch
      %151 = sbr.rel (0) target = $region93
    $region92: #{fused_forward.1} parent=1 // pred_region
      %153 = dma.done [#allocation8], 6144
    $region93: #{fused_forward.1} parent=1 // pred_fallthru
      _
    // Predicated region
    $region94: #{fused_forward.1} parent=1 // pred_check
      _
    $region95: #{fused_forward.1} parent=1 // pred_check_branch
      %155 = sbr.rel (0) target = $region97
    $region96: #{fused_forward.1} parent=1 // pred_region
      %157 = dma.done [#allocation11], 6144
    $region97: #{fused_forward.1} parent=1 // pred_fallthru
      _
    // Predicated region
    $region98: #{fused_forward.1} parent=1 // pred_check
      _
    $region99: #{fused_forward.1} parent=1 // pred_check_branch
      %159 = sbr.rel (0) target = $region101
    $region100: #{fused_forward.1} parent=1 // pred_region
      %161 = dma.done [#allocation11], 2048
    $region101: #{fused_forward.1} parent=1 // pred_fallthru
      _
    // Predicated region
    $region102: #{fused_forward.1} parent=1 // pred_check
      _
    $region103: #{fused_forward.1} parent=1 // pred_check_branch
      %163 = sbr.rel (0) target = $region105
    $region104: #{fused_forward.1} parent=1 // pred_region
      %165 = dma.done [#allocation6], 64
    $region105: #{fused_forward.1} parent=1 // pred_fallthru
      _
    // Predicated region
    $region106: #{fused_forward.1} parent=1 // pred_check
      _
    $region107: #{fused_forward.1} parent=1 // pred_check_branch
      %167 = sbr.rel (0) target = $region109
    $region108: #{fused_forward.1} parent=1 // pred_region
      %169 = dma.done [#allocation15], 16
    $region109: #{fused_forward.1} parent=1 // pred_fallthru
      _
    %170 = sfence
    %v171 = vld [vmem:[%s0] sm:$0xff]
    %v172 = vld [vmem:[%s0 + $0x8] sm:$0xff]
    %v173 = vld [vmem:[#allocation3] sm:$0xf]
    %v174 = vld [vmem:[#allocation3 + $0x4] sm:$0xf]
    %vm177 = vcmask 1046528
    %v178 = vrot.slane %v171, 1
    %v179 = vrot.slane %v172, 1
    %v180 = vsel %vm177, %v178, %v179
    %vm181 = vcmask 31744
    %v182 = vsel %vm181, %v180, 0
    %v184 = vsel %vm181, %v179, 0
    %vm186 = vcmask 1043456
    %v188 = vsel %vm186, %v174, 0
    %190 = vmatpush.msra.mxu0 0.0
    %191 = vmatpush.msra.mxu0 0.0
    %192 = vmatpush.msra.mxu0 0.0
    %193 = vmatpush.msra.mxu0 0.0
    %194 = vmatpush.msra.mxu0 0.0
    %195 = vmatpush.msra.mxu0 0.0
    %196 = vmatpush.msra.mxu0 0.0
    %197 = vmatpush.msra.mxu0 0.0
    %198 = vmatpush.msra.mxu0 0.0
    %199 = vmatpush.msra.mxu0 0.0
    %200 = vmatpush.msra.mxu0 0.0
    %201 = vmatpush.msra.mxu0 0.0
    %202 = vmatpush.msra.mxu0 0.0
    %203 = vmatpush.msra.mxu0 0.0
    %204 = vmatpush.msra.mxu0 0.0
    %205 = vmatpush.msra.mxu0 %v188
    %206 = vmatmul.f32.gmra.mxu0 %v182
    %v207 = vpop.f32.mrf.mxu0
    %v208 = vadd.f32 0.0, %v207
    %209 = vmatmul.f32.gmra.mxu0 %v184
    %v210 = vpop.f32.mrf.mxu0
    %v211 = vadd.f32 0.0, %v210
    %212 = vdwg.mxu0
    %v213 = vsel %vm181, %v171, 0
    %v215 = vsel %vm181, %v172, 0
    %v218 = vsel %vm186, %v173, 0
    %220 = vmatpush.msra.mxu0 0.0
    %221 = vmatpush.msra.mxu0 0.0
    %222 = vmatpush.msra.mxu0 0.0
    %223 = vmatpush.msra.mxu0 0.0
    %224 = vmatpush.msra.mxu0 0.0
    %225 = vmatpush.msra.mxu0 0.0
    %226 = vmatpush.msra.mxu0 0.0
    %227 = vmatpush.msra.mxu0 0.0
    %228 = vmatpush.msra.mxu0 0.0
    %229 = vmatpush.msra.mxu0 0.0
    %230 = vmatpush.msra.mxu0 0.0
    %231 = vmatpush.msra.mxu0 0.0
    %232 = vmatpush.msra.mxu0 0.0
    %233 = vmatpush.msra.mxu0 0.0
    %234 = vmatpush.msra.mxu0 0.0
    %235 = vmatpush.msra.mxu0 %v218
    %236 = vmatmul.f32.gmra.mxu0 %v213
    %v237 = vpop.f32.mrf.mxu0
    %v238 = vadd.f32 %v208, %v237
    %239 = vmatmul.f32.gmra.mxu0 %v215
    %v240 = vpop.f32.mrf.mxu0
    %v241 = vadd.f32 %v211, %v240
    %242 = vdwg.mxu0
    %v243 = vld [vmem:[#allocation3 + $0x8] sm:$0xf]
    %vm244 = vcmask 1045504
    %v245 = vrot.slane %v171, 2
    %v246 = vrot.slane %v172, 2
    %v247 = vsel %vm244, %v245, %v246
    %v248 = vsel %vm181, %v247, 0
    %v250 = vsel %vm181, %v246, 0
    %v253 = vsel %vm186, %v243, 0
    %255 = vmatpush.msra.mxu0 0.0
    %256 = vmatpush.msra.mxu0 0.0
    %257 = vmatpush.msra.mxu0 0.0
    %258 = vmatpush.msra.mxu0 0.0
    %259 = vmatpush.msra.mxu0 0.0
    %260 = vmatpush.msra.mxu0 0.0
    %261 = vmatpush.msra.mxu0 0.0
    %262 = vmatpush.msra.mxu0 0.0
    %263 = vmatpush.msra.mxu0 0.0
    %264 = vmatpush.msra.mxu0 0.0
    %265 = vmatpush.msra.mxu0 0.0
    %266 = vmatpush.msra.mxu0 0.0
    %267 = vmatpush.msra.mxu0 0.0
    %268 = vmatpush.msra.mxu0 0.0
    %269 = vmatpush.msra.mxu0 0.0
    %270 = vmatpush.msra.mxu0 %v253
    %271 = vmatmul.f32.gmra.mxu0 %v248
    %v272 = vpop.f32.mrf.mxu0
    %v273 = vadd.f32 0.0, %v272
    %274 = vmatmul.f32.gmra.mxu0 %v250
    %v275 = vpop.f32.mrf.mxu0
    %v276 = vadd.f32 0.0, %v275
    %277 = vdwg.mxu0
    %v278 = vadd.f32 %v238, %v273
    %v279 = vadd.f32 %v241, %v276
    %v280 = vld [vmem:[%s5] sm:$0x1]
    %v282 = vperm.slane %v280, 0
    %v284 = vadd.f32 %v278, %v282
    %v285 = vadd.f32 %v279, %v282
    %v286 = vmax.f32 %v284, 0.0
    %v287 = vmax.f32 %v285, 0.0
    %v288 = vld [vmem:[#allocation7] sm:$0xff]
    %v289 = vld [vmem:[#allocation7 + $0x8] sm:$0xff]
    %v290 = vld [vmem:[#allocation7 + $0x10] sm:$0xff]
    %v291 = vld [vmem:[#allocation7 + $0x18] sm:$0xff]
    %v292 = vld [vmem:[#allocation7 + $0x20] sm:$0xff]
    %v293 = vld [vmem:[#allocation7 + $0x28] sm:$0xff]
    %v294 = vld [vmem:[#allocation7 + $0x30] sm:$0xff]
    %v295 = vld [vmem:[#allocation7 + $0x38] sm:$0xff]
    %v296 = vld [vmem:[#allocation7 + $0x40] sm:$0xff]
    %v297 = vld [vmem:[#allocation7 + $0x48] sm:$0xff]
    %v298 = vld [vmem:[#allocation7 + $0x50] sm:$0xff]
    %v299 = vld [vmem:[#allocation7 + $0x58] sm:$0xff]
    %v300 = vld [vmem:[#allocation7 + $0x60] sm:$0xff]
    %v301 = vld [vmem:[#allocation7 + $0x68] sm:$0xff]
    %v302 = vld [vmem:[#allocation7 + $0x70] sm:$0xff]
    %v303 = vld [vmem:[#allocation7 + $0x78] sm:$0xff]
    %v304 = vld [vmem:[#allocation7 + $0x80] sm:$0xff]
    %v305 = vld [vmem:[#allocation7 + $0x88] sm:$0xff]
    %v306 = vld [vmem:[#allocation7 + $0x90] sm:$0xff]
    %v307 = vld [vmem:[#allocation7 + $0x98] sm:$0xff]
    %v308 = vld [vmem:[#allocation7 + $0xa0] sm:$0xff]
    %v309 = vld [vmem:[#allocation7 + $0xa8] sm:$0xff]
    %v310 = vld [vmem:[#allocation7 + $0xb0] sm:$0xff]
    %v311 = vld [vmem:[#allocation7 + $0xb8] sm:$0xff]
    %v312 = vld [vmem:[#allocation7 + $0xc0] sm:$0xff]
    %v313 = vld [vmem:[#allocation7 + $0xc8] sm:$0xff]
    %v314 = vld [vmem:[#allocation7 + $0xd0] sm:$0xff]
    %v315 = vld [vmem:[#allocation7 + $0xd8] sm:$0xff]
    %v316 = vld [vmem:[#allocation7 + $0xe0] sm:$0xff]
    %v317 = vld [vmem:[#allocation7 + $0xe8] sm:$0xff]
    %v318 = vld [vmem:[#allocation7 + $0xf0] sm:$0xff]
    %v319 = vld [vmem:[#allocation7 + $0xf8] sm:$0xff]
    %v322 = vrot.slane %v286, 1
    %v323 = vrot.slane %v287, 1
    %v324 = vsel %vm177, %v322, %v323
    %327 = vmatpush.msra.mxu0 %v319
    %328 = vmatpush.msra.mxu0 %v318
    %329 = vmatpush.msra.mxu0 %v317
    %330 = vmatpush.msra.mxu0 %v316
    %331 = vmatpush.msra.mxu0 %v315
    %332 = vmatpush.msra.mxu0 %v314
    %333 = vmatpush.msra.mxu0 %v313
    %334 = vmatpush.msra.mxu0 %v312
    %335 = vmatpush.msra.mxu0 %v311
    %336 = vmatpush.msra.mxu0 %v310
    %337 = vmatpush.msra.mxu0 %v309
    %338 = vmatpush.msra.mxu0 %v308
    %339 = vmatpush.msra.mxu0 %v307
    %340 = vmatpush.msra.mxu0 %v306
    %341 = vmatpush.msra.mxu0 %v305
    %342 = vmatpush.msra.mxu0 %v304
    %343 = vmatmul.f32.gmra.mxu0 %v324
    %v344 = vpop.f32.mrf.mxu0
    %v345 = vadd.f32 0.0, %v344
    %346 = vmatmul.f32.gmra.mxu0 %v323
    %v347 = vpop.f32.mrf.mxu0
    %v348 = vadd.f32 0.0, %v347
    %349 = vdwg.mxu0
    %350 = vmatpush.msra.mxu0 %v303
    %351 = vmatpush.msra.mxu0 %v302
    %352 = vmatpush.msra.mxu0 %v301
    %353 = vmatpush.msra.mxu0 %v300
    %354 = vmatpush.msra.mxu0 %v299
    %355 = vmatpush.msra.mxu0 %v298
    %356 = vmatpush.msra.mxu0 %v297
    %357 = vmatpush.msra.mxu0 %v296
    %358 = vmatpush.msra.mxu0 %v295
    %359 = vmatpush.msra.mxu0 %v294
    %360 = vmatpush.msra.mxu0 %v293
    %361 = vmatpush.msra.mxu0 %v292
    %362 = vmatpush.msra.mxu0 %v291
    %363 = vmatpush.msra.mxu0 %v290
    %364 = vmatpush.msra.mxu0 %v289
    %365 = vmatpush.msra.mxu0 %v288
    %366 = vmatmul.f32.gmra.mxu0 %v286
    %v367 = vpop.f32.mrf.mxu0
    %v368 = vadd.f32 %v345, %v367
    %369 = vmatmul.f32.gmra.mxu0 %v287
    %v370 = vpop.f32.mrf.mxu0
    %v371 = vadd.f32 %v348, %v370
    %372 = vdwg.mxu0
    %v373 = vld [vmem:[#allocation7 + $0x100] sm:$0xff]
    %v374 = vld [vmem:[#allocation7 + $0x108] sm:$0xff]
    %v375 = vld [vmem:[#allocation7 + $0x110] sm:$0xff]
    %v376 = vld [vmem:[#allocation7 + $0x118] sm:$0xff]
    %v377 = vld [vmem:[#allocation7 + $0x120] sm:$0xff]
    %v378 = vld [vmem:[#allocation7 + $0x128] sm:$0xff]
    %v379 = vld [vmem:[#allocation7 + $0x130] sm:$0xff]
    %v380 = vld [vmem:[#allocation7 + $0x138] sm:$0xff]
    %v381 = vld [vmem:[#allocation7 + $0x140] sm:$0xff]
    %v382 = vld [vmem:[#allocation7 + $0x148] sm:$0xff]
    %v383 = vld [vmem:[#allocation7 + $0x150] sm:$0xff]
    %v384 = vld [vmem:[#allocation7 + $0x158] sm:$0xff]
    %v385 = vld [vmem:[#allocation7 + $0x160] sm:$0xff]
    %v386 = vld [vmem:[#allocation7 + $0x168] sm:$0xff]
    %v387 = vld [vmem:[#allocation7 + $0x170] sm:$0xff]
    %v388 = vld [vmem:[#allocation7 + $0x178] sm:$0xff]
    %v389 = vrot.slane %v286, 2
    %v390 = vrot.slane %v287, 2
    %v391 = vsel %vm244, %v389, %v390
    %394 = vmatpush.msra.mxu0 %v388
    %395 = vmatpush.msra.mxu0 %v387
    %396 = vmatpush.msra.mxu0 %v386
    %397 = vmatpush.msra.mxu0 %v385
    %398 = vmatpush.msra.mxu0 %v384
    %399 = vmatpush.msra.mxu0 %v383
    %400 = vmatpush.msra.mxu0 %v382
    %401 = vmatpush.msra.mxu0 %v381
    %402 = vmatpush.msra.mxu0 %v380
    %403 = vmatpush.msra.mxu0 %v379
    %404 = vmatpush.msra.mxu0 %v378
    %405 = vmatpush.msra.mxu0 %v377
    %406 = vmatpush.msra.mxu0 %v376
    %407 = vmatpush.msra.mxu0 %v375
    %408 = vmatpush.msra.mxu0 %v374
    %409 = vmatpush.msra.mxu0 %v373
    %410 = vmatmul.f32.gmra.mxu0 %v391
    %v411 = vpop.f32.mrf.mxu0
    %v412 = vadd.f32 0.0, %v411
    %413 = vmatmul.f32.gmra.mxu0 %v390
    %v414 = vpop.f32.mrf.mxu0
    %v415 = vadd.f32 0.0, %v414
    %416 = vdwg.mxu0
    %v417 = vadd.f32 %v368, %v412
    %v418 = vadd.f32 %v371, %v415
    %v419 = vld [vmem:[%s6] sm:$0x1]
    %v421 = vperm.slane %v419, 0
    %v423 = vadd.f32 %v417, %v421
    %v424 = vadd.f32 %v418, %v421
    %v425 = vmax.f32 %v423, 0.0
    %v426 = vmax.f32 %v424, 0.0
    %v427 = vld [vmem:[#allocation9] sm:$0xff]
    %v428 = vld [vmem:[#allocation9 + $0x8] sm:$0xff]
    %v429 = vld [vmem:[#allocation9 + $0x10] sm:$0xff]
    %v430 = vld [vmem:[#allocation9 + $0x18] sm:$0xff]
    %v431 = vld [vmem:[#allocation9 + $0x20] sm:$0xff]
    %v432 = vld [vmem:[#allocation9 + $0x28] sm:$0xff]
    %v433 = vld [vmem:[#allocation9 + $0x30] sm:$0xff]
    %v434 = vld [vmem:[#allocation9 + $0x38] sm:$0xff]
    %v435 = vld [vmem:[#allocation9 + $0x40] sm:$0xff]
    %v436 = vld [vmem:[#allocation9 + $0x48] sm:$0xff]
    %v437 = vld [vmem:[#allocation9 + $0x50] sm:$0xff]
    %v438 = vld [vmem:[#allocation9 + $0x58] sm:$0xff]
    %v439 = vld [vmem:[#allocation9 + $0x60] sm:$0xff]
    %v440 = vld [vmem:[#allocation9 + $0x68] sm:$0xff]
    %v441 = vld [vmem:[#allocation9 + $0x70] sm:$0xff]
    %v442 = vld [vmem:[#allocation9 + $0x78] sm:$0xff]
    %v443 = vld [vmem:[#allocation9 + $0x80] sm:$0xff]
    %v444 = vld [vmem:[#allocation9 + $0x88] sm:$0xff]
    %v445 = vld [vmem:[#allocation9 + $0x90] sm:$0xff]
    %v446 = vld [vmem:[#allocation9 + $0x98] sm:$0xff]
    %v447 = vld [vmem:[#allocation9 + $0xa0] sm:$0xff]
    %v448 = vld [vmem:[#allocation9 + $0xa8] sm:$0xff]
    %v449 = vld [vmem:[#allocation9 + $0xb0] sm:$0xff]
    %v450 = vld [vmem:[#allocation9 + $0xb8] sm:$0xff]
    %v451 = vld [vmem:[#allocation9 + $0xc0] sm:$0xff]
    %v452 = vld [vmem:[#allocation9 + $0xc8] sm:$0xff]
    %v453 = vld [vmem:[#allocation9 + $0xd0] sm:$0xff]
    %v454 = vld [vmem:[#allocation9 + $0xd8] sm:$0xff]
    %v455 = vld [vmem:[#allocation9 + $0xe0] sm:$0xff]
    %v456 = vld [vmem:[#allocation9 + $0xe8] sm:$0xff]
    %v457 = vld [vmem:[#allocation9 + $0xf0] sm:$0xff]
    %v458 = vld [vmem:[#allocation9 + $0xf8] sm:$0xff]
    %v461 = vrot.slane %v425, 1
    %v462 = vrot.slane %v426, 1
    %v463 = vsel %vm177, %v461, %v462
    %466 = vmatpush.msra.mxu0 %v458
    %467 = vmatpush.msra.mxu0 %v457
    %468 = vmatpush.msra.mxu0 %v456
    %469 = vmatpush.msra.mxu0 %v455
    %470 = vmatpush.msra.mxu0 %v454
    %471 = vmatpush.msra.mxu0 %v453
    %472 = vmatpush.msra.mxu0 %v452
    %473 = vmatpush.msra.mxu0 %v451
    %474 = vmatpush.msra.mxu0 %v450
    %475 = vmatpush.msra.mxu0 %v449
    %476 = vmatpush.msra.mxu0 %v448
    %477 = vmatpush.msra.mxu0 %v447
    %478 = vmatpush.msra.mxu0 %v446
    %479 = vmatpush.msra.mxu0 %v445
    %480 = vmatpush.msra.mxu0 %v444
    %481 = vmatpush.msra.mxu0 %v443
    %482 = vmatmul.f32.gmra.mxu0 %v463
    %v483 = vpop.f32.mrf.mxu0
    %v484 = vadd.f32 0.0, %v483
    %485 = vmatmul.f32.gmra.mxu0 %v462
    %v486 = vpop.f32.mrf.mxu0
    %v487 = vadd.f32 0.0, %v486
    %488 = vdwg.mxu0
    %489 = vmatpush.msra.mxu0 %v442
    %490 = vmatpush.msra.mxu0 %v441
    %491 = vmatpush.msra.mxu0 %v440
    %492 = vmatpush.msra.mxu0 %v439
    %493 = vmatpush.msra.mxu0 %v438
    %494 = vmatpush.msra.mxu0 %v437
    %495 = vmatpush.msra.mxu0 %v436
    %496 = vmatpush.msra.mxu0 %v435
    %497 = vmatpush.msra.mxu0 %v434
    %498 = vmatpush.msra.mxu0 %v433
    %499 = vmatpush.msra.mxu0 %v432
    %500 = vmatpush.msra.mxu0 %v431
    %501 = vmatpush.msra.mxu0 %v430
    %502 = vmatpush.msra.mxu0 %v429
    %503 = vmatpush.msra.mxu0 %v428
    %504 = vmatpush.msra.mxu0 %v427
    %505 = vmatmul.f32.gmra.mxu0 %v425
    %v506 = vpop.f32.mrf.mxu0
    %v507 = vadd.f32 %v484, %v506
    %508 = vmatmul.f32.gmra.mxu0 %v426
    %v509 = vpop.f32.mrf.mxu0
    %v510 = vadd.f32 %v487, %v509
    %511 = vdwg.mxu0
    %v512 = vld [vmem:[#allocation9 + $0x100] sm:$0xff]
    %v513 = vld [vmem:[#allocation9 + $0x108] sm:$0xff]
    %v514 = vld [vmem:[#allocation9 + $0x110] sm:$0xff]
    %v515 = vld [vmem:[#allocation9 + $0x118] sm:$0xff]
    %v516 = vld [vmem:[#allocation9 + $0x120] sm:$0xff]
    %v517 = vld [vmem:[#allocation9 + $0x128] sm:$0xff]
    %v518 = vld [vmem:[#allocation9 + $0x130] sm:$0xff]
    %v519 = vld [vmem:[#allocation9 + $0x138] sm:$0xff]
    %v520 = vld [vmem:[#allocation9 + $0x140] sm:$0xff]
    %v521 = vld [vmem:[#allocation9 + $0x148] sm:$0xff]
    %v522 = vld [vmem:[#allocation9 + $0x150] sm:$0xff]
    %v523 = vld [vmem:[#allocation9 + $0x158] sm:$0xff]
    %v524 = vld [vmem:[#allocation9 + $0x160] sm:$0xff]
    %v525 = vld [vmem:[#allocation9 + $0x168] sm:$0xff]
    %v526 = vld [vmem:[#allocation9 + $0x170] sm:$0xff]
    %v527 = vld [vmem:[#allocation9 + $0x178] sm:$0xff]
    %v528 = vrot.slane %v425, 2
    %v529 = vrot.slane %v426, 2
    %v530 = vsel %vm244, %v528, %v529
    %533 = vmatpush.msra.mxu0 %v527
    %534 = vmatpush.msra.mxu0 %v526
    %535 = vmatpush.msra.mxu0 %v525
    %536 = vmatpush.msra.mxu0 %v524
    %537 = vmatpush.msra.mxu0 %v523
    %538 = vmatpush.msra.mxu0 %v522
    %539 = vmatpush.msra.mxu0 %v521
    %540 = vmatpush.msra.mxu0 %v520
    %541 = vmatpush.msra.mxu0 %v519
    %542 = vmatpush.msra.mxu0 %v518
    %543 = vmatpush.msra.mxu0 %v517
    %544 = vmatpush.msra.mxu0 %v516
    %545 = vmatpush.msra.mxu0 %v515
    %546 = vmatpush.msra.mxu0 %v514
    %547 = vmatpush.msra.mxu0 %v513
    %548 = vmatpush.msra.mxu0 %v512
    %549 = vmatmul.f32.gmra.mxu0 %v530
    %v550 = vpop.f32.mrf.mxu0
    %v551 = vadd.f32 0.0, %v550
    %552 = vmatmul.f32.gmra.mxu0 %v529
    %v553 = vpop.f32.mrf.mxu0
    %v554 = vadd.f32 0.0, %v553
    %555 = vdwg.mxu0
    %v556 = vadd.f32 %v507, %v551
    %v557 = vadd.f32 %v510, %v554
    %v558 = vld [vmem:[%s7] sm:$0x1]
    %v560 = vperm.slane %v558, 0
    %v562 = vadd.f32 %v556, %v560
    %v563 = vadd.f32 %v557, %v560
    %v564 = vmax.f32 %v562, 0.0
    %v565 = vmax.f32 %v563, 0.0
    %v566 = vld [vmem:[#allocation10] sm:$0xff]
    %v567 = vld [vmem:[#allocation10 + $0x8] sm:$0xff]
    %v568 = vld [vmem:[#allocation10 + $0x10] sm:$0xff]
    %v569 = vld [vmem:[#allocation10 + $0x18] sm:$0xff]
    %v570 = vld [vmem:[#allocation10 + $0x20] sm:$0xff]
    %v571 = vld [vmem:[#allocation10 + $0x28] sm:$0xff]
    %v572 = vld [vmem:[#allocation10 + $0x30] sm:$0xff]
    %v573 = vld [vmem:[#allocation10 + $0x38] sm:$0xff]
    %v574 = vld [vmem:[#allocation10 + $0x40] sm:$0xff]
    %v575 = vld [vmem:[#allocation10 + $0x48] sm:$0xff]
    %v576 = vld [vmem:[#allocation10 + $0x50] sm:$0xff]
    %v577 = vld [vmem:[#allocation10 + $0x58] sm:$0xff]
    %v578 = vld [vmem:[#allocation10 + $0x60] sm:$0xff]
    %v579 = vld [vmem:[#allocation10 + $0x68] sm:$0xff]
    %v580 = vld [vmem:[#allocation10 + $0x70] sm:$0xff]
    %v581 = vld [vmem:[#allocation10 + $0x78] sm:$0xff]
    %v582 = vld [vmem:[#allocation10 + $0x80] sm:$0xff]
    %v583 = vld [vmem:[#allocation10 + $0x88] sm:$0xff]
    %v584 = vld [vmem:[#allocation10 + $0x90] sm:$0xff]
    %v585 = vld [vmem:[#allocation10 + $0x98] sm:$0xff]
    %v586 = vld [vmem:[#allocation10 + $0xa0] sm:$0xff]
    %v587 = vld [vmem:[#allocation10 + $0xa8] sm:$0xff]
    %v588 = vld [vmem:[#allocation10 + $0xb0] sm:$0xff]
    %v589 = vld [vmem:[#allocation10 + $0xb8] sm:$0xff]
    %v590 = vld [vmem:[#allocation10 + $0xc0] sm:$0xff]
    %v591 = vld [vmem:[#allocation10 + $0xc8] sm:$0xff]
    %v592 = vld [vmem:[#allocation10 + $0xd0] sm:$0xff]
    %v593 = vld [vmem:[#allocation10 + $0xd8] sm:$0xff]
    %v594 = vld [vmem:[#allocation10 + $0xe0] sm:$0xff]
    %v595 = vld [vmem:[#allocation10 + $0xe8] sm:$0xff]
    %v596 = vld [vmem:[#allocation10 + $0xf0] sm:$0xff]
    %v597 = vld [vmem:[#allocation10 + $0xf8] sm:$0xff]
    %v600 = vrot.slane %v564, 1
    %v601 = vrot.slane %v565, 1
    %v602 = vsel %vm177, %v600, %v601
    %604 = vmatpush.msra.mxu0 %v597
    %605 = vmatpush.msra.mxu0 %v596
    %606 = vmatpush.msra.mxu0 %v595
    %607 = vmatpush.msra.mxu0 %v594
    %608 = vmatpush.msra.mxu0 %v593
    %609 = vmatpush.msra.mxu0 %v592
    %610 = vmatpush.msra.mxu0 %v591
    %611 = vmatpush.msra.mxu0 %v590
    %612 = vmatpush.msra.mxu0 %v589
    %613 = vmatpush.msra.mxu0 %v588
    %614 = vmatpush.msra.mxu0 %v587
    %615 = vmatpush.msra.mxu0 %v586
    %616 = vmatpush.msra.mxu0 %v585
    %617 = vmatpush.msra.mxu0 %v584
    %618 = vmatpush.msra.mxu0 %v583
    %619 = vmatpush.msra.mxu0 %v582
    %620 = vmatmul.f32.gmra.mxu0 %v602
    %v621 = vpop.f32.mrf.mxu0
    %v622 = vadd.f32 0.0, %v621
    %623 = vdwg.mxu0
    %624 = vmatpush.msra.mxu0 %v581
    %625 = vmatpush.msra.mxu0 %v580
    %626 = vmatpush.msra.mxu0 %v579
    %627 = vmatpush.msra.mxu0 %v578
    %628 = vmatpush.msra.mxu0 %v577
    %629 = vmatpush.msra.mxu0 %v576
    %630 = vmatpush.msra.mxu0 %v575
    %631 = vmatpush.msra.mxu0 %v574
    %632 = vmatpush.msra.mxu0 %v573
    %633 = vmatpush.msra.mxu0 %v572
    %634 = vmatpush.msra.mxu0 %v571
    %635 = vmatpush.msra.mxu0 %v570
    %636 = vmatpush.msra.mxu0 %v569
    %637 = vmatpush.msra.mxu0 %v568
    %638 = vmatpush.msra.mxu0 %v567
    %639 = vmatpush.msra.mxu0 %v566
    %640 = vmatmul.f32.gmra.mxu0 %v564
    %v641 = vpop.f32.mrf.mxu0
    %v642 = vadd.f32 %v622, %v641
    %643 = vdwg.mxu0
    %v644 = vld [vmem:[#allocation10 + $0x100] sm:$0xff]
    %v645 = vld [vmem:[#allocation10 + $0x108] sm:$0xff]
    %v646 = vld [vmem:[#allocation10 + $0x110] sm:$0xff]
    %v647 = vld [vmem:[#allocation10 + $0x118] sm:$0xff]
    %v648 = vld [vmem:[#allocation10 + $0x120] sm:$0xff]
    %v649 = vld [vmem:[#allocation10 + $0x128] sm:$0xff]
    %v650 = vld [vmem:[#allocation10 + $0x130] sm:$0xff]
    %v651 = vld [vmem:[#allocation10 + $0x138] sm:$0xff]
    %v652 = vld [vmem:[#allocation10 + $0x140] sm:$0xff]
    %v653 = vld [vmem:[#allocation10 + $0x148] sm:$0xff]
    %v654 = vld [vmem:[#allocation10 + $0x150] sm:$0xff]
    %v655 = vld [vmem:[#allocation10 + $0x158] sm:$0xff]
    %v656 = vld [vmem:[#allocation10 + $0x160] sm:$0xff]
    %v657 = vld [vmem:[#allocation10 + $0x168] sm:$0xff]
    %v658 = vld [vmem:[#allocation10 + $0x170] sm:$0xff]
    %v659 = vld [vmem:[#allocation10 + $0x178] sm:$0xff]
    %v660 = vrot.slane %v564, 2
    %v661 = vrot.slane %v565, 2
    %v662 = vsel %vm244, %v660, %v661
    %664 = vmatpush.msra.mxu0 %v659
    %665 = vmatpush.msra.mxu0 %v658
    %666 = vmatpush.msra.mxu0 %v657
    %667 = vmatpush.msra.mxu0 %v656
    %668 = vmatpush.msra.mxu0 %v655
    %669 = vmatpush.msra.mxu0 %v654
    %670 = vmatpush.msra.mxu0 %v653
    %671 = vmatpush.msra.mxu0 %v652
    %672 = vmatpush.msra.mxu0 %v651
    %673 = vmatpush.msra.mxu0 %v650
    %674 = vmatpush.msra.mxu0 %v649
    %675 = vmatpush.msra.mxu0 %v648
    %676 = vmatpush.msra.mxu0 %v647
    %677 = vmatpush.msra.mxu0 %v646
    %678 = vmatpush.msra.mxu0 %v645
    %679 = vmatpush.msra.mxu0 %v644
    %680 = vmatmul.f32.gmra.mxu0 %v662
    %v681 = vpop.f32.mrf.mxu0
    %v682 = vadd.f32 0.0, %v681
    %683 = vdwg.mxu0
    %v684 = vadd.f32 %v642, %v682
    %v685 = vld [vmem:[%s8] sm:$0x1]
    %v687 = vperm.slane %v685, 0
    %v689 = vadd.f32 %v684, %v687
    %v690 = vmax.f32 %v689, 0.0
    %s691 = scalar_lea.vmem %s0, 16
    %v692 = vld [vmem:[%s691] sm:$0xff]
    %v693 = vld [vmem:[%s691 + $0x8] sm:$0xff]
    %v696 = vrot.slane %v692, 1
    %v697 = vrot.slane %v693, 1
    %v698 = vsel %vm177, %v696, %v697
    %v699 = vsel %vm181, %v698, 0
    %v701 = vsel %vm181, %v697, 0
    %703 = vmatpush.msra.mxu0 0.0
    %704 = vmatpush.msra.mxu0 0.0
    %705 = vmatpush.msra.mxu0 0.0
    %706 = vmatpush.msra.mxu0 0.0
    %707 = vmatpush.msra.mxu0 0.0
    %708 = vmatpush.msra.mxu0 0.0
    %709 = vmatpush.msra.mxu0 0.0
    %710 = vmatpush.msra.mxu0 0.0
    %711 = vmatpush.msra.mxu0 0.0
    %712 = vmatpush.msra.mxu0 0.0
    %713 = vmatpush.msra.mxu0 0.0
    %714 = vmatpush.msra.mxu0 0.0
    %715 = vmatpush.msra.mxu0 0.0
    %716 = vmatpush.msra.mxu0 0.0
    %717 = vmatpush.msra.mxu0 0.0
    %718 = vmatpush.msra.mxu0 %v188
    %719 = vmatmul.f32.gmra.mxu0 %v699
    %v720 = vpop.f32.mrf.mxu0
    %v721 = vadd.f32 0.0, %v720
    %722 = vmatmul.f32.gmra.mxu0 %v701
    %v723 = vpop.f32.mrf.mxu0
    %v724 = vadd.f32 0.0, %v723
    %725 = vdwg.mxu0
    %v726 = vsel %vm181, %v692, 0
    %v728 = vsel %vm181, %v693, 0
    %730 = vmatpush.msra.mxu0 0.0
    %731 = vmatpush.msra.mxu0 0.0
    %732 = vmatpush.msra.mxu0 0.0
    %733 = vmatpush.msra.mxu0 0.0
    %734 = vmatpush.msra.mxu0 0.0
    %735 = vmatpush.msra.mxu0 0.0
    %736 = vmatpush.msra.mxu0 0.0
    %737 = vmatpush.msra.mxu0 0.0
    %738 = vmatpush.msra.mxu0 0.0
    %739 = vmatpush.msra.mxu0 0.0
    %740 = vmatpush.msra.mxu0 0.0
    %741 = vmatpush.msra.mxu0 0.0
    %742 = vmatpush.msra.mxu0 0.0
    %743 = vmatpush.msra.mxu0 0.0
    %744 = vmatpush.msra.mxu0 0.0
    %745 = vmatpush.msra.mxu0 %v218
    %746 = vmatmul.f32.gmra.mxu0 %v726
    %v747 = vpop.f32.mrf.mxu0
    %v748 = vadd.f32 %v721, %v747
    %749 = vmatmul.f32.gmra.mxu0 %v728
    %v750 = vpop.f32.mrf.mxu0
    %v751 = vadd.f32 %v724, %v750
    %752 = vdwg.mxu0
    %v753 = vrot.slane %v692, 2
    %v754 = vrot.slane %v693, 2
    %v755 = vsel %vm244, %v753, %v754
    %v756 = vsel %vm181, %v755, 0
    %v758 = vsel %vm181, %v754, 0
    %760 = vmatpush.msra.mxu0 0.0
    %761 = vmatpush.msra.mxu0 0.0
    %762 = vmatpush.msra.mxu0 0.0
    %763 = vmatpush.msra.mxu0 0.0
    %764 = vmatpush.msra.mxu0 0.0
    %765 = vmatpush.msra.mxu0 0.0
    %766 = vmatpush.msra.mxu0 0.0
    %767 = vmatpush.msra.mxu0 0.0
    %768 = vmatpush.msra.mxu0 0.0
    %769 = vmatpush.msra.mxu0 0.0
    %770 = vmatpush.msra.mxu0 0.0
    %771 = vmatpush.msra.mxu0 0.0
    %772 = vmatpush.msra.mxu0 0.0
    %773 = vmatpush.msra.mxu0 0.0
    %774 = vmatpush.msra.mxu0 0.0
    %775 = vmatpush.msra.mxu0 %v253
    %776 = vmatmul.f32.gmra.mxu0 %v756
    %v777 = vpop.f32.mrf.mxu0
    %v778 = vadd.f32 0.0, %v777
    %779 = vmatmul.f32.gmra.mxu0 %v758
    %v780 = vpop.f32.mrf.mxu0
    %v781 = vadd.f32 0.0, %v780
    %782 = vdwg.mxu0
    %v783 = vadd.f32 %v748, %v778
    %v784 = vadd.f32 %v751, %v781
    %v785 = vadd.f32 %v783, %v282
    %v786 = vadd.f32 %v784, %v282
    %v787 = vmax.f32 %v785, 0.0
    %v788 = vmax.f32 %v786, 0.0
    %v791 = vrot.slane %v787, 1
    %v792 = vrot.slane %v788, 1
    %v793 = vsel %vm177, %v791, %v792
    %796 = vmatpush.msra.mxu0 %v319
    %797 = vmatpush.msra.mxu0 %v318
    %798 = vmatpush.msra.mxu0 %v317
    %799 = vmatpush.msra.mxu0 %v316
    %800 = vmatpush.msra.mxu0 %v315
    %801 = vmatpush.msra.mxu0 %v314
    %802 = vmatpush.msra.mxu0 %v313
    %803 = vmatpush.msra.mxu0 %v312
    %804 = vmatpush.msra.mxu0 %v311
    %805 = vmatpush.msra.mxu0 %v310
    %806 = vmatpush.msra.mxu0 %v309
    %807 = vmatpush.msra.mxu0 %v308
    %808 = vmatpush.msra.mxu0 %v307
    %809 = vmatpush.msra.mxu0 %v306
    %810 = vmatpush.msra.mxu0 %v305
    %811 = vmatpush.msra.mxu0 %v304
    %812 = vmatmul.f32.gmra.mxu0 %v793
    %v813 = vpop.f32.mrf.mxu0
    %v814 = vadd.f32 0.0, %v813
    %815 = vmatmul.f32.gmra.mxu0 %v792
    %v816 = vpop.f32.mrf.mxu0
    %v817 = vadd.f32 0.0, %v816
    %818 = vdwg.mxu0
    %819 = vmatpush.msra.mxu0 %v303
    %820 = vmatpush.msra.mxu0 %v302
    %821 = vmatpush.msra.mxu0 %v301
    %822 = vmatpush.msra.mxu0 %v300
    %823 = vmatpush.msra.mxu0 %v299
    %824 = vmatpush.msra.mxu0 %v298
    %825 = vmatpush.msra.mxu0 %v297
    %826 = vmatpush.msra.mxu0 %v296
    %827 = vmatpush.msra.mxu0 %v295
    %828 = vmatpush.msra.mxu0 %v294
    %829 = vmatpush.msra.mxu0 %v293
    %830 = vmatpush.msra.mxu0 %v292
    %831 = vmatpush.msra.mxu0 %v291
    %832 = vmatpush.msra.mxu0 %v290
    %833 = vmatpush.msra.mxu0 %v289
    %834 = vmatpush.msra.mxu0 %v288
    %835 = vmatmul.f32.gmra.mxu0 %v787
    %v836 = vpop.f32.mrf.mxu0
    %v837 = vadd.f32 %v814, %v836
    %838 = vmatmul.f32.gmra.mxu0 %v788
    %v839 = vpop.f32.mrf.mxu0
    %v840 = vadd.f32 %v817, %v839
    %841 = vdwg.mxu0
    %v842 = vrot.slane %v787, 2
    %v843 = vrot.slane %v788, 2
    %v844 = vsel %vm244, %v842, %v843
    %847 = vmatpush.msra.mxu0 %v388
    %848 = vmatpush.msra.mxu0 %v387
    %849 = vmatpush.msra.mxu0 %v386
    %850 = vmatpush.msra.mxu0 %v385
    %851 = vmatpush.msra.mxu0 %v384
    %852 = vmatpush.msra.mxu0 %v383
    %853 = vmatpush.msra.mxu0 %v382
    %854 = vmatpush.msra.mxu0 %v381
    %855 = vmatpush.msra.mxu0 %v380
    %856 = vmatpush.msra.mxu0 %v379
    %857 = vmatpush.msra.mxu0 %v378
    %858 = vmatpush.msra.mxu0 %v377
    %859 = vmatpush.msra.mxu0 %v376
    %860 = vmatpush.msra.mxu0 %v375
    %861 = vmatpush.msra.mxu0 %v374
    %862 = vmatpush.msra.mxu0 %v373
    %863 = vmatmul.f32.gmra.mxu0 %v844
    %v864 = vpop.f32.mrf.mxu0
    %v865 = vadd.f32 0.0, %v864
    %866 = vmatmul.f32.gmra.mxu0 %v843
    %v867 = vpop.f32.mrf.mxu0
    %v868 = vadd.f32 0.0, %v867
    %869 = vdwg.mxu0
    %v870 = vadd.f32 %v837, %v865
    %v871 = vadd.f32 %v840, %v868
    %v872 = vadd.f32 %v870, %v421
    %v873 = vadd.f32 %v871, %v421
    %v874 = vmax.f32 %v872, 0.0
    %v875 = vmax.f32 %v873, 0.0
    %v878 = vrot.slane %v874, 1
    %v879 = vrot.slane %v875, 1
    %v880 = vsel %vm177, %v878, %v879
    %883 = vmatpush.msra.mxu0 %v458
    %884 = vmatpush.msra.mxu0 %v457
    %885 = vmatpush.msra.mxu0 %v456
    %886 = vmatpush.msra.mxu0 %v455
    %887 = vmatpush.msra.mxu0 %v454
    %888 = vmatpush.msra.mxu0 %v453
    %889 = vmatpush.msra.mxu0 %v452
    %890 = vmatpush.msra.mxu0 %v451
    %891 = vmatpush.msra.mxu0 %v450
    %892 = vmatpush.msra.mxu0 %v449
    %893 = vmatpush.msra.mxu0 %v448
    %894 = vmatpush.msra.mxu0 %v447
    %895 = vmatpush.msra.mxu0 %v446
    %896 = vmatpush.msra.mxu0 %v445
    %897 = vmatpush.msra.mxu0 %v444
    %898 = vmatpush.msra.mxu0 %v443
    %899 = vmatmul.f32.gmra.mxu0 %v880
    %v900 = vpop.f32.mrf.mxu0
    %v901 = vadd.f32 0.0, %v900
    %902 = vmatmul.f32.gmra.mxu0 %v879
    %v903 = vpop.f32.mrf.mxu0
    %v904 = vadd.f32 0.0, %v903
    %905 = vdwg.mxu0
    %906 = vmatpush.msra.mxu0 %v442
    %907 = vmatpush.msra.mxu0 %v441
    %908 = vmatpush.msra.mxu0 %v440
    %909 = vmatpush.msra.mxu0 %v439
    %910 = vmatpush.msra.mxu0 %v438
    %911 = vmatpush.msra.mxu0 %v437
    %912 = vmatpush.msra.mxu0 %v436
    %913 = vmatpush.msra.mxu0 %v435
    %914 = vmatpush.msra.mxu0 %v434
    %915 = vmatpush.msra.mxu0 %v433
    %916 = vmatpush.msra.mxu0 %v432
    %917 = vmatpush.msra.mxu0 %v431
    %918 = vmatpush.msra.mxu0 %v430
    %919 = vmatpush.msra.mxu0 %v429
    %920 = vmatpush.msra.mxu0 %v428
    %921 = vmatpush.msra.mxu0 %v427
    %922 = vmatmul.f32.gmra.mxu0 %v874
    %v923 = vpop.f32.mrf.mxu0
    %v924 = vadd.f32 %v901, %v923
    %925 = vmatmul.f32.gmra.mxu0 %v875
    %v926 = vpop.f32.mrf.mxu0
    %v927 = vadd.f32 %v904, %v926
    %928 = vdwg.mxu0
    %v929 = vrot.slane %v874, 2
    %v930 = vrot.slane %v875, 2
    %v931 = vsel %vm244, %v929, %v930
    %934 = vmatpush.msra.mxu0 %v527
    %935 = vmatpush.msra.mxu0 %v526
    %936 = vmatpush.msra.mxu0 %v525
    %937 = vmatpush.msra.mxu0 %v524
    %938 = vmatpush.msra.mxu0 %v523
    %939 = vmatpush.msra.mxu0 %v522
    %940 = vmatpush.msra.mxu0 %v521
    %941 = vmatpush.msra.mxu0 %v520
    %942 = vmatpush.msra.mxu0 %v519
    %943 = vmatpush.msra.mxu0 %v518
    %944 = vmatpush.msra.mxu0 %v517
    %945 = vmatpush.msra.mxu0 %v516
    %946 = vmatpush.msra.mxu0 %v515
    %947 = vmatpush.msra.mxu0 %v514
    %948 = vmatpush.msra.mxu0 %v513
    %949 = vmatpush.msra.mxu0 %v512
    %950 = vmatmul.f32.gmra.mxu0 %v931
    %v951 = vpop.f32.mrf.mxu0
    %v952 = vadd.f32 0.0, %v951
    %953 = vmatmul.f32.gmra.mxu0 %v930
    %v954 = vpop.f32.mrf.mxu0
    %v955 = vadd.f32 0.0, %v954
    %956 = vdwg.mxu0
    %v957 = vadd.f32 %v924, %v952
    %v958 = vadd.f32 %v927, %v955
    %v959 = vadd.f32 %v957, %v560
    %v960 = vadd.f32 %v958, %v560
    %v961 = vmax.f32 %v959, 0.0
    %v962 = vmax.f32 %v960, 0.0
    %v965 = vrot.slane %v961, 1
    %v966 = vrot.slane %v962, 1
    %v967 = vsel %vm177, %v965, %v966
    %969 = vmatpush.msra.mxu0 %v597
    %970 = vmatpush.msra.mxu0 %v596
    %971 = vmatpush.msra.mxu0 %v595
    %972 = vmatpush.msra.mxu0 %v594
    %973 = vmatpush.msra.mxu0 %v593
    %974 = vmatpush.msra.mxu0 %v592
    %975 = vmatpush.msra.mxu0 %v591
    %976 = vmatpush.msra.mxu0 %v590
    %977 = vmatpush.msra.mxu0 %v589
    %978 = vmatpush.msra.mxu0 %v588
    %979 = vmatpush.msra.mxu0 %v587
    %980 = vmatpush.msra.mxu0 %v586
    %981 = vmatpush.msra.mxu0 %v585
    %982 = vmatpush.msra.mxu0 %v584
    %983 = vmatpush.msra.mxu0 %v583
    %984 = vmatpush.msra.mxu0 %v582
    %985 = vmatmul.f32.gmra.mxu0 %v967
    %v986 = vpop.f32.mrf.mxu0
    %v987 = vadd.f32 0.0, %v986
    %988 = vdwg.mxu0
    %989 = vmatpush.msra.mxu0 %v581
    %990 = vmatpush.msra.mxu0 %v580
    %991 = vmatpush.msra.mxu0 %v579
    %992 = vmatpush.msra.mxu0 %v578
    %993 = vmatpush.msra.mxu0 %v577
    %994 = vmatpush.msra.mxu0 %v576
    %995 = vmatpush.msra.mxu0 %v575
    %996 = vmatpush.msra.mxu0 %v574
    %997 = vmatpush.msra.mxu0 %v573
    %998 = vmatpush.msra.mxu0 %v572
    %999 = vmatpush.msra.mxu0 %v571
    %1000 = vmatpush.msra.mxu0 %v570
    %1001 = vmatpush.msra.mxu0 %v569
    %1002 = vmatpush.msra.mxu0 %v568
    %1003 = vmatpush.msra.mxu0 %v567
    %1004 = vmatpush.msra.mxu0 %v566
    %1005 = vmatmul.f32.gmra.mxu0 %v961
    %v1006 = vpop.f32.mrf.mxu0
    %v1007 = vadd.f32 %v987, %v1006
    %1008 = vdwg.mxu0
    %v1009 = vrot.slane %v961, 2
    %v1010 = vrot.slane %v962, 2
    %v1011 = vsel %vm244, %v1009, %v1010
    %1013 = vmatpush.msra.mxu0 %v659
    %1014 = vmatpush.msra.mxu0 %v658
    %1015 = vmatpush.msra.mxu0 %v657
    %1016 = vmatpush.msra.mxu0 %v656
    %1017 = vmatpush.msra.mxu0 %v655
    %1018 = vmatpush.msra.mxu0 %v654
    %1019 = vmatpush.msra.mxu0 %v653
    %1020 = vmatpush.msra.mxu0 %v652
    %1021 = vmatpush.msra.mxu0 %v651
    %1022 = vmatpush.msra.mxu0 %v650
    %1023 = vmatpush.msra.mxu0 %v649
    %1024 = vmatpush.msra.mxu0 %v648
    %1025 = vmatpush.msra.mxu0 %v647
    %1026 = vmatpush.msra.mxu0 %v646
    %1027 = vmatpush.msra.mxu0 %v645
    %1028 = vmatpush.msra.mxu0 %v644
    %1029 = vmatmul.f32.gmra.mxu0 %v1011
    %v1030 = vpop.f32.mrf.mxu0
    %v1031 = vadd.f32 0.0, %v1030
    %1032 = vdwg.mxu0
    %v1033 = vadd.f32 %v1007, %v1031
    %v1034 = vadd.f32 %v1033, %v687
    %v1035 = vmax.f32 %v1034, 0.0
    %v1037 = vrot.slane %v1035, 7
    %v1040 = vrot.slane %v690, 7
    %v1042 = vrot.slane %v1035, 6
    %v1044 = vrot.slane %v690, 6
    %v1046 = vrot.slane %v1035, 5
    %v1048 = vrot.slane %v690, 5
    %v1050 = vrot.slane %v1035, 4
    %v1052 = vrot.slane %v690, 4
    %v1054 = vrot.slane %v1035, 3
    %v1056 = vrot.slane %v690, 3
    %v1058 = vrot.slane %v1035, 2
    %v1060 = vrot.slane %v690, 2
    %v1062 = vrot.slane %v1035, 1
    %v1064 = vrot.slane %v690, 1
    %vm1066 = vcmask 1040384
    %v1067 = vsel %vm1066, %v690, %v1037
    %vm1068 = vcmask 1041408
    %v1069 = vsel %vm1068, %v1067, %v1040
    %vm1070 = vcmask 1042432
    %v1071 = vsel %vm1070, %v1069, %v1042
    %v1072 = vsel %vm186, %v1071, %v1044
    %vm1073 = vcmask 1044480
    %v1074 = vsel %vm1073, %v1072, %v1046
    %v1075 = vsel %vm244, %v1074, %v1048
    %v1076 = vsel %vm177, %v1075, %v1050
    %v1077 = vsel %vm1066, %v1052, %v1054
    %v1078 = vsel %vm1068, %v1077, %v1056
    %v1079 = vsel %vm1070, %v1078, %v1058
    %v1080 = vsel %vm186, %v1079, %v1060
    %v1081 = vsel %vm1073, %v1080, %v1062
    %v1082 = vsel %vm244, %v1081, %v1064
    %v1083 = vsel %vm177, %v1082, %v1035
    %v1084 = vld [vmem:[#allocation12] sm:$0xff]
    %v1085 = vld [vmem:[#allocation12 + $0x8] sm:$0xff]
    %v1086 = vld [vmem:[#allocation12 + $0x10] sm:$0xff]
    %v1087 = vld [vmem:[#allocation12 + $0x18] sm:$0xff]
    %v1088 = vld [vmem:[#allocation12 + $0x20] sm:$0xff]
    %v1089 = vld [vmem:[#allocation12 + $0x28] sm:$0xff]
    %v1090 = vld [vmem:[#allocation12 + $0x30] sm:$0xff]
    %v1091 = vld [vmem:[#allocation12 + $0x38] sm:$0xff]
    %v1092 = vld [vmem:[#allocation12 + $0x40] sm:$0xff]
    %v1093 = vld [vmem:[#allocation12 + $0x48] sm:$0xff]
    %v1094 = vld [vmem:[#allocation12 + $0x50] sm:$0xff]
    %v1095 = vld [vmem:[#allocation12 + $0x58] sm:$0xff]
    %v1096 = vld [vmem:[#allocation12 + $0x60] sm:$0xff]
    %v1097 = vld [vmem:[#allocation12 + $0x68] sm:$0xff]
    %v1098 = vld [vmem:[#allocation12 + $0x70] sm:$0xff]
    %v1099 = vld [vmem:[#allocation12 + $0x78] sm:$0xff]
    %v1100 = vld [vmem:[%s11] sm:$0x1]
    %v1102 = vperm.slane %v1100, 0
    %1104 = vmatpush.msra.mxu0 %v1099
    %1105 = vmatpush.msra.mxu0 %v1098
    %1106 = vmatpush.msra.mxu0 %v1097
    %1107 = vmatpush.msra.mxu0 %v1096
    %1108 = vmatpush.msra.mxu0 %v1095
    %1109 = vmatpush.msra.mxu0 %v1094
    %1110 = vmatpush.msra.mxu0 %v1093
    %1111 = vmatpush.msra.mxu0 %v1092
    %1112 = vmatpush.msra.mxu0 %v1091
    %1113 = vmatpush.msra.mxu0 %v1090
    %1114 = vmatpush.msra.mxu0 %v1089
    %1115 = vmatpush.msra.mxu0 %v1088
    %1116 = vmatpush.msra.mxu0 %v1087
    %1117 = vmatpush.msra.mxu0 %v1086
    %1118 = vmatpush.msra.mxu0 %v1085
    %1119 = vmatpush.msra.mxu0 %v1084
    %1120 = vmatmul.f32.gmra.mxu0 %v1076
    %v1121 = vpop.f32.mrf.mxu0
    %v1122 = vadd.f32 %v1102, %v1121
    %1123 = vmatmul.f32.gmra.mxu0 %v1083
    %v1124 = vpop.f32.mrf.mxu0
    %v1125 = vadd.f32 %v1102, %v1124
    %1126 = vdwg.mxu0
    %v1127 = vld [vmem:[%s10] sm:$0xff]
    %v1128 = vld [vmem:[%s10 + $0x8] sm:$0xff]
    %v1129 = vld [vmem:[%s10 + $0x10] sm:$0xff]
    %v1130 = vld [vmem:[%s10 + $0x18] sm:$0xff]
    %vm1131 = vcmask 261120
    %v1133 = vsel %vm1131, 0.0, 0
    %1135 = vmatpush.msra.mxu0 0.0
    %1136 = vmatpush.msra.mxu0 0.0
    %1137 = vmatpush.msra.mxu0 0.0
    %1138 = vmatpush.msra.mxu0 0.0
    %1139 = vmatpush.msra.mxu0 0.0
    %1140 = vmatpush.msra.mxu0 0.0
    %1141 = vmatpush.msra.mxu0 0.0
    %1142 = vmatpush.msra.mxu0 0.0
    %1143 = vmatpush.msra.mxu0 0.0
    %1144 = vmatpush.msra.mxu0 0.0
    %1145 = vmatpush.msra.mxu0 0.0
    %1146 = vmatpush.msra.mxu0 0.0
    %1147 = vmatpush.msra.mxu0 %v1130
    %1148 = vmatpush.msra.mxu0 %v1129
    %1149 = vmatpush.msra.mxu0 %v1128
    %1150 = vmatpush.msra.mxu0 %v1127
    %1151 = vmatmul.f32.gmra.mxu0 %v1133
    %v1152 = vpop.f32.mrf.mxu0
    %v1153 = vadd.f32 0.0, %v1152
    %1154 = vdwg.mxu0
    %v1155 = vadd.f32 %v1122, %v1153
    %v1156 = vxor.u32 %v1155, 2147483648
    %v1157 = vmul.f32 %v1156, 1.442695
    %v1158 = vpow.pop %v1157
    %v1159 = vadd.f32 %v1158, 1.0
    %v1160 = vrcp.pop %v1159
    %v1161 = vmul.f32 %v1159, %v1160
    %v1162 = vsub.f32 1.0, %v1161
    %v1163 = vmul.f32 %v1160, %v1162
    %v1164 = vadd.f32 %v1160, %v1163
    %vm1165 = vweird.f32 %v1159
    %vm1166 = vweird.f32 %v1160
    %vm1167 = vmor %vm1165, %vm1166
    %v1168 = vsel %vm1167, %v1160, %v1164
    %v1169 = vand.u32 2147483647, %v1159
    %vm1170 = vcmp.eq.f32.partialorder %v1169, 8.507059e+37
    %v1171 = vand.u32 %v1159, 2147483648
    %v1172 = vor.u32 1.1754944e-38, %v1171
    %v1173 = vsel %vm1170, %v1172, %v1168
    %v1174 = vmul.f32 1.0, %v1173
    %v1175 = vtanh.pop %v1155
    %v1176 = vmul.f32 %v1174, 0.0
    %1178 = vrot.lane.b32.xlu0 %v1175, 32
    %v1179 = vpop.permute.xlu0 %1178
    %v1181 = vmul.f32 %v1174, %v1179
    %1183 = vrot.lane.b32.xlu0 %v1181, 32
    %v1184 = vpop.permute.xlu0 %1183
    %v1186 = vadd.f32 %v1176, %v1184
    %v1187 = vtanh.pop %v1186
    %1189 = vrot.lane.b32.xlu0 %v1187, 32
    %v1190 = vpop.permute.xlu0 %1189
    %v1192 = vmul.f32 %v1174, %v1190
    %1194 = vrot.lane.b32.xlu0 %v1192, 64
    %v1195 = vpop.permute.xlu0 %1194
    %v1196 = vsel %vm1131, %v1195, 0
    %1198 = vmatpush.msra.mxu0 0.0
    %1199 = vmatpush.msra.mxu0 0.0
    %1200 = vmatpush.msra.mxu0 0.0
    %1201 = vmatpush.msra.mxu0 0.0
    %1202 = vmatpush.msra.mxu0 0.0
    %1203 = vmatpush.msra.mxu0 0.0
    %1204 = vmatpush.msra.mxu0 0.0
    %1205 = vmatpush.msra.mxu0 0.0
    %1206 = vmatpush.msra.mxu0 0.0
    %1207 = vmatpush.msra.mxu0 0.0
    %1208 = vmatpush.msra.mxu0 0.0
    %1209 = vmatpush.msra.mxu0 0.0
    %1210 = vmatpush.msra.mxu0 %v1130
    %1211 = vmatpush.msra.mxu0 %v1129
    %1212 = vmatpush.msra.mxu0 %v1128
    %1213 = vmatpush.msra.mxu0 %v1127
    %1214 = vmatmul.f32.gmra.mxu0 %v1196
    %v1215 = vpop.f32.mrf.mxu0
    %v1216 = vadd.f32 0.0, %v1215
    %1217 = vdwg.mxu0
    %v1219 = vrot.slane %v1216, 6
    %v1221 = vadd.f32 %v1122, %v1219
    %v1222 = vxor.u32 %v1221, 2147483648
    %v1223 = vmul.f32 %v1222, 1.442695
    %v1224 = vpow.pop %v1223
    %v1225 = vadd.f32 %v1224, 1.0
    %v1226 = vrcp.pop %v1225
    %v1227 = vmul.f32 %v1225, %v1226
    %v1228 = vsub.f32 1.0, %v1227
    %v1229 = vmul.f32 %v1226, %v1228
    %v1230 = vadd.f32 %v1226, %v1229
    %vm1231 = vweird.f32 %v1225
    %vm1232 = vweird.f32 %v1226
    %vm1233 = vmor %vm1231, %vm1232
    %v1234 = vsel %vm1233, %v1226, %v1230
    %v1235 = vand.u32 2147483647, %v1225
    %vm1236 = vcmp.eq.f32.partialorder %v1235, 8.507059e+37
    %v1237 = vand.u32 %v1225, 2147483648
    %v1238 = vor.u32 1.1754944e-38, %v1237
    %v1239 = vsel %vm1236, %v1238, %v1234
    %v1240 = vmul.f32 1.0, %v1239
    %v1241 = vtanh.pop %v1221
    %v1243 = vrot.slane %v1186, 6
    %v1245 = vmul.f32 %v1240, %v1243
    %1247 = vrot.lane.b32.xlu0 %v1241, 32
    %v1248 = vpop.permute.xlu0 %1247
    %v1250 = vmul.f32 %v1240, %v1248
    %1252 = vrot.lane.b32.xlu0 %v1250, 32
    %v1253 = vpop.permute.xlu0 %1252
    %v1255 = vadd.f32 %v1245, %v1253
    %v1256 = vtanh.pop %v1255
    %1258 = vrot.lane.b32.xlu0 %v1256, 32
    %v1259 = vpop.permute.xlu0 %1258
    %v1261 = vmul.f32 %v1240, %v1259
    %v1263 = vrot.slane %v1261, 2
    %1264 = vrot.lane.b32.xlu0 %v1263, 64
    %v1265 = vpop.permute.xlu0 %1264
    %v1266 = vsel %vm1131, %v1265, 0
    %1268 = vmatpush.msra.mxu0 0.0
    %1269 = vmatpush.msra.mxu0 0.0
    %1270 = vmatpush.msra.mxu0 0.0
    %1271 = vmatpush.msra.mxu0 0.0
    %1272 = vmatpush.msra.mxu0 0.0
    %1273 = vmatpush.msra.mxu0 0.0
    %1274 = vmatpush.msra.mxu0 0.0
    %1275 = vmatpush.msra.mxu0 0.0
    %1276 = vmatpush.msra.mxu0 0.0
    %1277 = vmatpush.msra.mxu0 0.0
    %1278 = vmatpush.msra.mxu0 0.0
    %1279 = vmatpush.msra.mxu0 0.0
    %1280 = vmatpush.msra.mxu0 %v1130
    %1281 = vmatpush.msra.mxu0 %v1129
    %1282 = vmatpush.msra.mxu0 %v1128
    %1283 = vmatpush.msra.mxu0 %v1127
    %1284 = vmatmul.f32.gmra.mxu0 %v1266
    %v1285 = vpop.f32.mrf.mxu0
    %v1286 = vadd.f32 0.0, %v1285
    %1287 = vdwg.mxu0
    %v1289 = vrot.slane %v1286, 4
    %v1291 = vadd.f32 %v1122, %v1289
    %v1292 = vxor.u32 %v1291, 2147483648
    %v1293 = vmul.f32 %v1292, 1.442695
    %v1294 = vpow.pop %v1293
    %v1295 = vadd.f32 %v1294, 1.0
    %v1296 = vrcp.pop %v1295
    %v1297 = vmul.f32 %v1295, %v1296
    %v1298 = vsub.f32 1.0, %v1297
    %v1299 = vmul.f32 %v1296, %v1298
    %v1300 = vadd.f32 %v1296, %v1299
    %vm1301 = vweird.f32 %v1295
    %vm1302 = vweird.f32 %v1296
    %vm1303 = vmor %vm1301, %vm1302
    %v1304 = vsel %vm1303, %v1296, %v1300
    %v1305 = vand.u32 2147483647, %v1295
    %vm1306 = vcmp.eq.f32.partialorder %v1305, 8.507059e+37
    %v1307 = vand.u32 %v1295, 2147483648
    %v1308 = vor.u32 1.1754944e-38, %v1307
    %v1309 = vsel %vm1306, %v1308, %v1304
    %v1310 = vmul.f32 1.0, %v1309
    %v1311 = vtanh.pop %v1291
    %v1313 = vrot.slane %v1255, 6
    %v1315 = vmul.f32 %v1310, %v1313
    %1317 = vrot.lane.b32.xlu0 %v1311, 32
    %v1318 = vpop.permute.xlu0 %1317
    %v1320 = vmul.f32 %v1310, %v1318
    %1322 = vrot.lane.b32.xlu0 %v1320, 32
    %v1323 = vpop.permute.xlu0 %1322
    %v1325 = vadd.f32 %v1315, %v1323
    %v1326 = vtanh.pop %v1325
    %1328 = vrot.lane.b32.xlu0 %v1326, 32
    %v1329 = vpop.permute.xlu0 %1328
    %v1331 = vmul.f32 %v1310, %v1329
    %v1333 = vrot.slane %v1331, 4
    %1334 = vrot.lane.b32.xlu0 %v1333, 64
    %v1335 = vpop.permute.xlu0 %1334
    %v1336 = vsel %vm1131, %v1335, 0
    %1338 = vmatpush.msra.mxu0 0.0
    %1339 = vmatpush.msra.mxu0 0.0
    %1340 = vmatpush.msra.mxu0 0.0
    %1341 = vmatpush.msra.mxu0 0.0
    %1342 = vmatpush.msra.mxu0 0.0
    %1343 = vmatpush.msra.mxu0 0.0
    %1344 = vmatpush.msra.mxu0 0.0
    %1345 = vmatpush.msra.mxu0 0.0
    %1346 = vmatpush.msra.mxu0 0.0
    %1347 = vmatpush.msra.mxu0 0.0
    %1348 = vmatpush.msra.mxu0 0.0
    %1349 = vmatpush.msra.mxu0 0.0
    %1350 = vmatpush.msra.mxu0 %v1130
    %1351 = vmatpush.msra.mxu0 %v1129
    %1352 = vmatpush.msra.mxu0 %v1128
    %1353 = vmatpush.msra.mxu0 %v1127
    %1354 = vmatmul.f32.gmra.mxu0 %v1336
    %v1355 = vpop.f32.mrf.mxu0
    %v1356 = vadd.f32 0.0, %v1355
    %1357 = vdwg.mxu0
    %v1359 = vrot.slane %v1356, 2
    %v1361 = vadd.f32 %v1122, %v1359
    %v1362 = vxor.u32 %v1361, 2147483648
    %v1363 = vmul.f32 %v1362, 1.442695
    %v1364 = vpow.pop %v1363
    %v1365 = vadd.f32 %v1364, 1.0
    %v1366 = vrcp.pop %v1365
    %v1367 = vmul.f32 %v1365, %v1366
    %v1368 = vsub.f32 1.0, %v1367
    %v1369 = vmul.f32 %v1366, %v1368
    %v1370 = vadd.f32 %v1366, %v1369
    %vm1371 = vweird.f32 %v1365
    %vm1372 = vweird.f32 %v1366
    %vm1373 = vmor %vm1371, %vm1372
    %v1374 = vsel %vm1373, %v1366, %v1370
    %v1375 = vand.u32 2147483647, %v1365
    %vm1376 = vcmp.eq.f32.partialorder %v1375, 8.507059e+37
    %v1377 = vand.u32 %v1365, 2147483648
    %v1378 = vor.u32 1.1754944e-38, %v1377
    %v1379 = vsel %vm1376, %v1378, %v1374
    %v1380 = vmul.f32 1.0, %v1379
    %v1381 = vtanh.pop %v1361
    %v1383 = vrot.slane %v1325, 6
    %v1385 = vmul.f32 %v1380, %v1383
    %1387 = vrot.lane.b32.xlu0 %v1381, 32
    %v1388 = vpop.permute.xlu0 %1387
    %v1390 = vmul.f32 %v1380, %v1388
    %1392 = vrot.lane.b32.xlu0 %v1390, 32
    %v1393 = vpop.permute.xlu0 %1392
    %v1395 = vadd.f32 %v1385, %v1393
    %v1396 = vtanh.pop %v1395
    %1398 = vrot.lane.b32.xlu0 %v1396, 32
    %v1399 = vpop.permute.xlu0 %1398
    %v1401 = vmul.f32 %v1380, %v1399
    %v1403 = vrot.slane %v1401, 6
    %1404 = vrot.lane.b32.xlu0 %v1403, 64
    %v1405 = vpop.permute.xlu0 %1404
    %v1406 = vsel %vm1131, %v1405, 0
    %1408 = vmatpush.msra.mxu0 0.0
    %1409 = vmatpush.msra.mxu0 0.0
    %1410 = vmatpush.msra.mxu0 0.0
    %1411 = vmatpush.msra.mxu0 0.0
    %1412 = vmatpush.msra.mxu0 0.0
    %1413 = vmatpush.msra.mxu0 0.0
    %1414 = vmatpush.msra.mxu0 0.0
    %1415 = vmatpush.msra.mxu0 0.0
    %1416 = vmatpush.msra.mxu0 0.0
    %1417 = vmatpush.msra.mxu0 0.0
    %1418 = vmatpush.msra.mxu0 0.0
    %1419 = vmatpush.msra.mxu0 0.0
    %1420 = vmatpush.msra.mxu0 %v1130
    %1421 = vmatpush.msra.mxu0 %v1129
    %1422 = vmatpush.msra.mxu0 %v1128
    %1423 = vmatpush.msra.mxu0 %v1127
    %1424 = vmatmul.f32.gmra.mxu0 %v1406
    %v1425 = vpop.f32.mrf.mxu0
    %v1426 = vadd.f32 0.0, %v1425
    %1427 = vdwg.mxu0
    %v1428 = vadd.f32 %v1125, %v1426
    %v1429 = vxor.u32 %v1428, 2147483648
    %v1430 = vmul.f32 %v1429, 1.442695
    %v1431 = vpow.pop %v1430
    %v1432 = vadd.f32 %v1431, 1.0
    %v1433 = vrcp.pop %v1432
    %v1434 = vmul.f32 %v1432, %v1433
    %v1435 = vsub.f32 1.0, %v1434
    %v1436 = vmul.f32 %v1433, %v1435
    %v1437 = vadd.f32 %v1433, %v1436
    %vm1438 = vweird.f32 %v1432
    %vm1439 = vweird.f32 %v1433
    %vm1440 = vmor %vm1438, %vm1439
    %v1441 = vsel %vm1440, %v1433, %v1437
    %v1442 = vand.u32 2147483647, %v1432
    %vm1443 = vcmp.eq.f32.partialorder %v1442, 8.507059e+37
    %v1444 = vand.u32 %v1432, 2147483648
    %v1445 = vor.u32 1.1754944e-38, %v1444
    %v1446 = vsel %vm1443, %v1445, %v1441
    %v1447 = vmul.f32 1.0, %v1446
    %v1448 = vtanh.pop %v1428
    %v1450 = vrot.slane %v1395, 6
    %v1452 = vmul.f32 %v1447, %v1450
    %1454 = vrot.lane.b32.xlu0 %v1448, 32
    %v1455 = vpop.permute.xlu0 %1454
    %v1457 = vmul.f32 %v1447, %v1455
    %1459 = vrot.lane.b32.xlu0 %v1457, 32
    %v1460 = vpop.permute.xlu0 %1459
    %v1462 = vadd.f32 %v1452, %v1460
    %v1463 = vtanh.pop %v1462
    %1465 = vrot.lane.b32.xlu0 %v1463, 32
    %v1466 = vpop.permute.xlu0 %1465
    %v1468 = vmul.f32 %v1447, %v1466
    %1470 = vrot.lane.b32.xlu0 %v1468, 64
    %v1471 = vpop.permute.xlu0 %1470
    %v1472 = vsel %vm1131, %v1471, 0
    %1474 = vmatpush.msra.mxu0 0.0
    %1475 = vmatpush.msra.mxu0 0.0
    %1476 = vmatpush.msra.mxu0 0.0
    %1477 = vmatpush.msra.mxu0 0.0
    %1478 = vmatpush.msra.mxu0 0.0
    %1479 = vmatpush.msra.mxu0 0.0
    %1480 = vmatpush.msra.mxu0 0.0
    %1481 = vmatpush.msra.mxu0 0.0
    %1482 = vmatpush.msra.mxu0 0.0
    %1483 = vmatpush.msra.mxu0 0.0
    %1484 = vmatpush.msra.mxu0 0.0
    %1485 = vmatpush.msra.mxu0 0.0
    %1486 = vmatpush.msra.mxu0 %v1130
    %1487 = vmatpush.msra.mxu0 %v1129
    %1488 = vmatpush.msra.mxu0 %v1128
    %1489 = vmatpush.msra.mxu0 %v1127
    %1490 = vmatmul.f32.gmra.mxu0 %v1472
    %v1491 = vpop.f32.mrf.mxu0
    %v1492 = vadd.f32 0.0, %v1491
    %1493 = vdwg.mxu0
    %v1495 = vrot.slane %v1492, 6
    %v1497 = vadd.f32 %v1125, %v1495
    %v1498 = vxor.u32 %v1497, 2147483648
    %v1499 = vmul.f32 %v1498, 1.442695
    %v1500 = vpow.pop %v1499
    %v1501 = vadd.f32 %v1500, 1.0
    %v1502 = vrcp.pop %v1501
    %v1503 = vmul.f32 %v1501, %v1502
    %v1504 = vsub.f32 1.0, %v1503
    %v1505 = vmul.f32 %v1502, %v1504
    %v1506 = vadd.f32 %v1502, %v1505
    %vm1507 = vweird.f32 %v1501
    %vm1508 = vweird.f32 %v1502
    %vm1509 = vmor %vm1507, %vm1508
    %v1510 = vsel %vm1509, %v1502, %v1506
    %v1511 = vand.u32 2147483647, %v1501
    %vm1512 = vcmp.eq.f32.partialorder %v1511, 8.507059e+37
    %v1513 = vand.u32 %v1501, 2147483648
    %v1514 = vor.u32 1.1754944e-38, %v1513
    %v1515 = vsel %vm1512, %v1514, %v1510
    %v1516 = vmul.f32 1.0, %v1515
    %v1517 = vtanh.pop %v1497
    %v1519 = vrot.slane %v1462, 6
    %v1521 = vmul.f32 %v1516, %v1519
    %1523 = vrot.lane.b32.xlu0 %v1517, 32
    %v1524 = vpop.permute.xlu0 %1523
    %v1526 = vmul.f32 %v1516, %v1524
    %1528 = vrot.lane.b32.xlu0 %v1526, 32
    %v1529 = vpop.permute.xlu0 %1528
    %v1531 = vadd.f32 %v1521, %v1529
    %v1532 = vtanh.pop %v1531
    %1534 = vrot.lane.b32.xlu0 %v1532, 32
    %v1535 = vpop.permute.xlu0 %1534
    %v1537 = vmul.f32 %v1516, %v1535
    %v1539 = vrot.slane %v1537, 2
    %1540 = vrot.lane.b32.xlu0 %v1539, 64
    %v1541 = vpop.permute.xlu0 %1540
    %v1542 = vsel %vm1131, %v1541, 0
    %1544 = vmatpush.msra.mxu0 0.0
    %1545 = vmatpush.msra.mxu0 0.0
    %1546 = vmatpush.msra.mxu0 0.0
    %1547 = vmatpush.msra.mxu0 0.0
    %1548 = vmatpush.msra.mxu0 0.0
    %1549 = vmatpush.msra.mxu0 0.0
    %1550 = vmatpush.msra.mxu0 0.0
    %1551 = vmatpush.msra.mxu0 0.0
    %1552 = vmatpush.msra.mxu0 0.0
    %1553 = vmatpush.msra.mxu0 0.0
    %1554 = vmatpush.msra.mxu0 0.0
    %1555 = vmatpush.msra.mxu0 0.0
    %1556 = vmatpush.msra.mxu0 %v1130
    %1557 = vmatpush.msra.mxu0 %v1129
    %1558 = vmatpush.msra.mxu0 %v1128
    %1559 = vmatpush.msra.mxu0 %v1127
    %1560 = vmatmul.f32.gmra.mxu0 %v1542
    %v1561 = vpop.f32.mrf.mxu0
    %v1562 = vadd.f32 0.0, %v1561
    %1563 = vdwg.mxu0
    %v1565 = vrot.slane %v1562, 4
    %v1567 = vadd.f32 %v1125, %v1565
    %v1568 = vxor.u32 %v1567, 2147483648
    %v1569 = vmul.f32 %v1568, 1.442695
    %v1570 = vpow.pop %v1569
    %v1571 = vadd.f32 %v1570, 1.0
    %v1572 = vrcp.pop %v1571
    %v1573 = vmul.f32 %v1571, %v1572
    %v1574 = vsub.f32 1.0, %v1573
    %v1575 = vmul.f32 %v1572, %v1574
    %v1576 = vadd.f32 %v1572, %v1575
    %vm1577 = vweird.f32 %v1571
    %vm1578 = vweird.f32 %v1572
    %vm1579 = vmor %vm1577, %vm1578
    %v1580 = vsel %vm1579, %v1572, %v1576
    %v1581 = vand.u32 2147483647, %v1571
    %vm1582 = vcmp.eq.f32.partialorder %v1581, 8.507059e+37
    %v1583 = vand.u32 %v1571, 2147483648
    %v1584 = vor.u32 1.1754944e-38, %v1583
    %v1585 = vsel %vm1582, %v1584, %v1580
    %v1586 = vmul.f32 1.0, %v1585
    %v1587 = vtanh.pop %v1567
    %v1589 = vrot.slane %v1531, 6
    %v1591 = vmul.f32 %v1586, %v1589
    %1593 = vrot.lane.b32.xlu0 %v1587, 32
    %v1594 = vpop.permute.xlu0 %1593
    %v1596 = vmul.f32 %v1586, %v1594
    %1598 = vrot.lane.b32.xlu0 %v1596, 32
    %v1599 = vpop.permute.xlu0 %1598
    %v1601 = vadd.f32 %v1591, %v1599
    %v1602 = vtanh.pop %v1601
    %1604 = vrot.lane.b32.xlu0 %v1602, 32
    %v1605 = vpop.permute.xlu0 %1604
    %v1607 = vmul.f32 %v1586, %v1605
    %v1609 = vrot.slane %v1607, 4
    %1610 = vrot.lane.b32.xlu0 %v1609, 64
    %v1611 = vpop.permute.xlu0 %1610
    %v1612 = vsel %vm1131, %v1611, 0
    %1614 = vmatpush.msra.mxu0 0.0
    %1615 = vmatpush.msra.mxu0 0.0
    %1616 = vmatpush.msra.mxu0 0.0
    %1617 = vmatpush.msra.mxu0 0.0
    %1618 = vmatpush.msra.mxu0 0.0
    %1619 = vmatpush.msra.mxu0 0.0
    %1620 = vmatpush.msra.mxu0 0.0
    %1621 = vmatpush.msra.mxu0 0.0
    %1622 = vmatpush.msra.mxu0 0.0
    %1623 = vmatpush.msra.mxu0 0.0
    %1624 = vmatpush.msra.mxu0 0.0
    %1625 = vmatpush.msra.mxu0 0.0
    %1626 = vmatpush.msra.mxu0 %v1130
    %1627 = vmatpush.msra.mxu0 %v1129
    %1628 = vmatpush.msra.mxu0 %v1128
    %1629 = vmatpush.msra.mxu0 %v1127
    %1630 = vmatmul.f32.gmra.mxu0 %v1612
    %v1631 = vpop.f32.mrf.mxu0
    %v1632 = vadd.f32 0.0, %v1631
    %1633 = vdwg.mxu0
    %v1635 = vrot.slane %v1632, 2
    %v1637 = vadd.f32 %v1125, %v1635
    %v1638 = vxor.u32 %v1637, 2147483648
    %v1639 = vmul.f32 %v1638, 1.442695
    %v1640 = vpow.pop %v1639
    %v1641 = vadd.f32 %v1640, 1.0
    %v1642 = vrcp.pop %v1641
    %v1643 = vmul.f32 %v1641, %v1642
    %v1644 = vsub.f32 1.0, %v1643
    %v1645 = vmul.f32 %v1642, %v1644
    %v1646 = vadd.f32 %v1642, %v1645
    %vm1647 = vweird.f32 %v1641
    %vm1648 = vweird.f32 %v1642
    %vm1649 = vmor %vm1647, %vm1648
    %v1650 = vsel %vm1649, %v1642, %v1646
    %v1651 = vand.u32 2147483647, %v1641
    %vm1652 = vcmp.eq.f32.partialorder %v1651, 8.507059e+37
    %v1653 = vand.u32 %v1641, 2147483648
    %v1654 = vor.u32 1.1754944e-38, %v1653
    %v1655 = vsel %vm1652, %v1654, %v1650
    %v1656 = vmul.f32 1.0, %v1655
    %v1657 = vtanh.pop %v1637
    %v1659 = vrot.slane %v1601, 6
    %v1661 = vmul.f32 %v1656, %v1659
    %1663 = vrot.lane.b32.xlu0 %v1657, 32
    %v1664 = vpop.permute.xlu0 %1663
    %v1666 = vmul.f32 %v1656, %v1664
    %1668 = vrot.lane.b32.xlu0 %v1666, 32
    %v1669 = vpop.permute.xlu0 %1668
    %v1671 = vadd.f32 %v1661, %v1669
    %v1672 = vtanh.pop %v1671
    %1674 = vrot.lane.b32.xlu0 %v1672, 32
    %v1675 = vpop.permute.xlu0 %1674
    %v1677 = vmul.f32 %v1656, %v1675
    %v1678 = vsel %vm1068, %v1192, %v1261
    %v1679 = vsel %vm186, %v1678, %v1331
    %v1680 = vsel %vm244, %v1679, %v1401
    %v1681 = vsel %vm1068, %v1468, %v1537
    %v1682 = vsel %vm186, %v1681, %v1607
    %v1683 = vsel %vm244, %v1682, %v1677
    %v1684 = vld [vmem:[%s12] sm:$0xff]
    %v1685 = vld [vmem:[%s12 + $0x8] sm:$0xff]
    %v1686 = vld [vmem:[%s12 + $0x10] sm:$0xff]
    %v1687 = vld [vmem:[%s12 + $0x18] sm:$0xff]
    %v1688 = vld [vmem:[%s14] sm:$0x1]
    %v1690 = vperm.slane %v1688, 0
    %1694 = vrot.lane.b32.xlu0 %v1680, 64
    %v1695 = vpop.permute.xlu0 %1694
    %1696 = vrot.lane.b32.xlu0 %v1683, 64
    %v1697 = vpop.permute.xlu0 %1696
    %v1698 = vsel %vm1131, %v1695, 0
    %v1700 = vsel %vm1131, %v1697, 0
    %1702 = vmatpush.msra.mxu0 0.0
    %1703 = vmatpush.msra.mxu0 0.0
    %1704 = vmatpush.msra.mxu0 0.0
    %1705 = vmatpush.msra.mxu0 0.0
    %1706 = vmatpush.msra.mxu0 0.0
    %1707 = vmatpush.msra.mxu0 0.0
    %1708 = vmatpush.msra.mxu0 0.0
    %1709 = vmatpush.msra.mxu0 0.0
    %1710 = vmatpush.msra.mxu0 0.0
    %1711 = vmatpush.msra.mxu0 0.0
    %1712 = vmatpush.msra.mxu0 0.0
    %1713 = vmatpush.msra.mxu0 0.0
    %1714 = vmatpush.msra.mxu0 %v1687
    %1715 = vmatpush.msra.mxu0 %v1686
    %1716 = vmatpush.msra.mxu0 %v1685
    %1717 = vmatpush.msra.mxu0 %v1684
    %1718 = vmatmul.f32.gmra.mxu0 %v1698
    %v1719 = vpop.f32.mrf.mxu0
    %v1720 = vadd.f32 %v1690, %v1719
    %1721 = vmatmul.f32.gmra.mxu0 %v1700
    %v1722 = vpop.f32.mrf.mxu0
    %v1723 = vadd.f32 %v1690, %v1722
    %1724 = vdwg.mxu0
    %v1725 = vld [vmem:[%s13] sm:$0xff]
    %v1726 = vld [vmem:[%s13 + $0x8] sm:$0xff]
    %v1727 = vld [vmem:[%s13 + $0x10] sm:$0xff]
    %v1728 = vld [vmem:[%s13 + $0x18] sm:$0xff]
    %1729 = vmatpush.msra.mxu0 0.0
    %1730 = vmatpush.msra.mxu0 0.0
    %1731 = vmatpush.msra.mxu0 0.0
    %1732 = vmatpush.msra.mxu0 0.0
    %1733 = vmatpush.msra.mxu0 0.0
    %1734 = vmatpush.msra.mxu0 0.0
    %1735 = vmatpush.msra.mxu0 0.0
    %1736 = vmatpush.msra.mxu0 0.0
    %1737 = vmatpush.msra.mxu0 0.0
    %1738 = vmatpush.msra.mxu0 0.0
    %1739 = vmatpush.msra.mxu0 0.0
    %1740 = vmatpush.msra.mxu0 0.0
    %1741 = vmatpush.msra.mxu0 %v1728
    %1742 = vmatpush.msra.mxu0 %v1727
    %1743 = vmatpush.msra.mxu0 %v1726
    %1744 = vmatpush.msra.mxu0 %v1725
    %1745 = vmatmul.f32.gmra.mxu0 %v1133
    %v1746 = vpop.f32.mrf.mxu0
    %v1747 = vadd.f32 0.0, %v1746
    %1748 = vdwg.mxu0
    %v1749 = vadd.f32 %v1720, %v1747
    %v1750 = vxor.u32 %v1749, 2147483648
    %v1751 = vmul.f32 %v1750, 1.442695
    %v1752 = vpow.pop %v1751
    %v1753 = vadd.f32 %v1752, 1.0
    %v1754 = vrcp.pop %v1753
    %v1755 = vmul.f32 %v1753, %v1754
    %v1756 = vsub.f32 1.0, %v1755
    %v1757 = vmul.f32 %v1754, %v1756
    %v1758 = vadd.f32 %v1754, %v1757
    %vm1759 = vweird.f32 %v1753
    %vm1760 = vweird.f32 %v1754
    %vm1761 = vmor %vm1759, %vm1760
    %v1762 = vsel %vm1761, %v1754, %v1758
    %v1763 = vand.u32 2147483647, %v1753
    %vm1764 = vcmp.eq.f32.partialorder %v1763, 8.507059e+37
    %v1765 = vand.u32 %v1753, 2147483648
    %v1766 = vor.u32 1.1754944e-38, %v1765
    %v1767 = vsel %vm1764, %v1766, %v1762
    %v1768 = vmul.f32 1.0, %v1767
    %v1769 = vtanh.pop %v1749
    %v1770 = vmul.f32 %v1768, 0.0
    %1772 = vrot.lane.b32.xlu0 %v1769, 32
    %v1773 = vpop.permute.xlu0 %1772
    %v1775 = vmul.f32 %v1768, %v1773
    %1777 = vrot.lane.b32.xlu0 %v1775, 32
    %v1778 = vpop.permute.xlu0 %1777
    %v1780 = vadd.f32 %v1770, %v1778
    %v1781 = vtanh.pop %v1780
    %1783 = vrot.lane.b32.xlu0 %v1781, 32
    %v1784 = vpop.permute.xlu0 %1783
    %v1786 = vmul.f32 %v1768, %v1784
    %1788 = vrot.lane.b32.xlu0 %v1786, 64
    %v1789 = vpop.permute.xlu0 %1788
    %v1790 = vsel %vm1131, %v1789, 0
    %1792 = vmatpush.msra.mxu0 0.0
    %1793 = vmatpush.msra.mxu0 0.0
    %1794 = vmatpush.msra.mxu0 0.0
    %1795 = vmatpush.msra.mxu0 0.0
    %1796 = vmatpush.msra.mxu0 0.0
    %1797 = vmatpush.msra.mxu0 0.0
    %1798 = vmatpush.msra.mxu0 0.0
    %1799 = vmatpush.msra.mxu0 0.0
    %1800 = vmatpush.msra.mxu0 0.0
    %1801 = vmatpush.msra.mxu0 0.0
    %1802 = vmatpush.msra.mxu0 0.0
    %1803 = vmatpush.msra.mxu0 0.0
    %1804 = vmatpush.msra.mxu0 %v1728
    %1805 = vmatpush.msra.mxu0 %v1727
    %1806 = vmatpush.msra.mxu0 %v1726
    %1807 = vmatpush.msra.mxu0 %v1725
    %1808 = vmatmul.f32.gmra.mxu0 %v1790
    %v1809 = vpop.f32.mrf.mxu0
    %v1810 = vadd.f32 0.0, %v1809
    %1811 = vdwg.mxu0
    %v1813 = vrot.slane %v1810, 6
    %v1815 = vadd.f32 %v1720, %v1813
    %v1816 = vxor.u32 %v1815, 2147483648
    %v1817 = vmul.f32 %v1816, 1.442695
    %v1818 = vpow.pop %v1817
    %v1819 = vadd.f32 %v1818, 1.0
    %v1820 = vrcp.pop %v1819
    %v1821 = vmul.f32 %v1819, %v1820
    %v1822 = vsub.f32 1.0, %v1821
    %v1823 = vmul.f32 %v1820, %v1822
    %v1824 = vadd.f32 %v1820, %v1823
    %vm1825 = vweird.f32 %v1819
    %vm1826 = vweird.f32 %v1820
    %vm1827 = vmor %vm1825, %vm1826
    %v1828 = vsel %vm1827, %v1820, %v1824
    %v1829 = vand.u32 2147483647, %v1819
    %vm1830 = vcmp.eq.f32.partialorder %v1829, 8.507059e+37
    %v1831 = vand.u32 %v1819, 2147483648
    %v1832 = vor.u32 1.1754944e-38, %v1831
    %v1833 = vsel %vm1830, %v1832, %v1828
    %v1834 = vmul.f32 1.0, %v1833
    %v1835 = vtanh.pop %v1815
    %v1837 = vrot.slane %v1780, 6
    %v1839 = vmul.f32 %v1834, %v1837
    %1841 = vrot.lane.b32.xlu0 %v1835, 32
    %v1842 = vpop.permute.xlu0 %1841
    %v1844 = vmul.f32 %v1834, %v1842
    %1846 = vrot.lane.b32.xlu0 %v1844, 32
    %v1847 = vpop.permute.xlu0 %1846
    %v1849 = vadd.f32 %v1839, %v1847
    %v1850 = vtanh.pop %v1849
    %1852 = vrot.lane.b32.xlu0 %v1850, 32
    %v1853 = vpop.permute.xlu0 %1852
    %v1855 = vmul.f32 %v1834, %v1853
    %v1857 = vrot.slane %v1855, 2
    %1858 = vrot.lane.b32.xlu0 %v1857, 64
    %v1859 = vpop.permute.xlu0 %1858
    %v1860 = vsel %vm1131, %v1859, 0
    %1862 = vmatpush.msra.mxu0 0.0
    %1863 = vmatpush.msra.mxu0 0.0
    %1864 = vmatpush.msra.mxu0 0.0
    %1865 = vmatpush.msra.mxu0 0.0
    %1866 = vmatpush.msra.mxu0 0.0
    %1867 = vmatpush.msra.mxu0 0.0
    %1868 = vmatpush.msra.mxu0 0.0
    %1869 = vmatpush.msra.mxu0 0.0
    %1870 = vmatpush.msra.mxu0 0.0
    %1871 = vmatpush.msra.mxu0 0.0
    %1872 = vmatpush.msra.mxu0 0.0
    %1873 = vmatpush.msra.mxu0 0.0
    %1874 = vmatpush.msra.mxu0 %v1728
    %1875 = vmatpush.msra.mxu0 %v1727
    %1876 = vmatpush.msra.mxu0 %v1726
    %1877 = vmatpush.msra.mxu0 %v1725
    %1878 = vmatmul.f32.gmra.mxu0 %v1860
    %v1879 = vpop.f32.mrf.mxu0
    %v1880 = vadd.f32 0.0, %v1879
    %1881 = vdwg.mxu0
    %v1883 = vrot.slane %v1880, 4
    %v1885 = vadd.f32 %v1720, %v1883
    %v1886 = vxor.u32 %v1885, 2147483648
    %v1887 = vmul.f32 %v1886, 1.442695
    %v1888 = vpow.pop %v1887
    %v1889 = vadd.f32 %v1888, 1.0
    %v1890 = vrcp.pop %v1889
    %v1891 = vmul.f32 %v1889, %v1890
    %v1892 = vsub.f32 1.0, %v1891
    %v1893 = vmul.f32 %v1890, %v1892
    %v1894 = vadd.f32 %v1890, %v1893
    %vm1895 = vweird.f32 %v1889
    %vm1896 = vweird.f32 %v1890
    %vm1897 = vmor %vm1895, %vm1896
    %v1898 = vsel %vm1897, %v1890, %v1894
    %v1899 = vand.u32 2147483647, %v1889
    %vm1900 = vcmp.eq.f32.partialorder %v1899, 8.507059e+37
    %v1901 = vand.u32 %v1889, 2147483648
    %v1902 = vor.u32 1.1754944e-38, %v1901
    %v1903 = vsel %vm1900, %v1902, %v1898
    %v1904 = vmul.f32 1.0, %v1903
    %v1905 = vtanh.pop %v1885
    %v1907 = vrot.slane %v1849, 6
    %v1909 = vmul.f32 %v1904, %v1907
    %1911 = vrot.lane.b32.xlu0 %v1905, 32
    %v1912 = vpop.permute.xlu0 %1911
    %v1914 = vmul.f32 %v1904, %v1912
    %1916 = vrot.lane.b32.xlu0 %v1914, 32
    %v1917 = vpop.permute.xlu0 %1916
    %v1919 = vadd.f32 %v1909, %v1917
    %v1920 = vtanh.pop %v1919
    %1922 = vrot.lane.b32.xlu0 %v1920, 32
    %v1923 = vpop.permute.xlu0 %1922
    %v1925 = vmul.f32 %v1904, %v1923
    %v1927 = vrot.slane %v1925, 4
    %1928 = vrot.lane.b32.xlu0 %v1927, 64
    %v1929 = vpop.permute.xlu0 %1928
    %v1930 = vsel %vm1131, %v1929, 0
    %1932 = vmatpush.msra.mxu0 0.0
    %1933 = vmatpush.msra.mxu0 0.0
    %1934 = vmatpush.msra.mxu0 0.0
    %1935 = vmatpush.msra.mxu0 0.0
    %1936 = vmatpush.msra.mxu0 0.0
    %1937 = vmatpush.msra.mxu0 0.0
    %1938 = vmatpush.msra.mxu0 0.0
    %1939 = vmatpush.msra.mxu0 0.0
    %1940 = vmatpush.msra.mxu0 0.0
    %1941 = vmatpush.msra.mxu0 0.0
    %1942 = vmatpush.msra.mxu0 0.0
    %1943 = vmatpush.msra.mxu0 0.0
    %1944 = vmatpush.msra.mxu0 %v1728
    %1945 = vmatpush.msra.mxu0 %v1727
    %1946 = vmatpush.msra.mxu0 %v1726
    %1947 = vmatpush.msra.mxu0 %v1725
    %1948 = vmatmul.f32.gmra.mxu0 %v1930
    %v1949 = vpop.f32.mrf.mxu0
    %v1950 = vadd.f32 0.0, %v1949
    %1951 = vdwg.mxu0
    %v1953 = vrot.slane %v1950, 2
    %v1955 = vadd.f32 %v1720, %v1953
    %v1956 = vxor.u32 %v1955, 2147483648
    %v1957 = vmul.f32 %v1956, 1.442695
    %v1958 = vpow.pop %v1957
    %v1959 = vadd.f32 %v1958, 1.0
    %v1960 = vrcp.pop %v1959
    %v1961 = vmul.f32 %v1959, %v1960
    %v1962 = vsub.f32 1.0, %v1961
    %v1963 = vmul.f32 %v1960, %v1962
    %v1964 = vadd.f32 %v1960, %v1963
    %vm1965 = vweird.f32 %v1959
    %vm1966 = vweird.f32 %v1960
    %vm1967 = vmor %vm1965, %vm1966
    %v1968 = vsel %vm1967, %v1960, %v1964
    %v1969 = vand.u32 2147483647, %v1959
    %vm1970 = vcmp.eq.f32.partialorder %v1969, 8.507059e+37
    %v1971 = vand.u32 %v1959, 2147483648
    %v1972 = vor.u32 1.1754944e-38, %v1971
    %v1973 = vsel %vm1970, %v1972, %v1968
    %v1974 = vmul.f32 1.0, %v1973
    %v1975 = vtanh.pop %v1955
    %v1977 = vrot.slane %v1919, 6
    %v1979 = vmul.f32 %v1974, %v1977
    %1981 = vrot.lane.b32.xlu0 %v1975, 32
    %v1982 = vpop.permute.xlu0 %1981
    %v1984 = vmul.f32 %v1974, %v1982
    %1986 = vrot.lane.b32.xlu0 %v1984, 32
    %v1987 = vpop.permute.xlu0 %1986
    %v1989 = vadd.f32 %v1979, %v1987
    %v1990 = vtanh.pop %v1989
    %1992 = vrot.lane.b32.xlu0 %v1990, 32
    %v1993 = vpop.permute.xlu0 %1992
    %v1995 = vmul.f32 %v1974, %v1993
    %v1997 = vrot.slane %v1995, 6
    %1998 = vrot.lane.b32.xlu0 %v1997, 64
    %v1999 = vpop.permute.xlu0 %1998
    %v2000 = vsel %vm1131, %v1999, 0
    %2002 = vmatpush.msra.mxu0 0.0
    %2003 = vmatpush.msra.mxu0 0.0
    %2004 = vmatpush.msra.mxu0 0.0
    %2005 = vmatpush.msra.mxu0 0.0
    %2006 = vmatpush.msra.mxu0 0.0
    %2007 = vmatpush.msra.mxu0 0.0
    %2008 = vmatpush.msra.mxu0 0.0
    %2009 = vmatpush.msra.mxu0 0.0
    %2010 = vmatpush.msra.mxu0 0.0
    %2011 = vmatpush.msra.mxu0 0.0
    %2012 = vmatpush.msra.mxu0 0.0
    %2013 = vmatpush.msra.mxu0 0.0
    %2014 = vmatpush.msra.mxu0 %v1728
    %2015 = vmatpush.msra.mxu0 %v1727
    %2016 = vmatpush.msra.mxu0 %v1726
    %2017 = vmatpush.msra.mxu0 %v1725
    %2018 = vmatmul.f32.gmra.mxu0 %v2000
    %v2019 = vpop.f32.mrf.mxu0
    %v2020 = vadd.f32 0.0, %v2019
    %2021 = vdwg.mxu0
    %v2022 = vadd.f32 %v1723, %v2020
    %v2023 = vxor.u32 %v2022, 2147483648
    %v2024 = vmul.f32 %v2023, 1.442695
    %v2025 = vpow.pop %v2024
    %v2026 = vadd.f32 %v2025, 1.0
    %v2027 = vrcp.pop %v2026
    %v2028 = vmul.f32 %v2026, %v2027
    %v2029 = vsub.f32 1.0, %v2028
    %v2030 = vmul.f32 %v2027, %v2029
    %v2031 = vadd.f32 %v2027, %v2030
    %vm2032 = vweird.f32 %v2026
    %vm2033 = vweird.f32 %v2027
    %vm2034 = vmor %vm2032, %vm2033
    %v2035 = vsel %vm2034, %v2027, %v2031
    %v2036 = vand.u32 2147483647, %v2026
    %vm2037 = vcmp.eq.f32.partialorder %v2036, 8.507059e+37
    %v2038 = vand.u32 %v2026, 2147483648
    %v2039 = vor.u32 1.1754944e-38, %v2038
    %v2040 = vsel %vm2037, %v2039, %v2035
    %v2041 = vmul.f32 1.0, %v2040
    %v2042 = vtanh.pop %v2022
    %v2044 = vrot.slane %v1989, 6
    %v2046 = vmul.f32 %v2041, %v2044
    %2048 = vrot.lane.b32.xlu0 %v2042, 32
    %v2049 = vpop.permute.xlu0 %2048
    %v2051 = vmul.f32 %v2041, %v2049
    %2053 = vrot.lane.b32.xlu0 %v2051, 32
    %v2054 = vpop.permute.xlu0 %2053
    %v2056 = vadd.f32 %v2046, %v2054
    %v2057 = vtanh.pop %v2056
    %2059 = vrot.lane.b32.xlu0 %v2057, 32
    %v2060 = vpop.permute.xlu0 %2059
    %v2062 = vmul.f32 %v2041, %v2060
    %2064 = vrot.lane.b32.xlu0 %v2062, 64
    %v2065 = vpop.permute.xlu0 %2064
    %v2066 = vsel %vm1131, %v2065, 0
    %2068 = vmatpush.msra.mxu0 0.0
    %2069 = vmatpush.msra.mxu0 0.0
    %2070 = vmatpush.msra.mxu0 0.0
    %2071 = vmatpush.msra.mxu0 0.0
    %2072 = vmatpush.msra.mxu0 0.0
    %2073 = vmatpush.msra.mxu0 0.0
    %2074 = vmatpush.msra.mxu0 0.0
    %2075 = vmatpush.msra.mxu0 0.0
    %2076 = vmatpush.msra.mxu0 0.0
    %2077 = vmatpush.msra.mxu0 0.0
    %2078 = vmatpush.msra.mxu0 0.0
    %2079 = vmatpush.msra.mxu0 0.0
    %2080 = vmatpush.msra.mxu0 %v1728
    %2081 = vmatpush.msra.mxu0 %v1727
    %2082 = vmatpush.msra.mxu0 %v1726
    %2083 = vmatpush.msra.mxu0 %v1725
    %2084 = vmatmul.f32.gmra.mxu0 %v2066
    %v2085 = vpop.f32.mrf.mxu0
    %v2086 = vadd.f32 0.0, %v2085
    %2087 = vdwg.mxu0
    %v2089 = vrot.slane %v2086, 6
    %v2091 = vadd.f32 %v1723, %v2089
    %v2092 = vxor.u32 %v2091, 2147483648
    %v2093 = vmul.f32 %v2092, 1.442695
    %v2094 = vpow.pop %v2093
    %v2095 = vadd.f32 %v2094, 1.0
    %v2096 = vrcp.pop %v2095
    %v2097 = vmul.f32 %v2095, %v2096
    %v2098 = vsub.f32 1.0, %v2097
    %v2099 = vmul.f32 %v2096, %v2098
    %v2100 = vadd.f32 %v2096, %v2099
    %vm2101 = vweird.f32 %v2095
    %vm2102 = vweird.f32 %v2096
    %vm2103 = vmor %vm2101, %vm2102
    %v2104 = vsel %vm2103, %v2096, %v2100
    %v2105 = vand.u32 2147483647, %v2095
    %vm2106 = vcmp.eq.f32.partialorder %v2105, 8.507059e+37
    %v2107 = vand.u32 %v2095, 2147483648
    %v2108 = vor.u32 1.1754944e-38, %v2107
    %v2109 = vsel %vm2106, %v2108, %v2104
    %v2110 = vmul.f32 1.0, %v2109
    %v2111 = vtanh.pop %v2091
    %v2113 = vrot.slane %v2056, 6
    %v2115 = vmul.f32 %v2110, %v2113
    %2117 = vrot.lane.b32.xlu0 %v2111, 32
    %v2118 = vpop.permute.xlu0 %2117
    %v2120 = vmul.f32 %v2110, %v2118
    %2122 = vrot.lane.b32.xlu0 %v2120, 32
    %v2123 = vpop.permute.xlu0 %2122
    %v2125 = vadd.f32 %v2115, %v2123
    %v2126 = vtanh.pop %v2125
    %2128 = vrot.lane.b32.xlu0 %v2126, 32
    %v2129 = vpop.permute.xlu0 %2128
    %v2131 = vmul.f32 %v2110, %v2129
    %v2133 = vrot.slane %v2131, 2
    %2134 = vrot.lane.b32.xlu0 %v2133, 64
    %v2135 = vpop.permute.xlu0 %2134
    %v2136 = vsel %vm1131, %v2135, 0
    %2138 = vmatpush.msra.mxu0 0.0
    %2139 = vmatpush.msra.mxu0 0.0
    %2140 = vmatpush.msra.mxu0 0.0
    %2141 = vmatpush.msra.mxu0 0.0
    %2142 = vmatpush.msra.mxu0 0.0
    %2143 = vmatpush.msra.mxu0 0.0
    %2144 = vmatpush.msra.mxu0 0.0
    %2145 = vmatpush.msra.mxu0 0.0
    %2146 = vmatpush.msra.mxu0 0.0
    %2147 = vmatpush.msra.mxu0 0.0
    %2148 = vmatpush.msra.mxu0 0.0
    %2149 = vmatpush.msra.mxu0 0.0
    %2150 = vmatpush.msra.mxu0 %v1728
    %2151 = vmatpush.msra.mxu0 %v1727
    %2152 = vmatpush.msra.mxu0 %v1726
    %2153 = vmatpush.msra.mxu0 %v1725
    %2154 = vmatmul.f32.gmra.mxu0 %v2136
    %v2155 = vpop.f32.mrf.mxu0
    %v2156 = vadd.f32 0.0, %v2155
    %2157 = vdwg.mxu0
    %v2159 = vrot.slane %v2156, 4
    %v2161 = vadd.f32 %v1723, %v2159
    %v2162 = vxor.u32 %v2161, 2147483648
    %v2163 = vmul.f32 %v2162, 1.442695
    %v2164 = vpow.pop %v2163
    %v2165 = vadd.f32 %v2164, 1.0
    %v2166 = vrcp.pop %v2165
    %v2167 = vmul.f32 %v2165, %v2166
    %v2168 = vsub.f32 1.0, %v2167
    %v2169 = vmul.f32 %v2166, %v2168
    %v2170 = vadd.f32 %v2166, %v2169
    %vm2171 = vweird.f32 %v2165
    %vm2172 = vweird.f32 %v2166
    %vm2173 = vmor %vm2171, %vm2172
    %v2174 = vsel %vm2173, %v2166, %v2170
    %v2175 = vand.u32 2147483647, %v2165
    %vm2176 = vcmp.eq.f32.partialorder %v2175, 8.507059e+37
    %v2177 = vand.u32 %v2165, 2147483648
    %v2178 = vor.u32 1.1754944e-38, %v2177
    %v2179 = vsel %vm2176, %v2178, %v2174
    %v2180 = vmul.f32 1.0, %v2179
    %v2181 = vtanh.pop %v2161
    %v2183 = vrot.slane %v2125, 6
    %v2185 = vmul.f32 %v2180, %v2183
    %2187 = vrot.lane.b32.xlu0 %v2181, 32
    %v2188 = vpop.permute.xlu0 %2187
    %v2190 = vmul.f32 %v2180, %v2188
    %2192 = vrot.lane.b32.xlu0 %v2190, 32
    %v2193 = vpop.permute.xlu0 %2192
    %v2195 = vadd.f32 %v2185, %v2193
    %v2196 = vtanh.pop %v2195
    %2198 = vrot.lane.b32.xlu0 %v2196, 32
    %v2199 = vpop.permute.xlu0 %2198
    %v2201 = vmul.f32 %v2180, %v2199
    %v2203 = vrot.slane %v2201, 4
    %2204 = vrot.lane.b32.xlu0 %v2203, 64
    %v2205 = vpop.permute.xlu0 %2204
    %v2206 = vsel %vm1131, %v2205, 0
    %2208 = vmatpush.msra.mxu0 0.0
    %2209 = vmatpush.msra.mxu0 0.0
    %2210 = vmatpush.msra.mxu0 0.0
    %2211 = vmatpush.msra.mxu0 0.0
    %2212 = vmatpush.msra.mxu0 0.0
    %2213 = vmatpush.msra.mxu0 0.0
    %2214 = vmatpush.msra.mxu0 0.0
    %2215 = vmatpush.msra.mxu0 0.0
    %2216 = vmatpush.msra.mxu0 0.0
    %2217 = vmatpush.msra.mxu0 0.0
    %2218 = vmatpush.msra.mxu0 0.0
    %2219 = vmatpush.msra.mxu0 0.0
    %2220 = vmatpush.msra.mxu0 %v1728
    %2221 = vmatpush.msra.mxu0 %v1727
    %2222 = vmatpush.msra.mxu0 %v1726
    %2223 = vmatpush.msra.mxu0 %v1725
    %2224 = vmatmul.f32.gmra.mxu0 %v2206
    %v2225 = vpop.f32.mrf.mxu0
    %v2226 = vadd.f32 0.0, %v2225
    %2227 = vdwg.mxu0
    %v2229 = vrot.slane %v2226, 2
    %v2231 = vadd.f32 %v1723, %v2229
    %v2232 = vxor.u32 %v2231, 2147483648
    %v2233 = vmul.f32 %v2232, 1.442695
    %v2234 = vpow.pop %v2233
    %v2235 = vadd.f32 %v2234, 1.0
    %v2236 = vrcp.pop %v2235
    %v2237 = vmul.f32 %v2235, %v2236
    %v2238 = vsub.f32 1.0, %v2237
    %v2239 = vmul.f32 %v2236, %v2238
    %v2240 = vadd.f32 %v2236, %v2239
    %vm2241 = vweird.f32 %v2235
    %vm2242 = vweird.f32 %v2236
    %vm2243 = vmor %vm2241, %vm2242
    %v2244 = vsel %vm2243, %v2236, %v2240
    %v2245 = vand.u32 2147483647, %v2235
    %vm2246 = vcmp.eq.f32.partialorder %v2245, 8.507059e+37
    %v2247 = vand.u32 %v2235, 2147483648
    %v2248 = vor.u32 1.1754944e-38, %v2247
    %v2249 = vsel %vm2246, %v2248, %v2244
    %v2250 = vmul.f32 1.0, %v2249
    %v2251 = vtanh.pop %v2231
    %v2253 = vrot.slane %v2195, 6
    %v2255 = vmul.f32 %v2250, %v2253
    %2257 = vrot.lane.b32.xlu0 %v2251, 32
    %v2258 = vpop.permute.xlu0 %2257
    %v2260 = vmul.f32 %v2250, %v2258
    %2262 = vrot.lane.b32.xlu0 %v2260, 32
    %v2263 = vpop.permute.xlu0 %2262
    %v2265 = vadd.f32 %v2255, %v2263
    %v2266 = vtanh.pop %v2265
    %2268 = vrot.lane.b32.xlu0 %v2266, 32
    %v2269 = vpop.permute.xlu0 %2268
    %v2271 = vmul.f32 %v2250, %v2269
    %v2272 = vld [vmem:[%s15] sm:$0xff]
    %v2273 = vld [vmem:[%s15 + $0x8] sm:$0xff]
    %v2274 = vld [vmem:[%s15 + $0x10] sm:$0xff]
    %v2275 = vld [vmem:[%s15 + $0x18] sm:$0xff]
    %v2276 = vld [vmem:[%s16] sm:$0x1]
    %v2278 = vperm.slane %v2276, 0
    %v2281 = vrot.slane %v2271, 6
    %2282 = vrot.lane.b32.xlu0 %v2281, 64
    %v2283 = vpop.permute.xlu0 %2282
    %v2284 = vsel %vm1131, %v2283, 0
    %2286 = vmatpush.msra.mxu0 0.0
    %2287 = vmatpush.msra.mxu0 0.0
    %2288 = vmatpush.msra.mxu0 0.0
    %2289 = vmatpush.msra.mxu0 0.0
    %2290 = vmatpush.msra.mxu0 0.0
    %2291 = vmatpush.msra.mxu0 0.0
    %2292 = vmatpush.msra.mxu0 0.0
    %2293 = vmatpush.msra.mxu0 0.0
    %2294 = vmatpush.msra.mxu0 0.0
    %2295 = vmatpush.msra.mxu0 0.0
    %2296 = vmatpush.msra.mxu0 0.0
    %2297 = vmatpush.msra.mxu0 0.0
    %2298 = vmatpush.msra.mxu0 %v2275
    %2299 = vmatpush.msra.mxu0 %v2274
    %2300 = vmatpush.msra.mxu0 %v2273
    %2301 = vmatpush.msra.mxu0 %v2272
    %2302 = vmatmul.f32.gmra.mxu0 %v2284
    %v2303 = vpop.f32.mrf.mxu0
    %v2304 = vadd.f32 %v2278, %v2303
    %2305 = vdwg.mxu0
    %vm2306 = vcmask 33792
    %2307 = vst.msk [vmem:[#allocation16] sm:$0x3] %vm2306, %v2304
    %v2308 = vld [vmem:[%s19] sm:$0xff]
    %v2309 = vld [vmem:[%s19 + $0x8] sm:$0xff]
    %v2310 = vld [vmem:[%s19 + $0x10] sm:$0xff]
    %v2311 = vld [vmem:[%s19 + $0x18] sm:$0xff]
    %v2312 = vrot.slane %v1855, 1
    %v2314 = vrot.slane %v1925, 2
    %v2316 = vrot.slane %v1995, 3
    %v2318 = vrot.slane %v2062, 4
    %v2320 = vrot.slane %v2131, 5
    %v2322 = vrot.slane %v2201, 6
    %v2324 = vrot.slane %v2271, 7
    %v2326 = vsel %vm1066, %v1786, %v2312
    %v2327 = vsel %vm1068, %v2326, %v2314
    %v2328 = vsel %vm1070, %v2327, %v2316
    %v2329 = vsel %vm186, %v2328, %v2318
    %v2330 = vsel %vm1073, %v2329, %v2320
    %v2331 = vsel %vm244, %v2330, %v2322
    %v2332 = vsel %vm177, %v2331, %v2324
    %2333 = vst.msk [vmem:[#allocation2] sm:$0xff] %vm1131, 0.0
    %vm2334 = vcmask 254976
    %2335 = vst.msk [vmem:[#allocation2 + $0x8] sm:$0x3] %vm2334, 0.0
    %v2336 = vld [vmem:[#allocation2] sm:$0xff]
    %s2337 = sld [smem:[#allocation13]]
    %v2338 = vstv %s2337
    %v2339 = vmul.f32 %v2338, %v2332
    %2341 = vrot.lane.b32.xlu0 %v2339, 64
    %v2342 = vpop.permute.xlu0 %2341
    %v2344 = vadd.f32 %v2336, %v2342
    %2345 = vst.msk [vmem:[#allocation2] sm:$0xff] %vm1131, %v2344
    %v2346 = vld [vmem:[#allocation2 + $0x1] sm:$0xff]
    %s2347 = sld [smem:[#allocation13 + $0x1]]
    %v2348 = vstv %s2347
    %v2349 = vmul.f32 %v2348, %v2332
    %2351 = vrot.lane.b32.xlu0 %v2349, 64
    %v2352 = vpop.permute.xlu0 %2351
    %v2354 = vadd.f32 %v2346, %v2352
    %2355 = vst.msk [vmem:[#allocation2 + $0x1] sm:$0xff] %vm1131, %v2354
    %v2356 = vld [vmem:[#allocation2 + $0x2] sm:$0xff]
    %s2357 = sld [smem:[#allocation13 + $0x2]]
    %v2358 = vstv %s2357
    %v2359 = vmul.f32 %v2358, %v2332
    %2361 = vrot.lane.b32.xlu0 %v2359, 64
    %v2362 = vpop.permute.xlu0 %2361
    %v2364 = vadd.f32 %v2356, %v2362
    %2365 = vst.msk [vmem:[#allocation2 + $0x2] sm:$0xff] %vm1131, %v2364
    %v2366 = vld [vmem:[#allocation2] sm:$0xff]
    %v2367 = vld [vmem:[#allocation2 + $0x8] sm:$0x3]
    %s2368 = sld [smem:[#allocation14]]
    %v2369 = vstv %s2368
    %v2370 = vadd.f32 %v2366, %v2369
    %v2371 = vadd.f32 %v2367, %v2369
    %2372 = vst.msk [vmem:[#allocation2] sm:$0xff] %vm1131, 0.0
    %vm2373 = vcmask 257024
    %2374 = vst.msk [vmem:[#allocation2 + $0x8] sm:$0xf] %vm2373, 0.0
    %v2375 = vld [vmem:[#allocation2] sm:$0xff]
    %v2376 = vld [vmem:[#allocation2 + $0x8] sm:$0x3]
    %s2377 = sld [smem:[#allocation13 + $0x80]]
    %v2378 = vstv %s2377
    %v2379 = vmul.f32 %v2378, %v2370
    %v2380 = vmul.f32 %v2378, %v2371
    %v2381 = vadd.f32 %v2375, %v2379
    %v2382 = vadd.f32 %v2376, %v2380
    %2383 = vst.msk [vmem:[#allocation2] sm:$0xff] %vm1131, %v2381
    %2384 = vst.msk [vmem:[#allocation2 + $0x8] sm:$0x3] %vm2334, %v2382
    %v2385 = vld [vmem:[#allocation2 + $0x1] sm:$0xff]
    %v2386 = vld [vmem:[#allocation2 + $0x9] sm:$0x3]
    %s2387 = sld [smem:[#allocation13 + $0x81]]
    %v2388 = vstv %s2387
    %v2389 = vmul.f32 %v2388, %v2370
    %v2390 = vmul.f32 %v2388, %v2371
    %v2391 = vadd.f32 %v2385, %v2389
    %v2392 = vadd.f32 %v2386, %v2390
    %2393 = vst.msk [vmem:[#allocation2 + $0x1] sm:$0xff] %vm1131, %v2391
    %2394 = vst.msk [vmem:[#allocation2 + $0x9] sm:$0x3] %vm2334, %v2392
    %v2395 = vld [vmem:[#allocation2 + $0x2] sm:$0xff]
    %v2396 = vld [vmem:[#allocation2 + $0xa] sm:$0x3]
    %s2397 = sld [smem:[#allocation13 + $0x82]]
    %v2398 = vstv %s2397
    %v2399 = vmul.f32 %v2398, %v2370
    %v2400 = vmul.f32 %v2398, %v2371
    %v2401 = vadd.f32 %v2395, %v2399
    %v2402 = vadd.f32 %v2396, %v2400
    %2403 = vst.msk [vmem:[#allocation2 + $0x2] sm:$0xff] %vm1131, %v2401
    %2404 = vst.msk [vmem:[#allocation2 + $0xa] sm:$0x3] %vm2334, %v2402
    %v2405 = vld [vmem:[#allocation2] sm:$0xff]
    %v2406 = vld [vmem:[#allocation2 + $0x8] sm:$0xf]
    %s2407 = sld [smem:[#allocation14 + $0x1]]
    %v2408 = vstv %s2407
    %v2409 = vadd.f32 %v2405, %v2408
    %v2410 = vadd.f32 %v2406, %v2408
    %2411 = vst.msk [vmem:[#allocation2] sm:$0xff] %vm1131, 0.0
    %vm2412 = vcmask 259072
    %2413 = vst.msk [vmem:[#allocation2 + $0x8] sm:$0x3f] %vm2412, 0.0
    %v2414 = vld [vmem:[#allocation2] sm:$0xff]
    %v2415 = vld [vmem:[#allocation2 + $0x8] sm:$0xf]
    %s2416 = sld [smem:[#allocation13 + $0x100]]
    %v2417 = vstv %s2416
    %v2418 = vmul.f32 %v2417, %v2409
    %v2419 = vmul.f32 %v2417, %v2410
    %v2420 = vadd.f32 %v2414, %v2418
    %v2421 = vadd.f32 %v2415, %v2419
    %2422 = vst.msk [vmem:[#allocation2] sm:$0xff] %vm1131, %v2420
    %2423 = vst.msk [vmem:[#allocation2 + $0x8] sm:$0xf] %vm2373, %v2421
    %v2424 = vld [vmem:[#allocation2 + $0x1] sm:$0xff]
    %v2425 = vld [vmem:[#allocation2 + $0x9] sm:$0xf]
    %s2426 = sld [smem:[#allocation13 + $0x101]]
    %v2427 = vstv %s2426
    %v2428 = vmul.f32 %v2427, %v2409
    %v2429 = vmul.f32 %v2427, %v2410
    %v2430 = vadd.f32 %v2424, %v2428
    %v2431 = vadd.f32 %v2425, %v2429
    %2432 = vst.msk [vmem:[#allocation2 + $0x1] sm:$0xff] %vm1131, %v2430
    %2433 = vst.msk [vmem:[#allocation2 + $0x9] sm:$0xf] %vm2373, %v2431
    %v2434 = vld [vmem:[#allocation2 + $0x2] sm:$0xff]
    %v2435 = vld [vmem:[#allocation2 + $0xa] sm:$0xf]
    %s2436 = sld [smem:[#allocation13 + $0x102]]
    %v2437 = vstv %s2436
    %v2438 = vmul.f32 %v2437, %v2409
    %v2439 = vmul.f32 %v2437, %v2410
    %v2440 = vadd.f32 %v2434, %v2438
    %v2441 = vadd.f32 %v2435, %v2439
    %2442 = vst.msk [vmem:[#allocation2 + $0x2] sm:$0xff] %vm1131, %v2440
    %2443 = vst.msk [vmem:[#allocation2 + $0xa] sm:$0xf] %vm2373, %v2441
    %v2444 = vld [vmem:[#allocation2] sm:$0xff]
    %v2445 = vld [vmem:[#allocation2 + $0x8] sm:$0x3f]
    %s2446 = sld [smem:[#allocation14 + $0x2]]
    %v2447 = vstv %s2446
    %v2448 = vadd.f32 %v2444, %v2447
    %v2449 = vadd.f32 %v2445, %v2447
    %2450 = vst.msk [vmem:[#allocation2] sm:$0xff] %vm1131, 0.0
    %2451 = vst.msk [vmem:[#allocation2 + $0x8] sm:$0xff] %vm1131, 0.0
    %v2452 = vld [vmem:[#allocation2] sm:$0xff]
    %v2453 = vld [vmem:[#allocation2 + $0x8] sm:$0x3f]
    %s2454 = sld [smem:[#allocation13 + $0x180]]
    %v2455 = vstv %s2454
    %v2456 = vmul.f32 %v2455, %v2448
    %v2457 = vmul.f32 %v2455, %v2449
    %v2458 = vadd.f32 %v2452, %v2456
    %v2459 = vadd.f32 %v2453, %v2457
    %2460 = vst.msk [vmem:[#allocation2] sm:$0xff] %vm1131, %v2458
    %2461 = vst.msk [vmem:[#allocation2 + $0x8] sm:$0x3f] %vm2412, %v2459
    %v2462 = vld [vmem:[#allocation2 + $0x1] sm:$0xff]
    %v2463 = vld [vmem:[#allocation2 + $0x9] sm:$0x3f]
    %s2464 = sld [smem:[#allocation13 + $0x181]]
    %v2465 = vstv %s2464
    %v2466 = vmul.f32 %v2465, %v2448
    %v2467 = vmul.f32 %v2465, %v2449
    %v2468 = vadd.f32 %v2462, %v2466
    %v2469 = vadd.f32 %v2463, %v2467
    %2470 = vst.msk [vmem:[#allocation2 + $0x1] sm:$0xff] %vm1131, %v2468
    %2471 = vst.msk [vmem:[#allocation2 + $0x9] sm:$0x3f] %vm2412, %v2469
    %v2472 = vld [vmem:[#allocation2 + $0x2] sm:$0xff]
    %v2473 = vld [vmem:[#allocation2 + $0xa] sm:$0x3f]
    %s2474 = sld [smem:[#allocation13 + $0x182]]
    %v2475 = vstv %s2474
    %v2476 = vmul.f32 %v2475, %v2448
    %v2477 = vmul.f32 %v2475, %v2449
    %v2478 = vadd.f32 %v2472, %v2476
    %v2479 = vadd.f32 %v2473, %v2477
    %2480 = vst.msk [vmem:[#allocation2 + $0x2] sm:$0xff] %vm1131, %v2478
    %2481 = vst.msk [vmem:[#allocation2 + $0xa] sm:$0x3f] %vm2412, %v2479
    %v2482 = vld [vmem:[#allocation2] sm:$0xff]
    %v2483 = vld [vmem:[#allocation2 + $0x8] sm:$0xff]
    %s2484 = sld [smem:[#allocation14 + $0x3]]
    %v2485 = vstv %s2484
    %v2486 = vadd.f32 %v2482, %v2485
    %v2487 = vadd.f32 %v2483, %v2485
    %v2489 = vsel %vm1131, %v2486, 0
    %v2492 = vsel %vm1131, %v2487, 0
    %2494 = vmatpush.msra.mxu0 0.0
    %2495 = vmatpush.msra.mxu0 0.0
    %2496 = vmatpush.msra.mxu0 0.0
    %2497 = vmatpush.msra.mxu0 0.0
    %2498 = vmatpush.msra.mxu0 0.0
    %2499 = vmatpush.msra.mxu0 0.0
    %2500 = vmatpush.msra.mxu0 0.0
    %2501 = vmatpush.msra.mxu0 0.0
    %2502 = vmatpush.msra.mxu0 0.0
    %2503 = vmatpush.msra.mxu0 0.0
    %2504 = vmatpush.msra.mxu0 0.0
    %2505 = vmatpush.msra.mxu0 0.0
    %2506 = vmatpush.msra.mxu0 %v2311
    %2507 = vmatpush.msra.mxu0 %v2310
    %2508 = vmatpush.msra.mxu0 %v2309
    %2509 = vmatpush.msra.mxu0 %v2308
    %2510 = vmatmul.f32.gmra.mxu0 %v2489
    %v2511 = vpop.f32.mrf.mxu0
    %v2512 = vadd.f32 0.0, %v2511
    %2513 = vmatmul.f32.gmra.mxu0 %v2492
    %v2514 = vpop.f32.mrf.mxu0
    %v2515 = vadd.f32 0.0, %v2514
    %2516 = vdwg.mxu0
    %2517 = vst.msk [vmem:[%s21] sm:$0xff] %vm181, %v2512
    %2518 = vst.msk [vmem:[%s21 + $0x8] sm:$0xff] %vm181, %v2515
    %v2519 = vrot.slane %v1786, 1
    %v2522 = vrot.slane %v1925, 3
    %v2524 = vrot.slane %v1995, 4
    %v2526 = vrot.slane %v2062, 5
    %v2528 = vrot.slane %v2131, 6
    %v2530 = vrot.slane %v2201, 7
    %v2532 = vsel %vm1066, %v2519, %v1857
    %v2533 = vsel %vm1068, %v2532, %v2522
    %v2534 = vsel %vm1070, %v2533, %v2524
    %v2535 = vsel %vm186, %v2534, %v2526
    %v2536 = vsel %vm1073, %v2535, %v2528
    %v2537 = vsel %vm244, %v2536, %v2530
    %v2538 = vsel %vm177, %v2537, %v2271
    %2539 = vst.msk [vmem:[#allocation2] sm:$0xff] %vm1131, 0.0
    %2540 = vst.msk [vmem:[#allocation2 + $0x8] sm:$0x3] %vm2334, 0.0
    %v2541 = vld [vmem:[#allocation2] sm:$0xff]
    %s2542 = sld [smem:[#allocation13]]
    %v2543 = vstv %s2542
    %v2544 = vmul.f32 %v2543, %v2538
    %2546 = vrot.lane.b32.xlu0 %v2544, 64
    %v2547 = vpop.permute.xlu0 %2546
    %v2549 = vadd.f32 %v2541, %v2547
    %2550 = vst.msk [vmem:[#allocation2] sm:$0xff] %vm1131, %v2549
    %v2551 = vld [vmem:[#allocation2 + $0x1] sm:$0xff]
    %s2552 = sld [smem:[#allocation13 + $0x1]]
    %v2553 = vstv %s2552
    %v2554 = vmul.f32 %v2553, %v2538
    %2556 = vrot.lane.b32.xlu0 %v2554, 64
    %v2557 = vpop.permute.xlu0 %2556
    %v2559 = vadd.f32 %v2551, %v2557
    %2560 = vst.msk [vmem:[#allocation2 + $0x1] sm:$0xff] %vm1131, %v2559
    %v2561 = vld [vmem:[#allocation2 + $0x2] sm:$0xff]
    %s2562 = sld [smem:[#allocation13 + $0x2]]
    %v2563 = vstv %s2562
    %v2564 = vmul.f32 %v2563, %v2538
    %2566 = vrot.lane.b32.xlu0 %v2564, 64
    %v2567 = vpop.permute.xlu0 %2566
    %v2569 = vadd.f32 %v2561, %v2567
    %2570 = vst.msk [vmem:[#allocation2 + $0x2] sm:$0xff] %vm1131, %v2569
    %v2571 = vld [vmem:[#allocation2] sm:$0xff]
    %v2572 = vld [vmem:[#allocation2 + $0x8] sm:$0x3]
    %s2573 = sld [smem:[#allocation14]]
    %v2574 = vstv %s2573
    %v2575 = vadd.f32 %v2571, %v2574
    %v2576 = vadd.f32 %v2572, %v2574
    %2577 = vst.msk [vmem:[#allocation2] sm:$0xff] %vm1131, 0.0
    %2578 = vst.msk [vmem:[#allocation2 + $0x8] sm:$0xf] %vm2373, 0.0
    %v2579 = vld [vmem:[#allocation2] sm:$0xff]
    %v2580 = vld [vmem:[#allocation2 + $0x8] sm:$0x3]
    %s2581 = sld [smem:[#allocation13 + $0x80]]
    %v2582 = vstv %s2581
    %v2583 = vmul.f32 %v2582, %v2575
    %v2584 = vmul.f32 %v2582, %v2576
    %v2585 = vadd.f32 %v2579, %v2583
    %v2586 = vadd.f32 %v2580, %v2584
    %2587 = vst.msk [vmem:[#allocation2] sm:$0xff] %vm1131, %v2585
    %2588 = vst.msk [vmem:[#allocation2 + $0x8] sm:$0x3] %vm2334, %v2586
    %v2589 = vld [vmem:[#allocation2 + $0x1] sm:$0xff]
    %v2590 = vld [vmem:[#allocation2 + $0x9] sm:$0x3]
    %s2591 = sld [smem:[#allocation13 + $0x81]]
    %v2592 = vstv %s2591
    %v2593 = vmul.f32 %v2592, %v2575
    %v2594 = vmul.f32 %v2592, %v2576
    %v2595 = vadd.f32 %v2589, %v2593
    %v2596 = vadd.f32 %v2590, %v2594
    %2597 = vst.msk [vmem:[#allocation2 + $0x1] sm:$0xff] %vm1131, %v2595
    %2598 = vst.msk [vmem:[#allocation2 + $0x9] sm:$0x3] %vm2334, %v2596
    %v2599 = vld [vmem:[#allocation2 + $0x2] sm:$0xff]
    %v2600 = vld [vmem:[#allocation2 + $0xa] sm:$0x3]
    %s2601 = sld [smem:[#allocation13 + $0x82]]
    %v2602 = vstv %s2601
    %v2603 = vmul.f32 %v2602, %v2575
    %v2604 = vmul.f32 %v2602, %v2576
    %v2605 = vadd.f32 %v2599, %v2603
    %v2606 = vadd.f32 %v2600, %v2604
    %2607 = vst.msk [vmem:[#allocation2 + $0x2] sm:$0xff] %vm1131, %v2605
    %2608 = vst.msk [vmem:[#allocation2 + $0xa] sm:$0x3] %vm2334, %v2606
    %v2609 = vld [vmem:[#allocation2] sm:$0xff]
    %v2610 = vld [vmem:[#allocation2 + $0x8] sm:$0xf]
    %s2611 = sld [smem:[#allocation14 + $0x1]]
    %v2612 = vstv %s2611
    %v2613 = vadd.f32 %v2609, %v2612
    %v2614 = vadd.f32 %v2610, %v2612
    %2615 = vst.msk [vmem:[#allocation2] sm:$0xff] %vm1131, 0.0
    %2616 = vst.msk [vmem:[#allocation2 + $0x8] sm:$0x3f] %vm2412, 0.0
    %v2617 = vld [vmem:[#allocation2] sm:$0xff]
    %v2618 = vld [vmem:[#allocation2 + $0x8] sm:$0xf]
    %s2619 = sld [smem:[#allocation13 + $0x100]]
    %v2620 = vstv %s2619
    %v2621 = vmul.f32 %v2620, %v2613
    %v2622 = vmul.f32 %v2620, %v2614
    %v2623 = vadd.f32 %v2617, %v2621
    %v2624 = vadd.f32 %v2618, %v2622
    %2625 = vst.msk [vmem:[#allocation2] sm:$0xff] %vm1131, %v2623
    %2626 = vst.msk [vmem:[#allocation2 + $0x8] sm:$0xf] %vm2373, %v2624
    %v2627 = vld [vmem:[#allocation2 + $0x1] sm:$0xff]
    %v2628 = vld [vmem:[#allocation2 + $0x9] sm:$0xf]
    %s2629 = sld [smem:[#allocation13 + $0x101]]
    %v2630 = vstv %s2629
    %v2631 = vmul.f32 %v2630, %v2613
    %v2632 = vmul.f32 %v2630, %v2614
    %v2633 = vadd.f32 %v2627, %v2631
    %v2634 = vadd.f32 %v2628, %v2632
    %2635 = vst.msk [vmem:[#allocation2 + $0x1] sm:$0xff] %vm1131, %v2633
    %2636 = vst.msk [vmem:[#allocation2 + $0x9] sm:$0xf] %vm2373, %v2634
    %v2637 = vld [vmem:[#allocation2 + $0x2] sm:$0xff]
    %v2638 = vld [vmem:[#allocation2 + $0xa] sm:$0xf]
    %s2639 = sld [smem:[#allocation13 + $0x102]]
    %v2640 = vstv %s2639
    %v2641 = vmul.f32 %v2640, %v2613
    %v2642 = vmul.f32 %v2640, %v2614
    %v2643 = vadd.f32 %v2637, %v2641
    %v2644 = vadd.f32 %v2638, %v2642
    %2645 = vst.msk [vmem:[#allocation2 + $0x2] sm:$0xff] %vm1131, %v2643
    %2646 = vst.msk [vmem:[#allocation2 + $0xa] sm:$0xf] %vm2373, %v2644
    %v2647 = vld [vmem:[#allocation2] sm:$0xff]
    %v2648 = vld [vmem:[#allocation2 + $0x8] sm:$0x3f]
    %s2649 = sld [smem:[#allocation14 + $0x2]]
    %v2650 = vstv %s2649
    %v2651 = vadd.f32 %v2647, %v2650
    %v2652 = vadd.f32 %v2648, %v2650
    %2653 = vst.msk [vmem:[#allocation2] sm:$0xff] %vm1131, 0.0
    %2654 = vst.msk [vmem:[#allocation2 + $0x8] sm:$0xff] %vm1131, 0.0
    %v2655 = vld [vmem:[#allocation2] sm:$0xff]
    %v2656 = vld [vmem:[#allocation2 + $0x8] sm:$0x3f]
    %s2657 = sld [smem:[#allocation13 + $0x180]]
    %v2658 = vstv %s2657
    %v2659 = vmul.f32 %v2658, %v2651
    %v2660 = vmul.f32 %v2658, %v2652
    %v2661 = vadd.f32 %v2655, %v2659
    %v2662 = vadd.f32 %v2656, %v2660
    %2663 = vst.msk [vmem:[#allocation2] sm:$0xff] %vm1131, %v2661
    %2664 = vst.msk [vmem:[#allocation2 + $0x8] sm:$0x3f] %vm2412, %v2662
    %v2665 = vld [vmem:[#allocation2 + $0x1] sm:$0xff]
    %v2666 = vld [vmem:[#allocation2 + $0x9] sm:$0x3f]
    %s2667 = sld [smem:[#allocation13 + $0x181]]
    %v2668 = vstv %s2667
    %v2669 = vmul.f32 %v2668, %v2651
    %v2670 = vmul.f32 %v2668, %v2652
    %v2671 = vadd.f32 %v2665, %v2669
    %v2672 = vadd.f32 %v2666, %v2670
    %2673 = vst.msk [vmem:[#allocation2 + $0x1] sm:$0xff] %vm1131, %v2671
    %2674 = vst.msk [vmem:[#allocation2 + $0x9] sm:$0x3f] %vm2412, %v2672
    %v2675 = vld [vmem:[#allocation2 + $0x2] sm:$0xff]
    %v2676 = vld [vmem:[#allocation2 + $0xa] sm:$0x3f]
    %s2677 = sld [smem:[#allocation13 + $0x182]]
    %v2678 = vstv %s2677
    %v2679 = vmul.f32 %v2678, %v2651
    %v2680 = vmul.f32 %v2678, %v2652
    %v2681 = vadd.f32 %v2675, %v2679
    %v2682 = vadd.f32 %v2676, %v2680
    %2683 = vst.msk [vmem:[#allocation2 + $0x2] sm:$0xff] %vm1131, %v2681
    %2684 = vst.msk [vmem:[#allocation2 + $0xa] sm:$0x3f] %vm2412, %v2682
    %v2685 = vld [vmem:[#allocation2] sm:$0xff]
    %v2686 = vld [vmem:[#allocation2 + $0x8] sm:$0xff]
    %s2687 = sld [smem:[#allocation14 + $0x3]]
    %v2688 = vstv %s2687
    %v2689 = vadd.f32 %v2685, %v2688
    %v2690 = vadd.f32 %v2686, %v2688
    %v2692 = vsel %vm1131, %v2689, 0
    %v2695 = vsel %vm1131, %v2690, 0
    %2697 = vmatpush.msra.mxu0 0.0
    %2698 = vmatpush.msra.mxu0 0.0
    %2699 = vmatpush.msra.mxu0 0.0
    %2700 = vmatpush.msra.mxu0 0.0
    %2701 = vmatpush.msra.mxu0 0.0
    %2702 = vmatpush.msra.mxu0 0.0
    %2703 = vmatpush.msra.mxu0 0.0
    %2704 = vmatpush.msra.mxu0 0.0
    %2705 = vmatpush.msra.mxu0 0.0
    %2706 = vmatpush.msra.mxu0 0.0
    %2707 = vmatpush.msra.mxu0 0.0
    %2708 = vmatpush.msra.mxu0 0.0
    %2709 = vmatpush.msra.mxu0 %v2311
    %2710 = vmatpush.msra.mxu0 %v2310
    %2711 = vmatpush.msra.mxu0 %v2309
    %2712 = vmatpush.msra.mxu0 %v2308
    %2713 = vmatmul.f32.gmra.mxu0 %v2692
    %v2714 = vpop.f32.mrf.mxu0
    %v2715 = vadd.f32 0.0, %v2714
    %2716 = vmatmul.f32.gmra.mxu0 %v2695
    %v2717 = vpop.f32.mrf.mxu0
    %v2718 = vadd.f32 0.0, %v2717
    %2719 = vdwg.mxu0
    %s2720 = scalar_lea.vmem %s21, 16
    %2721 = vst.msk [vmem:[%s2720] sm:$0xff] %vm181, %v2715
    %2722 = vst.msk [vmem:[%s2720 + $0x8] sm:$0xff] %vm181, %v2718
    // Predicated region
    $region110: #{fused_forward.1} parent=1 // pred_check
      _
    $region111: #{fused_forward.1} parent=1 // pred_check_branch
      %2724 = sbr.rel (0) target = $region113
    $region112: #{fused_forward.1} parent=1 // pred_region
      %2726 = vsyncadd [#allocation5], 0
      %s2728 = sshll.u32 [#allocation16], 4
      %s2729 = int_to_ptr.vmem [resolvable:$true] %s2728
      %s2730 = sshll.u32 %s20, 4
      %s2731 = int_to_ptr.hbm [resolvable:$true] %s2730
      %2733 = dma.vmem_to_hbm [thread:$0]  %s2729, 32, %s2731, [#allocation5]
    $region113: #{fused_forward.1} parent=1 // pred_fallthru
      _
    // Predicated region
    $region114: #{fused_forward.1} parent=1 // pred_check
      _
    $region115: #{fused_forward.1} parent=1 // pred_check_branch
      %2735 = sbr.rel (0) target = $region117
    $region116: #{fused_forward.1} parent=1 // pred_region
      _
    $region117: #{fused_forward.1} parent=1 // pred_fallthru
      _
    // Predicated region
    $region118: #{fused_forward.1} parent=1 // pred_check
      _
    $region119: #{fused_forward.1} parent=1 // pred_check_branch
      %2737 = sbr.rel (0) target = $region121
    $region120: #{fused_forward.1} parent=1 // pred_region
      %2739 = dma.done [#allocation5], 32
    $region121: #{fused_forward.1} parent=1 // pred_fallthru
      _
    // Predicated region
    $region122: #{fused_forward.1} parent=1 // pred_check
      _
    $region123: #{fused_forward.1} parent=1 // pred_check_branch
      %2741 = sbr.rel (0) target = $region125
    $region124: #{fused_forward.1} parent=1 // pred_region
      _
    $region125: #{fused_forward.1} parent=1 // pred_fallthru
      _
    %2742 = vsyncpa [#allocation4], 1
    %2743 = vsyncpa [#allocation8], 1
    %2744 = vsyncpa [#allocation11], 1
    %2745 = vsyncpa [#allocation5], 1
    %2746 = vsyncpa [#allocation6], 1
    %2747 = vsyncpa [#allocation15], 1

</llo_original>
